<compile_context>
chip_gen: v5e
topology: v5e:2x2
jax: 0.10.0
libtpu: 0.0.40
codegen_flags: <defaults>
</compile_context>

<pallas_src>
import jax
import jax.numpy as jnp
from jax.experimental import pallas as pl
from jax.experimental.pallas import tpu as pltpu


def _vmem_limit_bytes():
    """Generation-aware VMEM cap: ~3/4 of physical, clamped to [32, 96] MiB.

    v5e/v6e have 128 MiB per TC (-> 96 MiB), v7x has 64 MiB (-> 48 MiB), which
    leaves headroom for Mosaic internal scratch / spill on every generation.
    """
    try:
        cap = int(pltpu.get_tpu_info().vmem_capacity_bytes)
    except Exception:
        cap = 128 * 1024 * 1024
    return max(32 * 1024 * 1024, min(3 * cap // 4, 96 * 1024 * 1024))


def gate_cell_kernel(alpha_ref, x1h_ref, x1_ref, x2_ref, x3_ref, w_ref, b_ref,
                     out_ref, acc_ref):
    # alpha_ref : (1, 1)             f32   SMEM
    # x1h_ref   : (1, TH+2, Wp, C)   f32   VMEM  (haloed, zero-padded x1 row tile)
    # x1_ref    : (1, TH, W, C)      f32   VMEM  (unpadded residual path)
    # x2_ref    : (1, TH, W, C)      f32   VMEM
    # x3_ref    : (1, TH, W, C)      f32   VMEM
    # w_ref     : (3, 3, C, 3C)      bf16  VMEM  (HWIO conv weight, single-buffered)
    # b_ref     : (1, 3C)            f32   VMEM  (single-buffered)
    # out_ref   : (1, TH, W, C)      f32   VMEM
    # acc_ref   : (TH*W, 3C)         f32   VMEM scratch (conv accumulator)
    _, TH, W, C = out_ref.shape
    C3 = 3 * C
    Wp = x1h_ref.shape[2]           # padded width (multiple of 8, f32 tiling)

    x1h = x1h_ref[0]                # (TH+2, Wp, C) f32

    # 3x3 "same" conv as 9 bf16 MXU matmuls (f32 accumulate) into ONE scratch
    # accumulator.  dx-outer: the column shift is a sublane roll on the XLU
    # (slack under the MXU), issued at most twice per grid step; the input
    # stays f32 until just before the dot, and only W (not Wp) columns ever
    # reach the MXU.
    first = True
    for dx in range(3):
        # shifted[:, j, :] == x1h[:, j + dx, :] for the j < W columns we use.
        shifted = x1h if dx == 0 else pltpu.roll(x1h, shift=Wp - dx, axis=1)
        for dy in range(3):
            win = shifted[dy:dy + TH, 0:W, :]                     # (TH, W, C) f32
            lhs = win.reshape(TH * W, C).astype(jnp.bfloat16)     # cast just before MXU
            tap = jnp.dot(lhs, w_ref[dy, dx],
                          preferred_element_type=jnp.float32)     # (TH*W, 3C)
            if first:
                acc_ref[...] = tap      # init with first tap: no zero-fill pass
                first = False
            else:
                acc_ref[...] += tap

    y = acc_ref[...].reshape(TH, W, C3) + b_ref[0, :]             # bias added once

    i_gate = y[:, :, 0:C]
    f_gate = jax.nn.sigmoid(y[:, :, C:2 * C] + 1.0)
    r_gate = jax.nn.sigmoid(y[:, :, 2 * C:] + 1.0)

    x1 = x1_ref[0]
    x2 = x2_ref[0]
    x3 = x3_ref[0]
    alpha = alpha_ref[0, 0]

    # Fused gate algebra (identical math to the reference):
    #   c   = a*f*x2 + (1-a)*f*x3 + (1-f)*i = f*(blend - i) + i
    #   out = r*tanh(c) + (1-r)*x1          = r*(tanh(c) - x1) + x1
    blend = alpha * x2 + (1.0 - alpha) * x3
    c = f_gate * (blend - i_gate) + i_gate
    out_ref[0] = (r_gate * (jnp.tanh(c) - x1) + x1).astype(out_ref.dtype)


def gate_cell(x1_nchw, x2_nchw, x3_nchw, weight_oihw, bias, alpha, *,
              row_tile=8):
    """GATE_Cell forward.

    x*_nchw: (B, C, H, W) f32; weight_oihw: (3C, C, 3, 3); bias: (3C,); alpha scalar.
    """
    B, C, H, W = x1_nchw.shape
    C3 = 3 * C
    TH = row_tile if (H % row_tile == 0) else H       # H row-tile size
    n_t = H // TH
    Wp = ((W + 2 + 7) // 8) * 8                       # padded width, f32 sublane multiple

    # ---- glue: NCHW -> NHWC, pad, haloed row tiles, static weight transform ----
    x1 = jnp.transpose(x1_nchw, (0, 2, 3, 1))
    x2 = jnp.transpose(x2_nchw, (0, 2, 3, 1))
    x3 = jnp.transpose(x3_nchw, (0, 2, 3, 1))
    w_hwio = jnp.transpose(weight_oihw, (2, 3, 1, 0)).astype(jnp.bfloat16)
    b2 = bias.reshape(1, C3).astype(jnp.float32)

    # Zero-pad x1 spatially: 1 row top/bottom, 1 col left, Wp-W-1 cols right
    # (extra right zeros are never consumed).  Stays f32; bf16 cast happens
    # per-window inside the kernel.
    x1p = jnp.pad(x1, ((0, 0), (1, 1), (1, Wp - W - 1), (0, 0)))
    # Bake the 2-row conv halo into non-overlapping row tiles:
    #   x1h[b, t*(TH+2):(t+1)*(TH+2)] == x1p[b, t*TH : t*TH + TH + 2]
    x1h = jnp.concatenate(
        [x1p[:, t * TH: t * TH + TH + 2] for t in range(n_t)], axis=1)
    # x1h: (B, n_t*(TH+2), Wp, C) f32

    alpha_arr = jnp.asarray(alpha, jnp.float32).reshape(1, 1)

    def build_call(single_buffer_consts):
        def const_spec(shape):
            idx = lambda b, t: (0,) * len(shape)
            if single_buffer_consts:
                # Grid-invariant operand: double-buffering buys nothing and
                # wastes ~13.5 MiB of VMEM at C=512.
                return pl.BlockSpec(shape, idx, pipeline_mode=pl.Buffered(1))
            return pl.BlockSpec(shape, idx)

        return pl.pallas_call(
            gate_cell_kernel,
            out_shape=jax.ShapeDtypeStruct((B, H, W, C), jnp.float32),
            grid=(B, n_t),
            in_specs=[
                pl.BlockSpec(memory_space=pltpu.MemorySpace.SMEM),            # alpha
                pl.BlockSpec((1, TH + 2, Wp, C), lambda b, t: (b, t, 0, 0)),  # haloed x1 tile
                pl.BlockSpec((1, TH, W, C), lambda b, t: (b, t, 0, 0)),       # x1 (residual)
                pl.BlockSpec((1, TH, W, C), lambda b, t: (b, t, 0, 0)),       # x2
                pl.BlockSpec((1, TH, W, C), lambda b, t: (b, t, 0, 0)),       # x3
                const_spec((3, 3, C, C3)),                                    # weight (bf16)
                const_spec((1, C3)),                                          # bias
            ],
            out_specs=pl.BlockSpec((1, TH, W, C), lambda b, t: (b, t, 0, 0)),
            scratch_shapes=[pltpu.VMEM((TH * W, C3), jnp.float32)],
            compiler_params=pltpu.CompilerParams(
                dimension_semantics=("parallel", "parallel"),
                vmem_limit_bytes=_vmem_limit_bytes(),
            ),
        )

    args = (alpha_arr, x1h, x1, x2, x3, w_hwio, b2)
    try:
        out_nhwc = build_call(True)(*args)
    except Exception:
        # jax version without per-BlockSpec pipeline_mode: fall back to the
        # default (double-buffered) pipelining for the weight/bias.
        out_nhwc = build_call(False)(*args)

    return jnp.transpose(out_nhwc, (0, 3, 1, 2))                  # back to NCHW


def gate_cell_reference(x1, x2, x3, weight_oihw, bias, alpha,
                        conv_dtype=jnp.float32):
    """Pure-JAX reference mirroring the PyTorch module (NCHW).

    conv_dtype=bf16 reproduces the kernel's bf16-operand / f32-accumulate MXU
    matmuls for a tight structural check; conv_dtype=f32 is the exact module.
    """
    y = jax.lax.conv_general_dilated(
        x1.astype(conv_dtype), weight_oihw.astype(conv_dtype),
        window_strides=(1, 1), padding="SAME",
        dimension_numbers=("NCHW", "OIHW", "NCHW"),
        preferred_element_type=jnp.float32)
    y = y + bias[None, :, None, None]
    C = x1.shape[1]
    i, f, r = y[:, :C], y[:, C:2 * C], y[:, 2 * C:]
    f = jax.nn.sigmoid(f + 1.0)
    r = jax.nn.sigmoid(r + 1.0)
    c = alpha * f * x2 + (1.0 - alpha) * f * x3 + (1.0 - f) * i
    return r * jnp.tanh(c) + (1.0 - r) * x1


if __name__ == "__main__":
    B, C, H, W = 2, 8, 16, 16          # channel_dim = 8 (correctness-only config;
    alpha = 0.5                        # production regime is C=512)

    key = jax.random.PRNGKey(0)
    k1, k2, k3, kw, kb = jax.random.split(key, 5)
    x1 = jax.random.normal(k1, (B, C, H, W), jnp.float32)
    x2 = jax.random.normal(k2, (B, C, H, W), jnp.float32)
    x3 = jax.random.normal(k3, (B, C, H, W), jnp.float32)
    # Deterministic synthetic Conv2d(C, 3C, 3) parameters (OIHW, like PyTorch).
    weight = jax.random.normal(kw, (3 * C, C, 3, 3), jnp.float32) * 0.1
    bias = jax.random.normal(kb, (3 * C,), jnp.float32) * 0.1

    out = gate_cell(x1, x2, x3, weight, bias, alpha)
    out = jax.block_until_ready(out)
    assert out.shape == (B, C, H, W), out.shape

    # Tight check vs. a reference using the same bf16 conv operands
    # (validates the halo tiling, roll-based window shift, and gate algebra).
    ref_bf16 = jax.block_until_ready(
        gate_cell_reference(x1, x2, x3, weight, bias, alpha,
                            conv_dtype=jnp.bfloat16))
    assert jnp.allclose(out, ref_bf16, atol=2e-3, rtol=2e-3), \
        float(jnp.max(jnp.abs(out - ref_bf16)))

    # Loose check vs. the exact f32 module (bf16 MXU precision tradeoff).
    ref_f32 = jax.block_until_ready(
        gate_cell_reference(x1, x2, x3, weight, bias, alpha,
                            conv_dtype=jnp.float32))
    assert jnp.allclose(out, ref_f32, atol=5e-2, rtol=5e-2), \
        float(jnp.max(jnp.abs(out - ref_f32)))

    print("KERNEL_OK")
</pallas_src>

<mosaic_0001>
module attributes {stable_mosaic.version = 11 : i64} {
  func.func @gate_cell_kernel(%arg0: i32, %arg1: i32, %arg2: memref<1x1xf32, #tpu.memory_space<smem>>, %arg3: memref<1x10x24x8xf32, #tpu.memory_space<vmem>>, %arg4: memref<1x8x16x8xf32, #tpu.memory_space<vmem>>, %arg5: memref<1x8x16x8xf32, #tpu.memory_space<vmem>>, %arg6: memref<1x8x16x8xf32, #tpu.memory_space<vmem>>, %arg7: memref<3x3x8x24xbf16, #tpu.memory_space<vmem>>, %arg8: memref<1x24xf32, #tpu.memory_space<vmem>>, %arg9: memref<1x8x16x8xf32, #tpu.memory_space<vmem>>, %arg10: memref<128x24xf32, #tpu.memory_space<vmem>>) attributes {dimension_semantics = [#tpu.dimension_semantics<parallel>, #tpu.dimension_semantics<parallel>], iteration_bounds = array<i64: 2, 2>, scalar_prefetch = 0 : i64, scratch_operands = 1 : i64, tpu.core_type = #tpu.core_type<tc>, window_params = [{transform_indices = @transform_0, window_bounds = array<i64: 1, 1>}, {transform_indices = @transform_1, window_bounds = array<i64: 1, 10, 24, 8>}, {transform_indices = @transform_2, window_bounds = array<i64: 1, 8, 16, 8>}, {transform_indices = @transform_3, window_bounds = array<i64: 1, 8, 16, 8>}, {transform_indices = @transform_4, window_bounds = array<i64: 1, 8, 16, 8>}, {pipeline_mode = #tpu.pipeline_mode<synchronous>, transform_indices = @transform_5, window_bounds = array<i64: 3, 3, 8, 24>}, {pipeline_mode = #tpu.pipeline_mode<synchronous>, transform_indices = @transform_6, window_bounds = array<i64: 1, 24>}, {transform_indices = @transform_7, window_bounds = array<i64: 1, 8, 16, 8>}]} {
    %c0 = arith.constant 0 : index
    %c0_0 = arith.constant 0 : index
    %c0_1 = arith.constant 0 : index
    %c0_2 = arith.constant 0 : index
    %0 = vector.load %arg3[%c0, %c0_0, %c0_1, %c0_2] : memref<1x10x24x8xf32, #tpu.memory_space<vmem>>, vector<1x10x24x8xf32>
    %1 = vector.shape_cast %0 : vector<1x10x24x8xf32> to vector<10x24x8xf32>
    %2 = vector.extract_strided_slice %1 {offsets = [0, 0, 0], sizes = [8, 16, 8], strides = [1, 1, 1]} : vector<10x24x8xf32> to vector<8x16x8xf32>
    %3 = vector.shape_cast %2 : vector<8x16x8xf32> to vector<128x8xf32>
    %4 = arith.truncf %3 : vector<128x8xf32> to vector<128x8xbf16>
    %c0_3 = arith.constant 0 : index
    %c0_4 = arith.constant 0 : index
    %c0_5 = arith.constant 0 : index
    %c0_6 = arith.constant 0 : index
    %5 = vector.load %arg7[%c0_3, %c0_4, %c0_5, %c0_6] : memref<3x3x8x24xbf16, #tpu.memory_space<vmem>>, vector<1x1x8x24xbf16>
    %6 = vector.shape_cast %5 : vector<1x1x8x24xbf16> to vector<8x24xbf16>
    %cst = arith.constant dense<0.000000e+00> : vector<128x24xf32>
    %7 = tpu.matmul %4, %6, %cst {dimension_numbers = #tpu.dot_dimension_numbers<[1], [0], [0], [1], [0, 0, 1, 1], [], []>} : vector<128x8xbf16>, vector<8x24xbf16>, vector<128x24xf32> -> vector<128x24xf32>
    %c0_7 = arith.constant 0 : index
    %c0_8 = arith.constant 0 : index
    %8 = vector.load %arg10[%c0_7, %c0_8] : memref<128x24xf32, #tpu.memory_space<vmem>>, vector<128x24xf32>
    tpu.vector_store %arg10[%c0_7, %c0_8], %7 {strides = array<i32>} : memref<128x24xf32, #tpu.memory_space<vmem>>, vector<128x24xf32>,
    %9 = vector.extract_strided_slice %1 {offsets = [1, 0, 0], sizes = [8, 16, 8], strides = [1, 1, 1]} : vector<10x24x8xf32> to vector<8x16x8xf32>
    %10 = vector.shape_cast %9 : vector<8x16x8xf32> to vector<128x8xf32>
    %11 = arith.truncf %10 : vector<128x8xf32> to vector<128x8xbf16>
    %c1 = arith.constant 1 : index
    %c0_9 = arith.constant 0 : index
    %c0_10 = arith.constant 0 : index
    %c0_11 = arith.constant 0 : index
    %12 = vector.load %arg7[%c1, %c0_9, %c0_10, %c0_11] : memref<3x3x8x24xbf16, #tpu.memory_space<vmem>>, vector<1x1x8x24xbf16>
    %13 = vector.shape_cast %12 : vector<1x1x8x24xbf16> to vector<8x24xbf16>
    %cst_12 = arith.constant dense<0.000000e+00> : vector<128x24xf32>
    %14 = tpu.matmul %11, %13, %cst_12 {dimension_numbers = #tpu.dot_dimension_numbers<[1], [0], [0], [1], [0, 0, 1, 1], [], []>} : vector<128x8xbf16>, vector<8x24xbf16>, vector<128x24xf32> -> vector<128x24xf32>
    %c0_13 = arith.constant 0 : index
    %c0_14 = arith.constant 0 : index
    %15 = vector.load %arg10[%c0_13, %c0_14] : memref<128x24xf32, #tpu.memory_space<vmem>>, vector<128x24xf32>
    %16 = arith.addf %15, %14 : vector<128x24xf32>
    %c0_15 = arith.constant 0 : index
    %c0_16 = arith.constant 0 : index
    %17 = vector.load %arg10[%c0_15, %c0_16] : memref<128x24xf32, #tpu.memory_space<vmem>>, vector<128x24xf32>
    tpu.vector_store %arg10[%c0_15, %c0_16], %16 {strides = array<i32>} : memref<128x24xf32, #tpu.memory_space<vmem>>, vector<128x24xf32>,
    %18 = vector.extract_strided_slice %1 {offsets = [2, 0, 0], sizes = [8, 16, 8], strides = [1, 1, 1]} : vector<10x24x8xf32> to vector<8x16x8xf32>
    %19 = vector.shape_cast %18 : vector<8x16x8xf32> to vector<128x8xf32>
    %20 = arith.truncf %19 : vector<128x8xf32> to vector<128x8xbf16>
    %c2 = arith.constant 2 : index
    %c0_17 = arith.constant 0 : index
    %c0_18 = arith.constant 0 : index
    %c0_19 = arith.constant 0 : index
    %21 = vector.load %arg7[%c2, %c0_17, %c0_18, %c0_19] : memref<3x3x8x24xbf16, #tpu.memory_space<vmem>>, vector<1x1x8x24xbf16>
    %22 = vector.shape_cast %21 : vector<1x1x8x24xbf16> to vector<8x24xbf16>
    %cst_20 = arith.constant dense<0.000000e+00> : vector<128x24xf32>
    %23 = tpu.matmul %20, %22, %cst_20 {dimension_numbers = #tpu.dot_dimension_numbers<[1], [0], [0], [1], [0, 0, 1, 1], [], []>} : vector<128x8xbf16>, vector<8x24xbf16>, vector<128x24xf32> -> vector<128x24xf32>
    %c0_21 = arith.constant 0 : index
    %c0_22 = arith.constant 0 : index
    %24 = vector.load %arg10[%c0_21, %c0_22] : memref<128x24xf32, #tpu.memory_space<vmem>>, vector<128x24xf32>
    %25 = arith.addf %24, %23 : vector<128x24xf32>
    %c0_23 = arith.constant 0 : index
    %c0_24 = arith.constant 0 : index
    %26 = vector.load %arg10[%c0_23, %c0_24] : memref<128x24xf32, #tpu.memory_space<vmem>>, vector<128x24xf32>
    tpu.vector_store %arg10[%c0_23, %c0_24], %25 {strides = array<i32>} : memref<128x24xf32, #tpu.memory_space<vmem>>, vector<128x24xf32>,
    %c23_i32 = arith.constant 23 : i32
    %27 = tpu.dynamic_rotate %1 by %c23_i32 dim 1 : vector<10x24x8xf32>, i32 -> vector<10x24x8xf32>
    %28 = vector.extract_strided_slice %27 {offsets = [0, 0, 0], sizes = [8, 16, 8], strides = [1, 1, 1]} : vector<10x24x8xf32> to vector<8x16x8xf32>
    %29 = vector.shape_cast %28 : vector<8x16x8xf32> to vector<128x8xf32>
    %30 = arith.truncf %29 : vector<128x8xf32> to vector<128x8xbf16>
    %c0_25 = arith.constant 0 : index
    %c1_26 = arith.constant 1 : index
    %c0_27 = arith.constant 0 : index
    %c0_28 = arith.constant 0 : index
    %31 = vector.load %arg7[%c0_25, %c1_26, %c0_27, %c0_28] : memref<3x3x8x24xbf16, #tpu.memory_space<vmem>>, vector<1x1x8x24xbf16>
    %32 = vector.shape_cast %31 : vector<1x1x8x24xbf16> to vector<8x24xbf16>
    %cst_29 = arith.constant dense<0.000000e+00> : vector<128x24xf32>
    %33 = tpu.matmul %30, %32, %cst_29 {dimension_numbers = #tpu.dot_dimension_numbers<[1], [0], [0], [1], [0, 0, 1, 1], [], []>} : vector<128x8xbf16>, vector<8x24xbf16>, vector<128x24xf32> -> vector<128x24xf32>
    %c0_30 = arith.constant 0 : index
    %c0_31 = arith.constant 0 : index
    %34 = vector.load %arg10[%c0_30, %c0_31] : memref<128x24xf32, #tpu.memory_space<vmem>>, vector<128x24xf32>
    %35 = arith.addf %34, %33 : vector<128x24xf32>
    %c0_32 = arith.constant 0 : index
    %c0_33 = arith.constant 0 : index
    %36 = vector.load %arg10[%c0_32, %c0_33] : memref<128x24xf32, #tpu.memory_space<vmem>>, vector<128x24xf32>
    tpu.vector_store %arg10[%c0_32, %c0_33], %35 {strides = array<i32>} : memref<128x24xf32, #tpu.memory_space<vmem>>, vector<128x24xf32>,
    %37 = vector.extract_strided_slice %27 {offsets = [1, 0, 0], sizes = [8, 16, 8], strides = [1, 1, 1]} : vector<10x24x8xf32> to vector<8x16x8xf32>
    %38 = vector.shape_cast %37 : vector<8x16x8xf32> to vector<128x8xf32>
    %39 = arith.truncf %38 : vector<128x8xf32> to vector<128x8xbf16>
    %c1_34 = arith.constant 1 : index
    %c1_35 = arith.constant 1 : index
    %c0_36 = arith.constant 0 : index
    %c0_37 = arith.constant 0 : index
    %40 = vector.load %arg7[%c1_34, %c1_35, %c0_36, %c0_37] : memref<3x3x8x24xbf16, #tpu.memory_space<vmem>>, vector<1x1x8x24xbf16>
    %41 = vector.shape_cast %40 : vector<1x1x8x24xbf16> to vector<8x24xbf16>
    %cst_38 = arith.constant dense<0.000000e+00> : vector<128x24xf32>
    %42 = tpu.matmul %39, %41, %cst_38 {dimension_numbers = #tpu.dot_dimension_numbers<[1], [0], [0], [1], [0, 0, 1, 1], [], []>} : vector<128x8xbf16>, vector<8x24xbf16>, vector<128x24xf32> -> vector<128x24xf32>
    %c0_39 = arith.constant 0 : index
    %c0_40 = arith.constant 0 : index
    %43 = vector.load %arg10[%c0_39, %c0_40] : memref<128x24xf32, #tpu.memory_space<vmem>>, vector<128x24xf32>
    %44 = arith.addf %43, %42 : vector<128x24xf32>
    %c0_41 = arith.constant 0 : index
    %c0_42 = arith.constant 0 : index
    %45 = vector.load %arg10[%c0_41, %c0_42] : memref<128x24xf32, #tpu.memory_space<vmem>>, vector<128x24xf32>
    tpu.vector_store %arg10[%c0_41, %c0_42], %44 {strides = array<i32>} : memref<128x24xf32, #tpu.memory_space<vmem>>, vector<128x24xf32>,
    %46 = vector.extract_strided_slice %27 {offsets = [2, 0, 0], sizes = [8, 16, 8], strides = [1, 1, 1]} : vector<10x24x8xf32> to vector<8x16x8xf32>
    %47 = vector.shape_cast %46 : vector<8x16x8xf32> to vector<128x8xf32>
    %48 = arith.truncf %47 : vector<128x8xf32> to vector<128x8xbf16>
    %c2_43 = arith.constant 2 : index
    %c1_44 = arith.constant 1 : index
    %c0_45 = arith.constant 0 : index
    %c0_46 = arith.constant 0 : index
    %49 = vector.load %arg7[%c2_43, %c1_44, %c0_45, %c0_46] : memref<3x3x8x24xbf16, #tpu.memory_space<vmem>>, vector<1x1x8x24xbf16>
    %50 = vector.shape_cast %49 : vector<1x1x8x24xbf16> to vector<8x24xbf16>
    %cst_47 = arith.constant dense<0.000000e+00> : vector<128x24xf32>
    %51 = tpu.matmul %48, %50, %cst_47 {dimension_numbers = #tpu.dot_dimension_numbers<[1], [0], [0], [1], [0, 0, 1, 1], [], []>} : vector<128x8xbf16>, vector<8x24xbf16>, vector<128x24xf32> -> vector<128x24xf32>
    %c0_48 = arith.constant 0 : index
    %c0_49 = arith.constant 0 : index
    %52 = vector.load %arg10[%c0_48, %c0_49] : memref<128x24xf32, #tpu.memory_space<vmem>>, vector<128x24xf32>
    %53 = arith.addf %52, %51 : vector<128x24xf32>
    %c0_50 = arith.constant 0 : index
    %c0_51 = arith.constant 0 : index
    %54 = vector.load %arg10[%c0_50, %c0_51] : memref<128x24xf32, #tpu.memory_space<vmem>>, vector<128x24xf32>
    tpu.vector_store %arg10[%c0_50, %c0_51], %53 {strides = array<i32>} : memref<128x24xf32, #tpu.memory_space<vmem>>, vector<128x24xf32>,
    %c22_i32 = arith.constant 22 : i32
    %55 = tpu.dynamic_rotate %1 by %c22_i32 dim 1 : vector<10x24x8xf32>, i32 -> vector<10x24x8xf32>
    %56 = vector.extract_strided_slice %55 {offsets = [0, 0, 0], sizes = [8, 16, 8], strides = [1, 1, 1]} : vector<10x24x8xf32> to vector<8x16x8xf32>
    %57 = vector.shape_cast %56 : vector<8x16x8xf32> to vector<128x8xf32>
    %58 = arith.truncf %57 : vector<128x8xf32> to vector<128x8xbf16>
    %c0_52 = arith.constant 0 : index
    %c2_53 = arith.constant 2 : index
    %c0_54 = arith.constant 0 : index
    %c0_55 = arith.constant 0 : index
    %59 = vector.load %arg7[%c0_52, %c2_53, %c0_54, %c0_55] : memref<3x3x8x24xbf16, #tpu.memory_space<vmem>>, vector<1x1x8x24xbf16>
    %60 = vector.shape_cast %59 : vector<1x1x8x24xbf16> to vector<8x24xbf16>
    %cst_56 = arith.constant dense<0.000000e+00> : vector<128x24xf32>
    %61 = tpu.matmul %58, %60, %cst_56 {dimension_numbers = #tpu.dot_dimension_numbers<[1], [0], [0], [1], [0, 0, 1, 1], [], []>} : vector<128x8xbf16>, vector<8x24xbf16>, vector<128x24xf32> -> vector<128x24xf32>
    %c0_57 = arith.constant 0 : index
    %c0_58 = arith.constant 0 : index
    %62 = vector.load %arg10[%c0_57, %c0_58] : memref<128x24xf32, #tpu.memory_space<vmem>>, vector<128x24xf32>
    %63 = arith.addf %62, %61 : vector<128x24xf32>
    %c0_59 = arith.constant 0 : index
    %c0_60 = arith.constant 0 : index
    %64 = vector.load %arg10[%c0_59, %c0_60] : memref<128x24xf32, #tpu.memory_space<vmem>>, vector<128x24xf32>
    tpu.vector_store %arg10[%c0_59, %c0_60], %63 {strides = array<i32>} : memref<128x24xf32, #tpu.memory_space<vmem>>, vector<128x24xf32>,
    %65 = vector.extract_strided_slice %55 {offsets = [1, 0, 0], sizes = [8, 16, 8], strides = [1, 1, 1]} : vector<10x24x8xf32> to vector<8x16x8xf32>
    %66 = vector.shape_cast %65 : vector<8x16x8xf32> to vector<128x8xf32>
    %67 = arith.truncf %66 : vector<128x8xf32> to vector<128x8xbf16>
    %c1_61 = arith.constant 1 : index
    %c2_62 = arith.constant 2 : index
    %c0_63 = arith.constant 0 : index
    %c0_64 = arith.constant 0 : index
    %68 = vector.load %arg7[%c1_61, %c2_62, %c0_63, %c0_64] : memref<3x3x8x24xbf16, #tpu.memory_space<vmem>>, vector<1x1x8x24xbf16>
    %69 = vector.shape_cast %68 : vector<1x1x8x24xbf16> to vector<8x24xbf16>
    %cst_65 = arith.constant dense<0.000000e+00> : vector<128x24xf32>
    %70 = tpu.matmul %67, %69, %cst_65 {dimension_numbers = #tpu.dot_dimension_numbers<[1], [0], [0], [1], [0, 0, 1, 1], [], []>} : vector<128x8xbf16>, vector<8x24xbf16>, vector<128x24xf32> -> vector<128x24xf32>
    %c0_66 = arith.constant 0 : index
    %c0_67 = arith.constant 0 : index
    %71 = vector.load %arg10[%c0_66, %c0_67] : memref<128x24xf32, #tpu.memory_space<vmem>>, vector<128x24xf32>
    %72 = arith.addf %71, %70 : vector<128x24xf32>
    %c0_68 = arith.constant 0 : index
    %c0_69 = arith.constant 0 : index
    %73 = vector.load %arg10[%c0_68, %c0_69] : memref<128x24xf32, #tpu.memory_space<vmem>>, vector<128x24xf32>
    tpu.vector_store %arg10[%c0_68, %c0_69], %72 {strides = array<i32>} : memref<128x24xf32, #tpu.memory_space<vmem>>, vector<128x24xf32>,
    %74 = vector.extract_strided_slice %55 {offsets = [2, 0, 0], sizes = [8, 16, 8], strides = [1, 1, 1]} : vector<10x24x8xf32> to vector<8x16x8xf32>
    %75 = vector.shape_cast %74 : vector<8x16x8xf32> to vector<128x8xf32>
    %76 = arith.truncf %75 : vector<128x8xf32> to vector<128x8xbf16>
    %c2_70 = arith.constant 2 : index
    %c2_71 = arith.constant 2 : index
    %c0_72 = arith.constant 0 : index
    %c0_73 = arith.constant 0 : index
    %77 = vector.load %arg7[%c2_70, %c2_71, %c0_72, %c0_73] : memref<3x3x8x24xbf16, #tpu.memory_space<vmem>>, vector<1x1x8x24xbf16>
    %78 = vector.shape_cast %77 : vector<1x1x8x24xbf16> to vector<8x24xbf16>
    %cst_74 = arith.constant dense<0.000000e+00> : vector<128x24xf32>
    %79 = tpu.matmul %76, %78, %cst_74 {dimension_numbers = #tpu.dot_dimension_numbers<[1], [0], [0], [1], [0, 0, 1, 1], [], []>} : vector<128x8xbf16>, vector<8x24xbf16>, vector<128x24xf32> -> vector<128x24xf32>
    %c0_75 = arith.constant 0 : index
    %c0_76 = arith.constant 0 : index
    %80 = vector.load %arg10[%c0_75, %c0_76] : memref<128x24xf32, #tpu.memory_space<vmem>>, vector<128x24xf32>
    %81 = arith.addf %80, %79 : vector<128x24xf32>
    %c0_77 = arith.constant 0 : index
    %c0_78 = arith.constant 0 : index
    %82 = vector.load %arg10[%c0_77, %c0_78] : memref<128x24xf32, #tpu.memory_space<vmem>>, vector<128x24xf32>
    tpu.vector_store %arg10[%c0_77, %c0_78], %81 {strides = array<i32>} : memref<128x24xf32, #tpu.memory_space<vmem>>, vector<128x24xf32>,
    %c0_79 = arith.constant 0 : index
    %c0_80 = arith.constant 0 : index
    %83 = vector.load %arg10[%c0_79, %c0_80] : memref<128x24xf32, #tpu.memory_space<vmem>>, vector<128x24xf32>
    %84 = vector.shape_cast %83 : vector<128x24xf32> to vector<8x16x24xf32>
    %c0_81 = arith.constant 0 : index
    %c0_82 = arith.constant 0 : index
    %85 = vector.load %arg8[%c0_81, %c0_82] : memref<1x24xf32, #tpu.memory_space<vmem>>, vector<1x24xf32>
    %86 = vector.shape_cast %85 : vector<1x24xf32> to vector<24xf32>
    %87 = vector.shape_cast %86 : vector<24xf32> to vector<1x1x24xf32>
    %88 = vector.broadcast %87 : vector<1x1x24xf32> to vector<8x16x24xf32>
    %89 = arith.addf %84, %88 : vector<8x16x24xf32>
    %90 = vector.extract_strided_slice %89 {offsets = [0, 0, 0], sizes = [8, 16, 8], strides = [1, 1, 1]} : vector<8x16x24xf32> to vector<8x16x8xf32>
    %91 = vector.extract_strided_slice %89 {offsets = [0, 0, 8], sizes = [8, 16, 8], strides = [1, 1, 1]} : vector<8x16x24xf32> to vector<8x16x8xf32>
    %cst_83 = arith.constant 1.000000e+00 : f32
    %92 = vector.broadcast %cst_83 : f32 to vector<8x16x8xf32>
    %93 = arith.addf %91, %92 : vector<8x16x8xf32>
    %94 = arith.negf %93 : vector<8x16x8xf32>
    %95 = math.exp %94 : vector<8x16x8xf32>
    %cst_84 = arith.constant 1.000000e+00 : f32
    %96 = vector.broadcast %cst_84 : f32 to vector<8x16x8xf32>
    %97 = arith.addf %96, %95 : vector<8x16x8xf32>
    %98 = arith.divf %96, %97 : vector<8x16x8xf32>
    %99 = vector.extract_strided_slice %89 {offsets = [0, 0, 16], sizes = [8, 16, 8], strides = [1, 1, 1]} : vector<8x16x24xf32> to vector<8x16x8xf32>
    %cst_85 = arith.constant 1.000000e+00 : f32
    %100 = vector.broadcast %cst_85 : f32 to vector<8x16x8xf32>
    %101 = arith.addf %99, %100 : vector<8x16x8xf32>
    %102 = arith.negf %101 : vector<8x16x8xf32>
    %103 = math.exp %102 : vector<8x16x8xf32>
    %cst_86 = arith.constant 1.000000e+00 : f32
    %104 = vector.broadcast %cst_86 : f32 to vector<8x16x8xf32>
    %105 = arith.addf %104, %103 : vector<8x16x8xf32>
    %106 = arith.divf %104, %105 : vector<8x16x8xf32>
    %c0_87 = arith.constant 0 : index
    %c0_88 = arith.constant 0 : index
    %c0_89 = arith.constant 0 : index
    %c0_90 = arith.constant 0 : index
    %107 = vector.load %arg4[%c0_87, %c0_88, %c0_89, %c0_90] : memref<1x8x16x8xf32, #tpu.memory_space<vmem>>, vector<1x8x16x8xf32>
    %108 = vector.shape_cast %107 : vector<1x8x16x8xf32> to vector<8x16x8xf32>
    %c0_91 = arith.constant 0 : index
    %c0_92 = arith.constant 0 : index
    %c0_93 = arith.constant 0 : index
    %c0_94 = arith.constant 0 : index
    %109 = vector.load %arg5[%c0_91, %c0_92, %c0_93, %c0_94] : memref<1x8x16x8xf32, #tpu.memory_space<vmem>>, vector<1x8x16x8xf32>
    %110 = vector.shape_cast %109 : vector<1x8x16x8xf32> to vector<8x16x8xf32>
    %c0_95 = arith.constant 0 : index
    %c0_96 = arith.constant 0 : index
    %c0_97 = arith.constant 0 : index
    %c0_98 = arith.constant 0 : index
    %111 = vector.load %arg6[%c0_95, %c0_96, %c0_97, %c0_98] : memref<1x8x16x8xf32, #tpu.memory_space<vmem>>, vector<1x8x16x8xf32>
    %112 = vector.shape_cast %111 : vector<1x8x16x8xf32> to vector<8x16x8xf32>
    %c0_99 = arith.constant 0 : index
    %c0_100 = arith.constant 0 : index
    %113 = memref.load %arg2[%c0_99, %c0_100] : memref<1x1xf32, #tpu.memory_space<smem>>
    %114 = vector.broadcast %113 : f32 to vector<8x16x8xf32>
    %115 = arith.mulf %114, %110 : vector<8x16x8xf32>
    %cst_101 = arith.constant 1.000000e+00 : f32
    %116 = arith.subf %cst_101, %113 : f32
    %117 = vector.broadcast %116 : f32 to vector<8x16x8xf32>
    %118 = arith.mulf %117, %112 : vector<8x16x8xf32>
    %119 = arith.addf %115, %118 : vector<8x16x8xf32>
    %120 = arith.subf %119, %90 : vector<8x16x8xf32>
    %121 = arith.mulf %98, %120 : vector<8x16x8xf32>
    %122 = arith.addf %121, %90 : vector<8x16x8xf32>
    %123 = math.tanh %122 : vector<8x16x8xf32>
    %124 = arith.subf %123, %108 : vector<8x16x8xf32>
    %125 = arith.mulf %106, %124 : vector<8x16x8xf32>
    %126 = arith.addf %125, %108 : vector<8x16x8xf32>
    %c0_102 = arith.constant 0 : index
    %c0_103 = arith.constant 0 : index
    %c0_104 = arith.constant 0 : index
    %c0_105 = arith.constant 0 : index
    %127 = vector.load %arg9[%c0_102, %c0_103, %c0_104, %c0_105] : memref<1x8x16x8xf32, #tpu.memory_space<vmem>>, vector<1x8x16x8xf32>
    %128 = vector.shape_cast %127 : vector<1x8x16x8xf32> to vector<8x16x8xf32>
    %129 = vector.shape_cast %126 : vector<8x16x8xf32> to vector<1x8x16x8xf32>
    tpu.vector_store %arg9[%c0_102, %c0_103, %c0_104, %c0_105], %129 {strides = array<i32>} : memref<1x8x16x8xf32, #tpu.memory_space<vmem>>, vector<1x8x16x8xf32>,
    return
  }
  func.func @transform_0(%arg0: i32, %arg1: i32) -> (i32, i32) {
    %c0_i32 = arith.constant 0 : i32
    %c0_i32_0 = arith.constant 0 : i32
    %c0_i32_1 = arith.constant 0 : i32
    return %c0_i32, %c0_i32_0 : i32, i32
  }
  func.func @transform_1(%arg0: i32, %arg1: i32) -> (i32, i32, i32, i32) {
    %c0_i32 = arith.constant 0 : i32
    %c0_i32_0 = arith.constant 0 : i32
    %c0_i32_1 = arith.constant 0 : i32
    return %arg0, %arg1, %c0_i32, %c0_i32_0 : i32, i32, i32, i32
  }
  func.func @transform_2(%arg0: i32, %arg1: i32) -> (i32, i32, i32, i32) {
    %c0_i32 = arith.constant 0 : i32
    %c0_i32_0 = arith.constant 0 : i32
    %c0_i32_1 = arith.constant 0 : i32
    return %arg0, %arg1, %c0_i32, %c0_i32_0 : i32, i32, i32, i32
  }
  func.func @transform_3(%arg0: i32, %arg1: i32) -> (i32, i32, i32, i32) {
    %c0_i32 = arith.constant 0 : i32
    %c0_i32_0 = arith.constant 0 : i32
    %c0_i32_1 = arith.constant 0 : i32
    return %arg0, %arg1, %c0_i32, %c0_i32_0 : i32, i32, i32, i32
  }
  func.func @transform_4(%arg0: i32, %arg1: i32) -> (i32, i32, i32, i32) {
    %c0_i32 = arith.constant 0 : i32
    %c0_i32_0 = arith.constant 0 : i32
    %c0_i32_1 = arith.constant 0 : i32
    return %arg0, %arg1, %c0_i32, %c0_i32_0 : i32, i32, i32, i32
  }
  func.func @transform_5(%arg0: i32, %arg1: i32) -> (i32, i32, i32, i32) {
    %c0_i32 = arith.constant 0 : i32
    %c0_i32_0 = arith.constant 0 : i32
    %c0_i32_1 = arith.constant 0 : i32
    %c0_i32_2 = arith.constant 0 : i32
    %c0_i32_3 = arith.constant 0 : i32
    return %c0_i32, %c0_i32_0, %c0_i32_1, %c0_i32_2 : i32, i32, i32, i32
  }
  func.func @transform_6(%arg0: i32, %arg1: i32) -> (i32, i32) {
    %c0_i32 = arith.constant 0 : i32
    %c0_i32_0 = arith.constant 0 : i32
    %c0_i32_1 = arith.constant 0 : i32
    return %c0_i32, %c0_i32_0 : i32, i32
  }
  func.func @transform_7(%arg0: i32, %arg1: i32) -> (i32, i32, i32, i32) {
    %c0_i32 = arith.constant 0 : i32
    %c0_i32_0 = arith.constant 0 : i32
    %c0_i32_1 = arith.constant 0 : i32
    return %arg0, %arg1, %c0_i32, %c0_i32_0 : i32, i32, i32, i32
  }
}

module attributes {stable_mosaic.version = 11 : i64} {
  func.func @gate_cell_kernel(%arg0: i32, %arg1: i32, %arg2: memref<1x1xf32, #tpu.memory_space<smem>>, %arg3: memref<1x10x24x8xf32, #tpu.memory_space<vmem>>, %arg4: memref<1x8x16x8xf32, #tpu.memory_space<vmem>>, %arg5: memref<1x8x16x8xf32, #tpu.memory_space<vmem>>, %arg6: memref<1x8x16x8xf32, #tpu.memory_space<vmem>>, %arg7: memref<3x3x8x24xbf16, #tpu.memory_space<vmem>>, %arg8: memref<1x24xf32, #tpu.memory_space<vmem>>, %arg9: memref<1x8x16x8xf32, #tpu.memory_space<vmem>>, %arg10: memref<128x24xf32, #tpu.memory_space<vmem>>) attributes {dimension_semantics = [#tpu.dimension_semantics<parallel>, #tpu.dimension_semantics<parallel>], iteration_bounds = array<i64: 2, 2>, scalar_prefetch = 0 : i64, scratch_operands = 1 : i64, tpu.core_type = #tpu.core_type<tc>, window_params = [{transform_indices = @transform_0, window_bounds = array<i64: 1, 1>}, {transform_indices = @transform_1, window_bounds = array<i64: 1, 10, 24, 8>}, {transform_indices = @transform_2, window_bounds = array<i64: 1, 8, 16, 8>}, {transform_indices = @transform_3, window_bounds = array<i64: 1, 8, 16, 8>}, {transform_indices = @transform_4, window_bounds = array<i64: 1, 8, 16, 8>}, {pipeline_mode = #tpu.pipeline_mode<synchronous>, transform_indices = @transform_5, window_bounds = array<i64: 3, 3, 8, 24>}, {pipeline_mode = #tpu.pipeline_mode<synchronous>, transform_indices = @transform_6, window_bounds = array<i64: 1, 24>}, {transform_indices = @transform_7, window_bounds = array<i64: 1, 8, 16, 8>}]} {
    %c0 = arith.constant 0 : index
    %c0_0 = arith.constant 0 : index
    %c0_1 = arith.constant 0 : index
    %c0_2 = arith.constant 0 : index
    %0 = vector.load %arg3[%c0, %c0_0, %c0_1, %c0_2] : memref<1x10x24x8xf32, #tpu.memory_space<vmem>>, vector<1x10x24x8xf32>
    %1 = vector.shape_cast %0 : vector<1x10x24x8xf32> to vector<10x24x8xf32>
    %2 = vector.extract_strided_slice %1 {offsets = [0, 0, 0], sizes = [8, 16, 8], strides = [1, 1, 1]} : vector<10x24x8xf32> to vector<8x16x8xf32>
    %3 = vector.shape_cast %2 : vector<8x16x8xf32> to vector<128x8xf32>
    %4 = arith.truncf %3 : vector<128x8xf32> to vector<128x8xbf16>
    %c0_3 = arith.constant 0 : index
    %c0_4 = arith.constant 0 : index
    %c0_5 = arith.constant 0 : index
    %c0_6 = arith.constant 0 : index
    %5 = vector.load %arg7[%c0_3, %c0_4, %c0_5, %c0_6] : memref<3x3x8x24xbf16, #tpu.memory_space<vmem>>, vector<1x1x8x24xbf16>
    %6 = vector.shape_cast %5 : vector<1x1x8x24xbf16> to vector<8x24xbf16>
    %cst = arith.constant dense<0.000000e+00> : vector<128x24xf32>
    %7 = tpu.matmul %4, %6, %cst {dimension_numbers = #tpu.dot_dimension_numbers<[1], [0], [0], [1], [0, 0, 1, 1], [], []>} : vector<128x8xbf16>, vector<8x24xbf16>, vector<128x24xf32> -> vector<128x24xf32>
    %c0_7 = arith.constant 0 : index
    %c0_8 = arith.constant 0 : index
    %8 = vector.load %arg10[%c0_7, %c0_8] : memref<128x24xf32, #tpu.memory_space<vmem>>, vector<128x24xf32>
    tpu.vector_store %arg10[%c0_7, %c0_8], %7 {strides = array<i32>} : memref<128x24xf32, #tpu.memory_space<vmem>>, vector<128x24xf32>,
    %9 = vector.extract_strided_slice %1 {offsets = [1, 0, 0], sizes = [8, 16, 8], strides = [1, 1, 1]} : vector<10x24x8xf32> to vector<8x16x8xf32>
    %10 = vector.shape_cast %9 : vector<8x16x8xf32> to vector<128x8xf32>
    %11 = arith.truncf %10 : vector<128x8xf32> to vector<128x8xbf16>
    %c1 = arith.constant 1 : index
    %c0_9 = arith.constant 0 : index
    %c0_10 = arith.constant 0 : index
    %c0_11 = arith.constant 0 : index
    %12 = vector.load %arg7[%c1, %c0_9, %c0_10, %c0_11] : memref<3x3x8x24xbf16, #tpu.memory_space<vmem>>, vector<1x1x8x24xbf16>
    %13 = vector.shape_cast %12 : vector<1x1x8x24xbf16> to vector<8x24xbf16>
    %cst_12 = arith.constant dense<0.000000e+00> : vector<128x24xf32>
    %14 = tpu.matmul %11, %13, %cst_12 {dimension_numbers = #tpu.dot_dimension_numbers<[1], [0], [0], [1], [0, 0, 1, 1], [], []>} : vector<128x8xbf16>, vector<8x24xbf16>, vector<128x24xf32> -> vector<128x24xf32>
    %c0_13 = arith.constant 0 : index
    %c0_14 = arith.constant 0 : index
    %15 = vector.load %arg10[%c0_13, %c0_14] : memref<128x24xf32, #tpu.memory_space<vmem>>, vector<128x24xf32>
    %16 = arith.addf %15, %14 : vector<128x24xf32>
    %c0_15 = arith.constant 0 : index
    %c0_16 = arith.constant 0 : index
    %17 = vector.load %arg10[%c0_15, %c0_16] : memref<128x24xf32, #tpu.memory_space<vmem>>, vector<128x24xf32>
    tpu.vector_store %arg10[%c0_15, %c0_16], %16 {strides = array<i32>} : memref<128x24xf32, #tpu.memory_space<vmem>>, vector<128x24xf32>,
    %18 = vector.extract_strided_slice %1 {offsets = [2, 0, 0], sizes = [8, 16, 8], strides = [1, 1, 1]} : vector<10x24x8xf32> to vector<8x16x8xf32>
    %19 = vector.shape_cast %18 : vector<8x16x8xf32> to vector<128x8xf32>
    %20 = arith.truncf %19 : vector<128x8xf32> to vector<128x8xbf16>
    %c2 = arith.constant 2 : index
    %c0_17 = arith.constant 0 : index
    %c0_18 = arith.constant 0 : index
    %c0_19 = arith.constant 0 : index
    %21 = vector.load %arg7[%c2, %c0_17, %c0_18, %c0_19] : memref<3x3x8x24xbf16, #tpu.memory_space<vmem>>, vector<1x1x8x24xbf16>
    %22 = vector.shape_cast %21 : vector<1x1x8x24xbf16> to vector<8x24xbf16>
    %cst_20 = arith.constant dense<0.000000e+00> : vector<128x24xf32>
    %23 = tpu.matmul %20, %22, %cst_20 {dimension_numbers = #tpu.dot_dimension_numbers<[1], [0], [0], [1], [0, 0, 1, 1], [], []>} : vector<128x8xbf16>, vector<8x24xbf16>, vector<128x24xf32> -> vector<128x24xf32>
    %c0_21 = arith.constant 0 : index
    %c0_22 = arith.constant 0 : index
    %24 = vector.load %arg10[%c0_21, %c0_22] : memref<128x24xf32, #tpu.memory_space<vmem>>, vector<128x24xf32>
    %25 = arith.addf %24, %23 : vector<128x24xf32>
    %c0_23 = arith.constant 0 : index
    %c0_24 = arith.constant 0 : index
    %26 = vector.load %arg10[%c0_23, %c0_24] : memref<128x24xf32, #tpu.memory_space<vmem>>, vector<128x24xf32>
    tpu.vector_store %arg10[%c0_23, %c0_24], %25 {strides = array<i32>} : memref<128x24xf32, #tpu.memory_space<vmem>>, vector<128x24xf32>,
    %c23_i32 = arith.constant 23 : i32
    %27 = tpu.dynamic_rotate %1 by %c23_i32 dim 1 : vector<10x24x8xf32>, i32 -> vector<10x24x8xf32>
    %28 = vector.extract_strided_slice %27 {offsets = [0, 0, 0], sizes = [8, 16, 8], strides = [1, 1, 1]} : vector<10x24x8xf32> to vector<8x16x8xf32>
    %29 = vector.shape_cast %28 : vector<8x16x8xf32> to vector<128x8xf32>
    %30 = arith.truncf %29 : vector<128x8xf32> to vector<128x8xbf16>
    %c0_25 = arith.constant 0 : index
    %c1_26 = arith.constant 1 : index
    %c0_27 = arith.constant 0 : index
    %c0_28 = arith.constant 0 : index
    %31 = vector.load %arg7[%c0_25, %c1_26, %c0_27, %c0_28] : memref<3x3x8x24xbf16, #tpu.memory_space<vmem>>, vector<1x1x8x24xbf16>
    %32 = vector.shape_cast %31 : vector<1x1x8x24xbf16> to vector<8x24xbf16>
    %cst_29 = arith.constant dense<0.000000e+00> : vector<128x24xf32>
    %33 = tpu.matmul %30, %32, %cst_29 {dimension_numbers = #tpu.dot_dimension_numbers<[1], [0], [0], [1], [0, 0, 1, 1], [], []>} : vector<128x8xbf16>, vector<8x24xbf16>, vector<128x24xf32> -> vector<128x24xf32>
    %c0_30 = arith.constant 0 : index
    %c0_31 = arith.constant 0 : index
    %34 = vector.load %arg10[%c0_30, %c0_31] : memref<128x24xf32, #tpu.memory_space<vmem>>, vector<128x24xf32>
    %35 = arith.addf %34, %33 : vector<128x24xf32>
    %c0_32 = arith.constant 0 : index
    %c0_33 = arith.constant 0 : index
    %36 = vector.load %arg10[%c0_32, %c0_33] : memref<128x24xf32, #tpu.memory_space<vmem>>, vector<128x24xf32>
    tpu.vector_store %arg10[%c0_32, %c0_33], %35 {strides = array<i32>} : memref<128x24xf32, #tpu.memory_space<vmem>>, vector<128x24xf32>,
    %37 = vector.extract_strided_slice %27 {offsets = [1, 0, 0], sizes = [8, 16, 8], strides = [1, 1, 1]} : vector<10x24x8xf32> to vector<8x16x8xf32>
    %38 = vector.shape_cast %37 : vector<8x16x8xf32> to vector<128x8xf32>
    %39 = arith.truncf %38 : vector<128x8xf32> to vector<128x8xbf16>
    %c1_34 = arith.constant 1 : index
    %c1_35 = arith.constant 1 : index
    %c0_36 = arith.constant 0 : index
    %c0_37 = arith.constant 0 : index
    %40 = vector.load %arg7[%c1_34, %c1_35, %c0_36, %c0_37] : memref<3x3x8x24xbf16, #tpu.memory_space<vmem>>, vector<1x1x8x24xbf16>
    %41 = vector.shape_cast %40 : vector<1x1x8x24xbf16> to vector<8x24xbf16>
    %cst_38 = arith.constant dense<0.000000e+00> : vector<128x24xf32>
    %42 = tpu.matmul %39, %41, %cst_38 {dimension_numbers = #tpu.dot_dimension_numbers<[1], [0], [0], [1], [0, 0, 1, 1], [], []>} : vector<128x8xbf16>, vector<8x24xbf16>, vector<128x24xf32> -> vector<128x24xf32>
    %c0_39 = arith.constant 0 : index
    %c0_40 = arith.constant 0 : index
    %43 = vector.load %arg10[%c0_39, %c0_40] : memref<128x24xf32, #tpu.memory_space<vmem>>, vector<128x24xf32>
    %44 = arith.addf %43, %42 : vector<128x24xf32>
    %c0_41 = arith.constant 0 : index
    %c0_42 = arith.constant 0 : index
    %45 = vector.load %arg10[%c0_41, %c0_42] : memref<128x24xf32, #tpu.memory_space<vmem>>, vector<128x24xf32>
    tpu.vector_store %arg10[%c0_41, %c0_42], %44 {strides = array<i32>} : memref<128x24xf32, #tpu.memory_space<vmem>>, vector<128x24xf32>,
    %46 = vector.extract_strided_slice %27 {offsets = [2, 0, 0], sizes = [8, 16, 8], strides = [1, 1, 1]} : vector<10x24x8xf32> to vector<8x16x8xf32>
    %47 = vector.shape_cast %46 : vector<8x16x8xf32> to vector<128x8xf32>
    %48 = arith.truncf %47 : vector<128x8xf32> to vector<128x8xbf16>
    %c2_43 = arith.constant 2 : index
    %c1_44 = arith.constant 1 : index
    %c0_45 = arith.constant 0 : index
    %c0_46 = arith.constant 0 : index
    %49 = vector.load %arg7[%c2_43, %c1_44, %c0_45, %c0_46] : memref<3x3x8x24xbf16, #tpu.memory_space<vmem>>, vector<1x1x8x24xbf16>
    %50 = vector.shape_cast %49 : vector<1x1x8x24xbf16> to vector<8x24xbf16>
    %cst_47 = arith.constant dense<0.000000e+00> : vector<128x24xf32>
    %51 = tpu.matmul %48, %50, %cst_47 {dimension_numbers = #tpu.dot_dimension_numbers<[1], [0], [0], [1], [0, 0, 1, 1], [], []>} : vector<128x8xbf16>, vector<8x24xbf16>, vector<128x24xf32> -> vector<128x24xf32>
    %c0_48 = arith.constant 0 : index
    %c0_49 = arith.constant 0 : index
    %52 = vector.load %arg10[%c0_48, %c0_49] : memref<128x24xf32, #tpu.memory_space<vmem>>, vector<128x24xf32>
    %53 = arith.addf %52, %51 : vector<128x24xf32>
    %c0_50 = arith.constant 0 : index
    %c0_51 = arith.constant 0 : index
    %54 = vector.load %arg10[%c0_50, %c0_51] : memref<128x24xf32, #tpu.memory_space<vmem>>, vector<128x24xf32>
    tpu.vector_store %arg10[%c0_50, %c0_51], %53 {strides = array<i32>} : memref<128x24xf32, #tpu.memory_space<vmem>>, vector<128x24xf32>,
    %c22_i32 = arith.constant 22 : i32
    %55 = tpu.dynamic_rotate %1 by %c22_i32 dim 1 : vector<10x24x8xf32>, i32 -> vector<10x24x8xf32>
    %56 = vector.extract_strided_slice %55 {offsets = [0, 0, 0], sizes = [8, 16, 8], strides = [1, 1, 1]} : vector<10x24x8xf32> to vector<8x16x8xf32>
    %57 = vector.shape_cast %56 : vector<8x16x8xf32> to vector<128x8xf32>
    %58 = arith.truncf %57 : vector<128x8xf32> to vector<128x8xbf16>
    %c0_52 = arith.constant 0 : index
    %c2_53 = arith.constant 2 : index
    %c0_54 = arith.constant 0 : index
    %c0_55 = arith.constant 0 : index
    %59 = vector.load %arg7[%c0_52, %c2_53, %c0_54, %c0_55] : memref<3x3x8x24xbf16, #tpu.memory_space<vmem>>, vector<1x1x8x24xbf16>
    %60 = vector.shape_cast %59 : vector<1x1x8x24xbf16> to vector<8x24xbf16>
    %cst_56 = arith.constant dense<0.000000e+00> : vector<128x24xf32>
    %61 = tpu.matmul %58, %60, %cst_56 {dimension_numbers = #tpu.dot_dimension_numbers<[1], [0], [0], [1], [0, 0, 1, 1], [], []>} : vector<128x8xbf16>, vector<8x24xbf16>, vector<128x24xf32> -> vector<128x24xf32>
    %c0_57 = arith.constant 0 : index
    %c0_58 = arith.constant 0 : index
    %62 = vector.load %arg10[%c0_57, %c0_58] : memref<128x24xf32, #tpu.memory_space<vmem>>, vector<128x24xf32>
    %63 = arith.addf %62, %61 : vector<128x24xf32>
    %c0_59 = arith.constant 0 : index
    %c0_60 = arith.constant 0 : index
    %64 = vector.load %arg10[%c0_59, %c0_60] : memref<128x24xf32, #tpu.memory_space<vmem>>, vector<128x24xf32>
    tpu.vector_store %arg10[%c0_59, %c0_60], %63 {strides = array<i32>} : memref<128x24xf32, #tpu.memory_space<vmem>>, vector<128x24xf32>,
    %65 = vector.extract_strided_slice %55 {offsets = [1, 0, 0], sizes = [8, 16, 8], strides = [1, 1, 1]} : vector<10x24x8xf32> to vector<8x16x8xf32>
    %66 = vector.shape_cast %65 : vector<8x16x8xf32> to vector<128x8xf32>
    %67 = arith.truncf %66 : vector<128x8xf32> to vector<128x8xbf16>
    %c1_61 = arith.constant 1 : index
    %c2_62 = arith.constant 2 : index
    %c0_63 = arith.constant 0 : index
    %c0_64 = arith.constant 0 : index
    %68 = vector.load %arg7[%c1_61, %c2_62, %c0_63, %c0_64] : memref<3x3x8x24xbf16, #tpu.memory_space<vmem>>, vector<1x1x8x24xbf16>
    %69 = vector.shape_cast %68 : vector<1x1x8x24xbf16> to vector<8x24xbf16>
    %cst_65 = arith.constant dense<0.000000e+00> : vector<128x24xf32>
    %70 = tpu.matmul %67, %69, %cst_65 {dimension_numbers = #tpu.dot_dimension_numbers<[1], [0], [0], [1], [0, 0, 1, 1], [], []>} : vector<128x8xbf16>, vector<8x24xbf16>, vector<128x24xf32> -> vector<128x24xf32>
    %c0_66 = arith.constant 0 : index
    %c0_67 = arith.constant 0 : index
    %71 = vector.load %arg10[%c0_66, %c0_67] : memref<128x24xf32, #tpu.memory_space<vmem>>, vector<128x24xf32>
    %72 = arith.addf %71, %70 : vector<128x24xf32>
    %c0_68 = arith.constant 0 : index
    %c0_69 = arith.constant 0 : index
    %73 = vector.load %arg10[%c0_68, %c0_69] : memref<128x24xf32, #tpu.memory_space<vmem>>, vector<128x24xf32>
    tpu.vector_store %arg10[%c0_68, %c0_69], %72 {strides = array<i32>} : memref<128x24xf32, #tpu.memory_space<vmem>>, vector<128x24xf32>,
    %74 = vector.extract_strided_slice %55 {offsets = [2, 0, 0], sizes = [8, 16, 8], strides = [1, 1, 1]} : vector<10x24x8xf32> to vector<8x16x8xf32>
    %75 = vector.shape_cast %74 : vector<8x16x8xf32> to vector<128x8xf32>
    %76 = arith.truncf %75 : vector<128x8xf32> to vector<128x8xbf16>
    %c2_70 = arith.constant 2 : index
    %c2_71 = arith.constant 2 : index
    %c0_72 = arith.constant 0 : index
    %c0_73 = arith.constant 0 : index
    %77 = vector.load %arg7[%c2_70, %c2_71, %c0_72, %c0_73] : memref<3x3x8x24xbf16, #tpu.memory_space<vmem>>, vector<1x1x8x24xbf16>
    %78 = vector.shape_cast %77 : vector<1x1x8x24xbf16> to vector<8x24xbf16>
    %cst_74 = arith.constant dense<0.000000e+00> : vector<128x24xf32>
    %79 = tpu.matmul %76, %78, %cst_74 {dimension_numbers = #tpu.dot_dimension_numbers<[1], [0], [0], [1], [0, 0, 1, 1], [], []>} : vector<128x8xbf16>, vector<8x24xbf16>, vector<128x24xf32> -> vector<128x24xf32>
    %c0_75 = arith.constant 0 : index
    %c0_76 = arith.constant 0 : index
    %80 = vector.load %arg10[%c0_75, %c0_76] : memref<128x24xf32, #tpu.memory_space<vmem>>, vector<128x24xf32>
    %81 = arith.addf %80, %79 : vector<128x24xf32>
    %c0_77 = arith.constant 0 : index
    %c0_78 = arith.constant 0 : index
    %82 = vector.load %arg10[%c0_77, %c0_78] : memref<128x24xf32, #tpu.memory_space<vmem>>, vector<128x24xf32>
    tpu.vector_store %arg10[%c0_77, %c0_78], %81 {strides = array<i32>} : memref<128x24xf32, #tpu.memory_space<vmem>>, vector<128x24xf32>,
    %c0_79 = arith.constant 0 : index
    %c0_80 = arith.constant 0 : index
    %83 = vector.load %arg10[%c0_79, %c0_80] : memref<128x24xf32, #tpu.memory_space<vmem>>, vector<128x24xf32>
    %84 = vector.shape_cast %83 : vector<128x24xf32> to vector<8x16x24xf32>
    %c0_81 = arith.constant 0 : index
    %c0_82 = arith.constant 0 : index
    %85 = vector.load %arg8[%c0_81, %c0_82] : memref<1x24xf32, #tpu.memory_space<vmem>>, vector<1x24xf32>
    %86 = vector.shape_cast %85 : vector<1x24xf32> to vector<24xf32>
    %87 = vector.shape_cast %86 : vector<24xf32> to vector<1x1x24xf32>
    %88 = vector.broadcast %87 : vector<1x1x24xf32> to vector<8x16x24xf32>
    %89 = arith.addf %84, %88 : vector<8x16x24xf32>
    %90 = vector.extract_strided_slice %89 {offsets = [0, 0, 0], sizes = [8, 16, 8], strides = [1, 1, 1]} : vector<8x16x24xf32> to vector<8x16x8xf32>
    %91 = vector.extract_strided_slice %89 {offsets = [0, 0, 8], sizes = [8, 16, 8], strides = [1, 1, 1]} : vector<8x16x24xf32> to vector<8x16x8xf32>
    %cst_83 = arith.constant 1.000000e+00 : f32
    %92 = vector.broadcast %cst_83 : f32 to vector<8x16x8xf32>
    %93 = arith.addf %91, %92 : vector<8x16x8xf32>
    %94 = arith.negf %93 : vector<8x16x8xf32>
    %95 = math.exp %94 : vector<8x16x8xf32>
    %cst_84 = arith.constant 1.000000e+00 : f32
    %96 = vector.broadcast %cst_84 : f32 to vector<8x16x8xf32>
    %97 = arith.addf %96, %95 : vector<8x16x8xf32>
    %98 = arith.divf %96, %97 : vector<8x16x8xf32>
    %99 = vector.extract_strided_slice %89 {offsets = [0, 0, 16], sizes = [8, 16, 8], strides = [1, 1, 1]} : vector<8x16x24xf32> to vector<8x16x8xf32>
    %cst_85 = arith.constant 1.000000e+00 : f32
    %100 = vector.broadcast %cst_85 : f32 to vector<8x16x8xf32>
    %101 = arith.addf %99, %100 : vector<8x16x8xf32>
    %102 = arith.negf %101 : vector<8x16x8xf32>
    %103 = math.exp %102 : vector<8x16x8xf32>
    %cst_86 = arith.constant 1.000000e+00 : f32
    %104 = vector.broadcast %cst_86 : f32 to vector<8x16x8xf32>
    %105 = arith.addf %104, %103 : vector<8x16x8xf32>
    %106 = arith.divf %104, %105 : vector<8x16x8xf32>
    %c0_87 = arith.constant 0 : index
    %c0_88 = arith.constant 0 : index
    %c0_89 = arith.constant 0 : index
    %c0_90 = arith.constant 0 : index
    %107 = vector.load %arg4[%c0_87, %c0_88, %c0_89, %c0_90] : memref<1x8x16x8xf32, #tpu.memory_space<vmem>>, vector<1x8x16x8xf32>
    %108 = vector.shape_cast %107 : vector<1x8x16x8xf32> to vector<8x16x8xf32>
    %c0_91 = arith.constant 0 : index
    %c0_92 = arith.constant 0 : index
    %c0_93 = arith.constant 0 : index
    %c0_94 = arith.constant 0 : index
    %109 = vector.load %arg5[%c0_91, %c0_92, %c0_93, %c0_94] : memref<1x8x16x8xf32, #tpu.memory_space<vmem>>, vector<1x8x16x8xf32>
    %110 = vector.shape_cast %109 : vector<1x8x16x8xf32> to vector<8x16x8xf32>
    %c0_95 = arith.constant 0 : index
    %c0_96 = arith.constant 0 : index
    %c0_97 = arith.constant 0 : index
    %c0_98 = arith.constant 0 : index
    %111 = vector.load %arg6[%c0_95, %c0_96, %c0_97, %c0_98] : memref<1x8x16x8xf32, #tpu.memory_space<vmem>>, vector<1x8x16x8xf32>
    %112 = vector.shape_cast %111 : vector<1x8x16x8xf32> to vector<8x16x8xf32>
    %c0_99 = arith.constant 0 : index
    %c0_100 = arith.constant 0 : index
    %113 = memref.load %arg2[%c0_99, %c0_100] : memref<1x1xf32, #tpu.memory_space<smem>>
    %114 = vector.broadcast %113 : f32 to vector<8x16x8xf32>
    %115 = arith.mulf %114, %110 : vector<8x16x8xf32>
    %cst_101 = arith.constant 1.000000e+00 : f32
    %116 = arith.subf %cst_101, %113 : f32
    %117 = vector.broadcast %116 : f32 to vector<8x16x8xf32>
    %118 = arith.mulf %117, %112 : vector<8x16x8xf32>
    %119 = arith.addf %115, %118 : vector<8x16x8xf32>
    %120 = arith.subf %119, %90 : vector<8x16x8xf32>
    %121 = arith.mulf %98, %120 : vector<8x16x8xf32>
    %122 = arith.addf %121, %90 : vector<8x16x8xf32>
    %123 = math.tanh %122 : vector<8x16x8xf32>
    %124 = arith.subf %123, %108 : vector<8x16x8xf32>
    %125 = arith.mulf %106, %124 : vector<8x16x8xf32>
    %126 = arith.addf %125, %108 : vector<8x16x8xf32>
    %c0_102 = arith.constant 0 : index
    %c0_103 = arith.constant 0 : index
    %c0_104 = arith.constant 0 : index
    %c0_105 = arith.constant 0 : index
    %127 = vector.load %arg9[%c0_102, %c0_103, %c0_104, %c0_105] : memref<1x8x16x8xf32, #tpu.memory_space<vmem>>, vector<1x8x16x8xf32>
    %128 = vector.shape_cast %127 : vector<1x8x16x8xf32> to vector<8x16x8xf32>
    %129 = vector.shape_cast %126 : vector<8x16x8xf32> to vector<1x8x16x8xf32>
    tpu.vector_store %arg9[%c0_102, %c0_103, %c0_104, %c0_105], %129 {strides = array<i32>} : memref<1x8x16x8xf32, #tpu.memory_space<vmem>>, vector<1x8x16x8xf32>,
    return
  }
  func.func @transform_0(%arg0: i32, %arg1: i32) -> (i32, i32) {
    %c0_i32 = arith.constant 0 : i32
    %c0_i32_0 = arith.constant 0 : i32
    %c0_i32_1 = arith.constant 0 : i32
    return %c0_i32, %c0_i32_0 : i32, i32
  }
  func.func @transform_1(%arg0: i32, %arg1: i32) -> (i32, i32, i32, i32) {
    %c0_i32 = arith.constant 0 : i32
    %c0_i32_0 = arith.constant 0 : i32
    %c0_i32_1 = arith.constant 0 : i32
    return %arg0, %arg1, %c0_i32, %c0_i32_0 : i32, i32, i32, i32
  }
  func.func @transform_2(%arg0: i32, %arg1: i32) -> (i32, i32, i32, i32) {
    %c0_i32 = arith.constant 0 : i32
    %c0_i32_0 = arith.constant 0 : i32
    %c0_i32_1 = arith.constant 0 : i32
    return %arg0, %arg1, %c0_i32, %c0_i32_0 : i32, i32, i32, i32
  }
  func.func @transform_3(%arg0: i32, %arg1: i32) -> (i32, i32, i32, i32) {
    %c0_i32 = arith.constant 0 : i32
    %c0_i32_0 = arith.constant 0 : i32
    %c0_i32_1 = arith.constant 0 : i32
    return %arg0, %arg1, %c0_i32, %c0_i32_0 : i32, i32, i32, i32
  }
  func.func @transform_4(%arg0: i32, %arg1: i32) -> (i32, i32, i32, i32) {
    %c0_i32 = arith.constant 0 : i32
    %c0_i32_0 = arith.constant 0 : i32
    %c0_i32_1 = arith.constant 0 : i32
    return %arg0, %arg1, %c0_i32, %c0_i32_0 : i32, i32, i32, i32
  }
  func.func @transform_5(%arg0: i32, %arg1: i32) -> (i32, i32, i32, i32) {
    %c0_i32 = arith.constant 0 : i32
    %c0_i32_0 = arith.constant 0 : i32
    %c0_i32_1 = arith.constant 0 : i32
    %c0_i32_2 = arith.constant 0 : i32
    %c0_i32_3 = arith.constant 0 : i32
    return %c0_i32, %c0_i32_0, %c0_i32_1, %c0_i32_2 : i32, i32, i32, i32
  }
  func.func @transform_6(%arg0: i32, %arg1: i32) -> (i32, i32) {
    %c0_i32 = arith.constant 0 : i32
    %c0_i32_0 = arith.constant 0 : i32
    %c0_i32_1 = arith.constant 0 : i32
    return %c0_i32, %c0_i32_0 : i32, i32
  }
  func.func @transform_7(%arg0: i32, %arg1: i32) -> (i32, i32, i32, i32) {
    %c0_i32 = arith.constant 0 : i32
    %c0_i32_0 = arith.constant 0 : i32
    %c0_i32_1 = arith.constant 0 : i32
    return %arg0, %arg1, %c0_i32, %c0_i32_0 : i32, i32, i32, i32
  }
}

</mosaic_0001>

<llo_original>
// kernel: tpu_custom_call.1
$region0: #{tpu_custom_call.1}
  #allocation0 [shape = 'u32[]', space=smem, size = 0x4, offset = 0x4, fixed_abs, tag = 'smem constant byte address 0x4 - core index']
  #allocation1 [shape = 'u32[72,128]{1,0:T(1,128)}', space=vmem, size = 0x9000, scoped, tag = 'internal scratch']
  #allocation2 [shape = 'f32[128,24]{1,0:T(8,128)}', space=vmem, size = 0x10000, scoped, tag = 'scratch operand']
  #allocation3 [shape = 'f32[1,1]{1,0:T(1,128)S(6)}', space=smem, size = 0x200, scoped, tag = 'scoped memory for tpu_custom_call.1']
  %s0 = inlined_call_operand.<no memory space> [shape: f32[1,1], index: 0, kind: input, shape index: {}]
  %s1 = inlined_call_operand.vmem [shape: f32[2,20,24,8], index: 1, kind: input, shape index: {}]
  %s2 = inlined_call_operand.vmem [shape: f32[2,16,16,8], index: 2, kind: input, shape index: {}]
  %s3 = inlined_call_operand.vmem [shape: f32[2,16,16,8], index: 3, kind: input, shape index: {}]
  %s4 = inlined_call_operand.vmem [shape: f32[2,16,16,8], index: 4, kind: input, shape index: {}]
  %s5 = inlined_call_operand.vmem [shape: bf16[3,3,8,24], index: 5, kind: input, shape index: {}]
  %s6 = inlined_call_operand.vmem [shape: f32[1,24], index: 6, kind: input, shape index: {}]
  %s7 = inlined_call_operand.vmem [shape: f32[2,16,16,8], index: 7, kind: output, shape index: {}]
  %s8 = sld [smem:[#allocation0]]
  $region61: #{tpu_custom_call.1} parent=0
    _
  %s10 = ssub.s32 1, %s8
  %s11 = scalar_select 0, %s10, %s8
  %12 = sst [smem:[#allocation3]] %s0
  loop: start=0, step=1, limit=6
  $region2: #{tpu_custom_call.1} parent=0 // loop_pre_header
    _
  $region3: #{tpu_custom_call.1} parent=0 // loop_header
    %s14 = sphi 0, %s18
    %p15 = scmp.ge.s32.totalorder %s14, 6
    %s21 = sphi 0, %s33
    %s22 = sphi 0, %s29
    %s23 = sphi 0, %s21
    %s24 = sphi 0, %s22
    %s25 = sphi 0, %s23
    %s26 = sphi 0, %s24
    %s34 = sphi 0, %s34
    %s36 = sphi 0, %s34
    %s37 = sphi 0, %s36
    %s51 = sphi 0, %s37
    %s59 = sphi 0, %s61
    %s62 = sphi 0, %s59
    %s63 = sphi 0, %s62
    %s79 = sphi 0, %s63
    %s87 = sphi 0, %s89
    %s90 = sphi 0, %s87
    %s91 = sphi 0, %s90
    %s107 = sphi 0, %s91
    %s115 = sphi 0, %s117
    %s118 = sphi 0, %s115
    %s119 = sphi 0, %s118
    %s135 = sphi 0, %s119
    %s143 = sphi 0, %s145
    %s146 = sphi 0, %s143
    %s147 = sphi 0, %s146
    %s163 = sphi 0, %s147
    %s167 = sphi 0, %s167
    %s169 = sphi 0, %s167
    %s170 = sphi 0, %s169
    %s184 = sphi 0, %s170
    %s188 = sphi 0, %s188
    %s190 = sphi 0, %s188
    %s191 = sphi 0, %s190
    %s205 = sphi 0, %s191
    %s213 = sphi 0, %s215
    %s216 = sphi 0, %s213
    %s217 = sphi 0, %s216
    %s233 = sphi 0, %s217
  $region4: #{tpu_custom_call.1} parent=0 // loop_header_branch
    %17 = sbr.rel (%p15) target = $region8
  $region5: #{tpu_custom_call.1} parent=0 // loop_body
    %s19 = ssub.s32 %s14, 1
    %s20 = ssub.s32 %s14, 2
    %s27 = sadd.s32 1, %s22
    %p28 = scmp.ge.s32.totalorder %s27, 2
    %s29 = scalar_select %p28, 0, %s27
    %s30 = sadd.s32 1, %s21
    %s31 = scalar_select %p28, %s30, %s21
    %p32 = scmp.ge.s32.totalorder %s31, 2
    %s33 = scalar_select %p32, 0, %s31
    %s35 = sadd.s32 %s34, 1
    %p38 = scmp.eq.s32.totalorder %s14, 3
    %p39 = scmp.ne.s32.totalorder %s34, %s36
    %p40 = scmp.eq.s32.totalorder %s14, 0
    %p41 = por %p39, %p40
    %p42 = scmp.ne.s32.totalorder %s34, %s36
    %p43 = scmp.eq.s32.totalorder %s19, 3
    %p44 = por %p42, %p43
    %p45 = scmp.ne.s32.totalorder %s36, %s37
    %p46 = scmp.eq.s32.totalorder %s19, 0
    %p47 = por %p45, %p46
    %p48 = scmp.ne.s32.totalorder %s36, %s37
    %p49 = scmp.eq.s32.totalorder %s20, 3
    %p50 = por %p48, %p49
    %p52 = scmp.ne.s32.totalorder %s37, %s51
    %p53 = scmp.eq.s32.totalorder %s20, 0
    %p54 = por %p52, %p53
    %s55 = ssub.s32 %s21, %s33
    %s56 = ssub.s32 %s22, %s29
    %s57 = sor.u32 %s55, %s56
    %p58 = scmp.eq.s32.totalorder %s57, 0
    %s60 = sadd.s32 %s59, 1
    %s61 = scalar_select %p58, %s59, %s60
    %p64 = pneg %p58
    %p65 = scmp.eq.s32.totalorder %s14, 3
    %p66 = por %p64, %p65
    %p67 = scmp.ne.s32.totalorder %s59, %s62
    %p68 = scmp.eq.s32.totalorder %s14, 0
    %p69 = por %p67, %p68
    %p70 = scmp.ne.s32.totalorder %s59, %s62
    %p71 = scmp.eq.s32.totalorder %s19, 3
    %p72 = por %p70, %p71
    %p73 = scmp.ne.s32.totalorder %s62, %s63
    %p74 = scmp.eq.s32.totalorder %s19, 0
    %p75 = por %p73, %p74
    %p76 = scmp.ne.s32.totalorder %s62, %s63
    %p77 = scmp.eq.s32.totalorder %s20, 3
    %p78 = por %p76, %p77
    %p80 = scmp.ne.s32.totalorder %s63, %s79
    %p81 = scmp.eq.s32.totalorder %s20, 0
    %p82 = por %p80, %p81
    %s83 = ssub.s32 %s21, %s33
    %s84 = ssub.s32 %s22, %s29
    %s85 = sor.u32 %s83, %s84
    %p86 = scmp.eq.s32.totalorder %s85, 0
    %s88 = sadd.s32 %s87, 1
    %s89 = scalar_select %p86, %s87, %s88
    %p92 = pneg %p86
    %p93 = scmp.eq.s32.totalorder %s14, 3
    %p94 = por %p92, %p93
    %p95 = scmp.ne.s32.totalorder %s87, %s90
    %p96 = scmp.eq.s32.totalorder %s14, 0
    %p97 = por %p95, %p96
    %p98 = scmp.ne.s32.totalorder %s87, %s90
    %p99 = scmp.eq.s32.totalorder %s19, 3
    %p100 = por %p98, %p99
    %p101 = scmp.ne.s32.totalorder %s90, %s91
    %p102 = scmp.eq.s32.totalorder %s19, 0
    %p103 = por %p101, %p102
    %p104 = scmp.ne.s32.totalorder %s90, %s91
    %p105 = scmp.eq.s32.totalorder %s20, 3
    %p106 = por %p104, %p105
    %p108 = scmp.ne.s32.totalorder %s91, %s107
    %p109 = scmp.eq.s32.totalorder %s20, 0
    %p110 = por %p108, %p109
    %s111 = ssub.s32 %s21, %s33
    %s112 = ssub.s32 %s22, %s29
    %s113 = sor.u32 %s111, %s112
    %p114 = scmp.eq.s32.totalorder %s113, 0
    %s116 = sadd.s32 %s115, 1
    %s117 = scalar_select %p114, %s115, %s116
    %p120 = pneg %p114
    %p121 = scmp.eq.s32.totalorder %s14, 3
    %p122 = por %p120, %p121
    %p123 = scmp.ne.s32.totalorder %s115, %s118
    %p124 = scmp.eq.s32.totalorder %s14, 0
    %p125 = por %p123, %p124
    %p126 = scmp.ne.s32.totalorder %s115, %s118
    %p127 = scmp.eq.s32.totalorder %s19, 3
    %p128 = por %p126, %p127
    %p129 = scmp.ne.s32.totalorder %s118, %s119
    %p130 = scmp.eq.s32.totalorder %s19, 0
    %p131 = por %p129, %p130
    %p132 = scmp.ne.s32.totalorder %s118, %s119
    %p133 = scmp.eq.s32.totalorder %s20, 3
    %p134 = por %p132, %p133
    %p136 = scmp.ne.s32.totalorder %s119, %s135
    %p137 = scmp.eq.s32.totalorder %s20, 0
    %p138 = por %p136, %p137
    %s139 = ssub.s32 %s21, %s33
    %s140 = ssub.s32 %s22, %s29
    %s141 = sor.u32 %s139, %s140
    %p142 = scmp.eq.s32.totalorder %s141, 0
    %s144 = sadd.s32 %s143, 1
    %s145 = scalar_select %p142, %s143, %s144
    %p148 = pneg %p142
    %p149 = scmp.eq.s32.totalorder %s14, 3
    %p150 = por %p148, %p149
    %p151 = scmp.ne.s32.totalorder %s143, %s146
    %p152 = scmp.eq.s32.totalorder %s14, 0
    %p153 = por %p151, %p152
    %p154 = scmp.ne.s32.totalorder %s143, %s146
    %p155 = scmp.eq.s32.totalorder %s19, 3
    %p156 = por %p154, %p155
    %p157 = scmp.ne.s32.totalorder %s146, %s147
    %p158 = scmp.eq.s32.totalorder %s19, 0
    %p159 = por %p157, %p158
    %p160 = scmp.ne.s32.totalorder %s146, %s147
    %p161 = scmp.eq.s32.totalorder %s20, 3
    %p162 = por %p160, %p161
    %p164 = scmp.ne.s32.totalorder %s147, %s163
    %p165 = scmp.eq.s32.totalorder %s20, 0
    %p166 = por %p164, %p165
    %s168 = sadd.s32 %s167, 1
    %p171 = scmp.eq.s32.totalorder %s14, 3
    %p172 = scmp.ne.s32.totalorder %s167, %s169
    %p173 = scmp.eq.s32.totalorder %s14, 0
    %p174 = por %p172, %p173
    %p175 = scmp.ne.s32.totalorder %s167, %s169
    %p176 = scmp.eq.s32.totalorder %s19, 3
    %p177 = por %p175, %p176
    %p178 = scmp.ne.s32.totalorder %s169, %s170
    %p179 = scmp.eq.s32.totalorder %s19, 0
    %p180 = por %p178, %p179
    %p181 = scmp.ne.s32.totalorder %s169, %s170
    %p182 = scmp.eq.s32.totalorder %s20, 3
    %p183 = por %p181, %p182
    %p185 = scmp.ne.s32.totalorder %s170, %s184
    %p186 = scmp.eq.s32.totalorder %s20, 0
    %p187 = por %p185, %p186
    %s189 = sadd.s32 %s188, 1
    %p192 = scmp.eq.s32.totalorder %s14, 3
    %p193 = scmp.ne.s32.totalorder %s188, %s190
    %p194 = scmp.eq.s32.totalorder %s14, 0
    %p195 = por %p193, %p194
    %p196 = scmp.ne.s32.totalorder %s188, %s190
    %p197 = scmp.eq.s32.totalorder %s19, 3
    %p198 = por %p196, %p197
    %p199 = scmp.ne.s32.totalorder %s190, %s191
    %p200 = scmp.eq.s32.totalorder %s19, 0
    %p201 = por %p199, %p200
    %p202 = scmp.ne.s32.totalorder %s190, %s191
    %p203 = scmp.eq.s32.totalorder %s20, 3
    %p204 = por %p202, %p203
    %p206 = scmp.ne.s32.totalorder %s191, %s205
    %p207 = scmp.eq.s32.totalorder %s20, 0
    %p208 = por %p206, %p207
    %s209 = ssub.s32 %s21, %s33
    %s210 = ssub.s32 %s22, %s29
    %s211 = sor.u32 %s209, %s210
    %p212 = scmp.eq.s32.totalorder %s211, 0
    %s214 = sadd.s32 %s213, 1
    %s215 = scalar_select %p212, %s213, %s214
    %p218 = pneg %p212
    %p219 = scmp.eq.s32.totalorder %s14, 3
    %p220 = por %p218, %p219
    %p221 = scmp.ne.s32.totalorder %s213, %s216
    %p222 = scmp.eq.s32.totalorder %s14, 0
    %p223 = por %p221, %p222
    %p224 = scmp.ne.s32.totalorder %s213, %s216
    %p225 = scmp.eq.s32.totalorder %s19, 3
    %p226 = por %p224, %p225
    %p227 = scmp.ne.s32.totalorder %s216, %s217
    %p228 = scmp.eq.s32.totalorder %s19, 0
    %p229 = por %p227, %p228
    %p230 = scmp.ne.s32.totalorder %s216, %s217
    %p231 = scmp.eq.s32.totalorder %s20, 3
    %p232 = por %p230, %p231
    %p234 = scmp.ne.s32.totalorder %s217, %s233
    %p235 = scmp.eq.s32.totalorder %s20, 0
    %p236 = por %p234, %p235
    %p237 = scmp.le.s32.totalorder 1, %s14
    %p238 = scmp.lt.s32.totalorder %s14, 5
    %p239 = pnand %p237, %p238
    %p240 = pneg %p239
    // Predicated region
    $region9: #{tpu_custom_call.1} parent=5 // pred_check
      _
    $region10: #{tpu_custom_call.1} parent=5 // pred_check_branch
      %242 = sbr.rel (%p239) target = $region12
    $region11: #{tpu_custom_call.1} parent=5 // pred_region
      %s243 = ssub.s32 %s14, 1
      // Predicated region
      $region13: #{tpu_custom_call.1} parent=11 // pred_check
        %p244 = pneg %p47
      $region14: #{tpu_custom_call.1} parent=11 // pred_check_branch
        %246 = sbr.rel (%p244) target = $region16
      $region15: #{tpu_custom_call.1} parent=11 // pred_region
        _
      $region16: #{tpu_custom_call.1} parent=11 // pred_fallthru
        _
      // Predicated region
      $region17: #{tpu_custom_call.1} parent=11 // pred_check
        %p247 = pneg %p180
      $region18: #{tpu_custom_call.1} parent=11 // pred_check_branch
        %249 = sbr.rel (%p247) target = $region20
      $region19: #{tpu_custom_call.1} parent=11 // pred_region
        _
      $region20: #{tpu_custom_call.1} parent=11 // pred_fallthru
        _
      // Predicated region
      $region21: #{tpu_custom_call.1} parent=11 // pred_check
        %p250 = pneg %p201
      $region22: #{tpu_custom_call.1} parent=11 // pred_check_branch
        %252 = sbr.rel (%p250) target = $region24
      $region23: #{tpu_custom_call.1} parent=11 // pred_region
        _
      $region24: #{tpu_custom_call.1} parent=11 // pred_fallthru
        _
    $region12: #{tpu_custom_call.1} parent=5 // pred_fallthru
      _
    %p253 = scmp.lt.s32.totalorder %s14, 4
    // Predicated region
    $region25: #{tpu_custom_call.1} parent=5 // pred_check
      %p254 = pneg %p253
    $region26: #{tpu_custom_call.1} parent=5 // pred_check_branch
      %256 = sbr.rel (%p254) target = $region28
    $region27: #{tpu_custom_call.1} parent=5 // pred_region
      // Predicated region
      $region29: #{tpu_custom_call.1} parent=27 // pred_check
        %p257 = pneg %p69
      $region30: #{tpu_custom_call.1} parent=27 // pred_check_branch
        %259 = sbr.rel (%p257) target = $region32
      $region31: #{tpu_custom_call.1} parent=27 // pred_region
        %s260 = smul.u32 10, %s22
        %p261 = scmp.lt.s32.totalorder %s21, 1
        %s262 = scalar_select %p261, %s21, 1
        %p263 = scmp.lt.s32.totalorder %s260, 19
        %s264 = scalar_select %p263, %s260, 19
        %s265 = smul.addr %s264, 3
        %s266 = smul.addr %s262, 60
        %s267 = sadd.s32 %s265, %s266
        %s268 = smul.addr %s267, 8
        %s269 = scalar_lea.vmem %s1, %s268
        %s270 = smul.u32 10, %s22
      $region32: #{tpu_custom_call.1} parent=27 // pred_fallthru
        _
      // Predicated region
      $region33: #{tpu_custom_call.1} parent=27 // pred_check
        %p271 = pneg %p97
      $region34: #{tpu_custom_call.1} parent=27 // pred_check_branch
        %273 = sbr.rel (%p271) target = $region36
      $region35: #{tpu_custom_call.1} parent=27 // pred_region
        %s274 = smul.u32 8, %s22
        %p275 = scmp.lt.s32.totalorder %s21, 1
        %s276 = scalar_select %p275, %s21, 1
        %p277 = scmp.lt.s32.totalorder %s274, 15
        %s278 = scalar_select %p277, %s274, 15
        %s279 = smul.addr %s278, 2
        %s280 = smul.addr %s276, 32
        %s281 = sadd.s32 %s279, %s280
        %s282 = smul.addr %s281, 8
        %s283 = scalar_lea.vmem %s2, %s282
        %s284 = smul.u32 8, %s22
      $region36: #{tpu_custom_call.1} parent=27 // pred_fallthru
        _
      // Predicated region
      $region37: #{tpu_custom_call.1} parent=27 // pred_check
        %p285 = pneg %p125
      $region38: #{tpu_custom_call.1} parent=27 // pred_check_branch
        %287 = sbr.rel (%p285) target = $region40
      $region39: #{tpu_custom_call.1} parent=27 // pred_region
        %s288 = smul.u32 8, %s22
        %p289 = scmp.lt.s32.totalorder %s21, 1
        %s290 = scalar_select %p289, %s21, 1
        %p291 = scmp.lt.s32.totalorder %s288, 15
        %s292 = scalar_select %p291, %s288, 15
        %s293 = smul.addr %s292, 2
        %s294 = smul.addr %s290, 32
        %s295 = sadd.s32 %s293, %s294
        %s296 = smul.addr %s295, 8
        %s297 = scalar_lea.vmem %s3, %s296
        %s298 = smul.u32 8, %s22
      $region40: #{tpu_custom_call.1} parent=27 // pred_fallthru
        _
      // Predicated region
      $region41: #{tpu_custom_call.1} parent=27 // pred_check
        %p299 = pneg %p153
      $region42: #{tpu_custom_call.1} parent=27 // pred_check_branch
        %301 = sbr.rel (%p299) target = $region44
      $region43: #{tpu_custom_call.1} parent=27 // pred_region
        %s302 = smul.u32 8, %s22
        %p303 = scmp.lt.s32.totalorder %s21, 1
        %s304 = scalar_select %p303, %s21, 1
        %p305 = scmp.lt.s32.totalorder %s302, 15
        %s306 = scalar_select %p305, %s302, 15
        %s307 = smul.addr %s306, 2
        %s308 = smul.addr %s304, 32
        %s309 = sadd.s32 %s307, %s308
        %s310 = smul.addr %s309, 8
        %s311 = scalar_lea.vmem %s4, %s310
        %s312 = smul.u32 8, %s22
      $region44: #{tpu_custom_call.1} parent=27 // pred_fallthru
        _
    $region28: #{tpu_custom_call.1} parent=5 // pred_fallthru
      _
    %p313 = scmp.le.s32.totalorder 1, %s14
    %p314 = scmp.lt.s32.totalorder %s14, 5
    %p315 = pnand %p313, %p314
    %p316 = pneg %p315
    // Predicated region
    $region45: #{tpu_custom_call.1} parent=5 // pred_check
      _
    $region46: #{tpu_custom_call.1} parent=5 // pred_check_branch
      %318 = sbr.rel (%p315) target = $region48
    $region47: #{tpu_custom_call.1} parent=5 // pred_region
      %s319 = ssub.s32 %s14, 1
      %p320 = pneg %p47
      %p321 = pneg %p44
      %s322 = smul.u32 10, %s24
      %p323 = scmp.lt.s32.totalorder %s23, 1
      %s324 = scalar_select %p323, %s23, 1
      %p325 = scmp.lt.s32.totalorder %s322, 19
      %s326 = scalar_select %p325, %s322, 19
      %s327 = smul.addr %s326, 3
      %s328 = smul.addr %s324, 60
      %s329 = sadd.s32 %s327, %s328
      %s330 = smul.addr %s329, 8
      %s331 = scalar_lea.vmem %s1, %s330
      %p332 = pneg %p75
      %p333 = pneg %p72
      %s334 = smul.u32 8, %s24
      %p335 = scmp.lt.s32.totalorder %s23, 1
      %s336 = scalar_select %p335, %s23, 1
      %p337 = scmp.lt.s32.totalorder %s334, 15
      %s338 = scalar_select %p337, %s334, 15
      %s339 = smul.addr %s338, 2
      %s340 = smul.addr %s336, 32
      %s341 = sadd.s32 %s339, %s340
      %s342 = smul.addr %s341, 8
      %s343 = scalar_lea.vmem %s2, %s342
      %p344 = pneg %p103
      %p345 = pneg %p100
      %s346 = smul.u32 8, %s24
      %p347 = scmp.lt.s32.totalorder %s23, 1
      %s348 = scalar_select %p347, %s23, 1
      %p349 = scmp.lt.s32.totalorder %s346, 15
      %s350 = scalar_select %p349, %s346, 15
      %s351 = smul.addr %s350, 2
      %s352 = smul.addr %s348, 32
      %s353 = sadd.s32 %s351, %s352
      %s354 = smul.addr %s353, 8
      %s355 = scalar_lea.vmem %s3, %s354
      %p356 = pneg %p131
      %p357 = pneg %p128
      %s358 = smul.u32 8, %s24
      %p359 = scmp.lt.s32.totalorder %s23, 1
      %s360 = scalar_select %p359, %s23, 1
      %p361 = scmp.lt.s32.totalorder %s358, 15
      %s362 = scalar_select %p361, %s358, 15
      %s363 = smul.addr %s362, 2
      %s364 = smul.addr %s360, 32
      %s365 = sadd.s32 %s363, %s364
      %s366 = smul.addr %s365, 8
      %s367 = scalar_lea.vmem %s4, %s366
      %p368 = pneg %p159
      %p369 = pneg %p156
      %p370 = pneg %p180
      %p371 = pneg %p177
      %p372 = pneg %p201
      %p373 = pneg %p198
      %p374 = pneg %p229
      %p375 = pneg %p226
      %s376 = smul.u32 8, %s24
      %p377 = scmp.lt.s32.totalorder %s23, 1
      %s378 = scalar_select %p377, %s23, 1
      %p379 = scmp.lt.s32.totalorder %s376, 15
      %s380 = scalar_select %p379, %s376, 15
      %s381 = smul.addr %s380, 2
      %s382 = smul.addr %s378, 32
      %s383 = sadd.s32 %s381, %s382
      %s384 = smul.addr %s383, 8
      %s385 = scalar_lea.vmem %s7, %s384
      %s386 = smul.u32 10, %s24
      %p387 = scmp.lt.s32.totalorder %s23, 1
      %s388 = scalar_select %p387, %s23, 1
      %p389 = scmp.lt.s32.totalorder %s386, 19
      %s390 = scalar_select %p389, %s386, 19
      %s391 = smul.addr %s390, 3
      %s392 = smul.addr %s388, 60
      %s393 = sadd.s32 %s391, %s392
      %s394 = smul.addr %s393, 8
      %s395 = scalar_lea.vmem %s1, %s394
      %s396 = smul.u32 10, %s24
      %s397 = smul.u32 8, %s24
      %p398 = scmp.lt.s32.totalorder %s23, 1
      %s399 = scalar_select %p398, %s23, 1
      %p400 = scmp.lt.s32.totalorder %s397, 15
      %s401 = scalar_select %p400, %s397, 15
      %s402 = smul.addr %s401, 2
      %s403 = smul.addr %s399, 32
      %s404 = sadd.s32 %s402, %s403
      %s405 = smul.addr %s404, 8
      %s406 = scalar_lea.vmem %s2, %s405
      %s407 = smul.u32 8, %s24
      %s408 = smul.u32 8, %s24
      %p409 = scmp.lt.s32.totalorder %s23, 1
      %s410 = scalar_select %p409, %s23, 1
      %p411 = scmp.lt.s32.totalorder %s408, 15
      %s412 = scalar_select %p411, %s408, 15
      %s413 = smul.addr %s412, 2
      %s414 = smul.addr %s410, 32
      %s415 = sadd.s32 %s413, %s414
      %s416 = smul.addr %s415, 8
      %s417 = scalar_lea.vmem %s3, %s416
      %s418 = smul.u32 8, %s24
      %s419 = smul.u32 8, %s24
      %p420 = scmp.lt.s32.totalorder %s23, 1
      %s421 = scalar_select %p420, %s23, 1
      %p422 = scmp.lt.s32.totalorder %s419, 15
      %s423 = scalar_select %p422, %s419, 15
      %s424 = smul.addr %s423, 2
      %s425 = smul.addr %s421, 32
      %s426 = sadd.s32 %s424, %s425
      %s427 = smul.addr %s426, 8
      %s428 = scalar_lea.vmem %s4, %s427
      %s429 = smul.u32 8, %s24
      %s430 = smul.u32 8, %s24
      %p431 = scmp.lt.s32.totalorder %s23, 1
      %s432 = scalar_select %p431, %s23, 1
      %p433 = scmp.lt.s32.totalorder %s430, 15
      %s434 = scalar_select %p433, %s430, 15
      %s435 = smul.addr %s434, 2
      %s436 = smul.addr %s432, 32
      %s437 = sadd.s32 %s435, %s436
      %s438 = smul.addr %s437, 8
      %s439 = scalar_lea.vmem %s7, %s438
      %s440 = smul.u32 8, %s24
      %v442 = vld [vmem:[%s395] sm:$0xff]
      %v443 = vld [vmem:[%s395 + $0x8] sm:$0xff]
      %v444 = vld [vmem:[%s395 + $0x10] sm:$0xff]
      %v445 = vld [vmem:[%s395 + $0x18] sm:$0xff]
      %v446 = vld [vmem:[%s395 + $0x20] sm:$0xff]
      %v447 = vld [vmem:[%s395 + $0x28] sm:$0xff]
      %v448 = vld [vmem:[%s395 + $0x30] sm:$0xff]
      %v449 = vld [vmem:[%s395 + $0x38] sm:$0xff]
      %v450 = vld [vmem:[%s395 + $0x40] sm:$0xff]
      %v451 = vld [vmem:[%s395 + $0x48] sm:$0xff]
      %v452 = vld [vmem:[%s395 + $0x50] sm:$0xff]
      %v453 = vld [vmem:[%s395 + $0x58] sm:$0xff]
      %v454 = vld [vmem:[%s395 + $0x60] sm:$0xff]
      %v455 = vld [vmem:[%s395 + $0x68] sm:$0xff]
      %v456 = vld [vmem:[%s395 + $0x70] sm:$0xff]
      %v457 = vld [vmem:[%s395 + $0x78] sm:$0xff]
      %v458 = vld [vmem:[%s395 + $0x80] sm:$0xff]
      %v459 = vld [vmem:[%s395 + $0x88] sm:$0xff]
      %v460 = vld [vmem:[%s395 + $0x90] sm:$0xff]
      %v461 = vld [vmem:[%s395 + $0x98] sm:$0xff]
      %v462 = vld [vmem:[%s395 + $0xa0] sm:$0xff]
      %v463 = vld [vmem:[%s395 + $0xa8] sm:$0xff]
      %v464 = vld [vmem:[%s395 + $0xb0] sm:$0xff]
      %v465 = vld [vmem:[%s395 + $0xb8] sm:$0xff]
      %v466 = vld [vmem:[%s395 + $0xc0] sm:$0xff]
      %v467 = vld [vmem:[%s395 + $0xc8] sm:$0xff]
      %v468 = vld [vmem:[%s395 + $0xd0] sm:$0xff]
      %v469 = vld [vmem:[%s395 + $0xd8] sm:$0xff]
      %v470 = vld [vmem:[%s395 + $0xe0] sm:$0xff]
      %v471 = vld [vmem:[%s395 + $0xe8] sm:$0xff]
      %v472 = vpack.c.bf16 %v443, %v442
      %v473 = vpack.c.bf16 %v446, %v445
      %v474 = vpack.c.bf16 %v449, %v448
      %v475 = vpack.c.bf16 %v452, %v451
      %v476 = vpack.c.bf16 %v455, %v454
      %v477 = vpack.c.bf16 %v458, %v457
      %v478 = vpack.c.bf16 %v461, %v460
      %v479 = vpack.c.bf16 %v464, %v463
      %v480 = vld [vmem:[%s5] sm:$0xf]
      %vm481 = vcmask 64512
      %v483 = vsel %vm481, %v472, 0
      %v486 = vsel %vm481, %v473, 0
      %v489 = vsel %vm481, %v474, 0
      %v492 = vsel %vm481, %v475, 0
      %v495 = vsel %vm481, %v476, 0
      %v498 = vsel %vm481, %v477, 0
      %v501 = vsel %vm481, %v478, 0
      %v504 = vsel %vm481, %v479, 0
      %vm506 = vcmask 1043456
      %v508 = vsel %vm506, %v480, 0
      %510 = vmatpush.bf16.msra.mxu0 0
      %511 = vmatpush.bf16.msra.mxu0 0
      %512 = vmatpush.bf16.msra.mxu0 0
      %513 = vmatpush.bf16.msra.mxu0 0
      %514 = vmatpush.bf16.msra.mxu0 0
      %515 = vmatpush.bf16.msra.mxu0 0
      %516 = vmatpush.bf16.msra.mxu0 0
      %517 = vmatpush.bf16.msra.mxu0 %v508
      %518 = vmatmul.bf16.gmra.mxu0 %v483
      %v519 = vpop.f32.mrf.mxu0
      %v520 = vadd.f32 0.0, %v519
      %v521 = vpop.f32.mrf.mxu0
      %v522 = vadd.f32 0.0, %v521
      %523 = vmatmul.bf16.gmra.mxu0 %v486
      %v524 = vpop.f32.mrf.mxu0
      %v525 = vadd.f32 0.0, %v524
      %v526 = vpop.f32.mrf.mxu0
      %v527 = vadd.f32 0.0, %v526
      %528 = vmatmul.bf16.gmra.mxu0 %v489
      %v529 = vpop.f32.mrf.mxu0
      %v530 = vadd.f32 0.0, %v529
      %v531 = vpop.f32.mrf.mxu0
      %v532 = vadd.f32 0.0, %v531
      %533 = vmatmul.bf16.gmra.mxu0 %v492
      %v534 = vpop.f32.mrf.mxu0
      %v535 = vadd.f32 0.0, %v534
      %v536 = vpop.f32.mrf.mxu0
      %v537 = vadd.f32 0.0, %v536
      %538 = vmatmul.bf16.gmra.mxu0 %v495
      %v539 = vpop.f32.mrf.mxu0
      %v540 = vadd.f32 0.0, %v539
      %v541 = vpop.f32.mrf.mxu0
      %v542 = vadd.f32 0.0, %v541
      %543 = vmatmul.bf16.gmra.mxu0 %v498
      %v544 = vpop.f32.mrf.mxu0
      %v545 = vadd.f32 0.0, %v544
      %v546 = vpop.f32.mrf.mxu0
      %v547 = vadd.f32 0.0, %v546
      %548 = vmatmul.bf16.gmra.mxu0 %v501
      %v549 = vpop.f32.mrf.mxu0
      %v550 = vadd.f32 0.0, %v549
      %v551 = vpop.f32.mrf.mxu0
      %v552 = vadd.f32 0.0, %v551
      %553 = vmatmul.bf16.gmra.mxu0 %v504
      %v554 = vpop.f32.mrf.mxu0
      %v555 = vadd.f32 0.0, %v554
      %v556 = vpop.f32.mrf.mxu0
      %v557 = vadd.f32 0.0, %v556
      %558 = vdwg.mxu0
      %vm559 = vcmask 195584
      %560 = vst.msk [vmem:[#allocation2] sm:$0xff] %vm559, %v520
      %561 = vst.msk [vmem:[#allocation2 + $0x8] sm:$0xff] %vm559, %v522
      %562 = vst.msk [vmem:[#allocation2 + $0x10] sm:$0xff] %vm559, %v525
      %563 = vst.msk [vmem:[#allocation2 + $0x18] sm:$0xff] %vm559, %v527
      %564 = vst.msk [vmem:[#allocation2 + $0x20] sm:$0xff] %vm559, %v530
      %565 = vst.msk [vmem:[#allocation2 + $0x28] sm:$0xff] %vm559, %v532
      %566 = vst.msk [vmem:[#allocation2 + $0x30] sm:$0xff] %vm559, %v535
      %567 = vst.msk [vmem:[#allocation2 + $0x38] sm:$0xff] %vm559, %v537
      %568 = vst.msk [vmem:[#allocation2 + $0x40] sm:$0xff] %vm559, %v540
      %569 = vst.msk [vmem:[#allocation2 + $0x48] sm:$0xff] %vm559, %v542
      %570 = vst.msk [vmem:[#allocation2 + $0x50] sm:$0xff] %vm559, %v545
      %571 = vst.msk [vmem:[#allocation2 + $0x58] sm:$0xff] %vm559, %v547
      %572 = vst.msk [vmem:[#allocation2 + $0x60] sm:$0xff] %vm559, %v550
      %573 = vst.msk [vmem:[#allocation2 + $0x68] sm:$0xff] %vm559, %v552
      %574 = vst.msk [vmem:[#allocation2 + $0x70] sm:$0xff] %vm559, %v555
      %575 = vst.msk [vmem:[#allocation2 + $0x78] sm:$0xff] %vm559, %v557
      %v576 = vpack.c.bf16 %v467, %v466
      %s577 = scalar_lea.vmem %s5, 12
      %v578 = vld [vmem:[%s577] sm:$0xf]
      %v580 = vsel %vm481, %v576, 0
      %v583 = vsel %vm506, %v578, 0
      %585 = vmatpush.bf16.msra.mxu0 0
      %586 = vmatpush.bf16.msra.mxu0 0
      %587 = vmatpush.bf16.msra.mxu0 0
      %588 = vmatpush.bf16.msra.mxu0 0
      %589 = vmatpush.bf16.msra.mxu0 0
      %590 = vmatpush.bf16.msra.mxu0 0
      %591 = vmatpush.bf16.msra.mxu0 0
      %592 = vmatpush.bf16.msra.mxu0 %v583
      %593 = vmatmul.bf16.gmra.mxu0 %v486
      %v594 = vpop.f32.mrf.mxu0
      %v595 = vadd.f32 0.0, %v594
      %v596 = vpop.f32.mrf.mxu0
      %v597 = vadd.f32 0.0, %v596
      %598 = vmatmul.bf16.gmra.mxu0 %v489
      %v599 = vpop.f32.mrf.mxu0
      %v600 = vadd.f32 0.0, %v599
      %v601 = vpop.f32.mrf.mxu0
      %v602 = vadd.f32 0.0, %v601
      %603 = vmatmul.bf16.gmra.mxu0 %v492
      %v604 = vpop.f32.mrf.mxu0
      %v605 = vadd.f32 0.0, %v604
      %v606 = vpop.f32.mrf.mxu0
      %v607 = vadd.f32 0.0, %v606
      %608 = vmatmul.bf16.gmra.mxu0 %v495
      %v609 = vpop.f32.mrf.mxu0
      %v610 = vadd.f32 0.0, %v609
      %v611 = vpop.f32.mrf.mxu0
      %v612 = vadd.f32 0.0, %v611
      %613 = vmatmul.bf16.gmra.mxu0 %v498
      %v614 = vpop.f32.mrf.mxu0
      %v615 = vadd.f32 0.0, %v614
      %v616 = vpop.f32.mrf.mxu0
      %v617 = vadd.f32 0.0, %v616
      %618 = vmatmul.bf16.gmra.mxu0 %v501
      %v619 = vpop.f32.mrf.mxu0
      %v620 = vadd.f32 0.0, %v619
      %v621 = vpop.f32.mrf.mxu0
      %v622 = vadd.f32 0.0, %v621
      %623 = vmatmul.bf16.gmra.mxu0 %v504
      %v624 = vpop.f32.mrf.mxu0
      %v625 = vadd.f32 0.0, %v624
      %v626 = vpop.f32.mrf.mxu0
      %v627 = vadd.f32 0.0, %v626
      %628 = vmatmul.bf16.gmra.mxu0 %v580
      %v629 = vpop.f32.mrf.mxu0
      %v630 = vadd.f32 0.0, %v629
      %v631 = vpop.f32.mrf.mxu0
      %v632 = vadd.f32 0.0, %v631
      %633 = vdwg.mxu0
      %v634 = vld [vmem:[#allocation2] sm:$0xff]
      %v635 = vld [vmem:[#allocation2 + $0x8] sm:$0xff]
      %v636 = vld [vmem:[#allocation2 + $0x10] sm:$0xff]
      %v637 = vld [vmem:[#allocation2 + $0x18] sm:$0xff]
      %v638 = vld [vmem:[#allocation2 + $0x20] sm:$0xff]
      %v639 = vld [vmem:[#allocation2 + $0x28] sm:$0xff]
      %v640 = vld [vmem:[#allocation2 + $0x30] sm:$0xff]
      %v641 = vld [vmem:[#allocation2 + $0x38] sm:$0xff]
      %v642 = vld [vmem:[#allocation2 + $0x40] sm:$0xff]
      %v643 = vld [vmem:[#allocation2 + $0x48] sm:$0xff]
      %v644 = vld [vmem:[#allocation2 + $0x50] sm:$0xff]
      %v645 = vld [vmem:[#allocation2 + $0x58] sm:$0xff]
      %v646 = vld [vmem:[#allocation2 + $0x60] sm:$0xff]
      %v647 = vld [vmem:[#allocation2 + $0x68] sm:$0xff]
      %v648 = vld [vmem:[#allocation2 + $0x70] sm:$0xff]
      %v649 = vld [vmem:[#allocation2 + $0x78] sm:$0xff]
      %v650 = vadd.f32 %v634, %v595
      %v651 = vadd.f32 %v635, %v597
      %v652 = vadd.f32 %v636, %v600
      %v653 = vadd.f32 %v637, %v602
      %v654 = vadd.f32 %v638, %v605
      %v655 = vadd.f32 %v639, %v607
      %v656 = vadd.f32 %v640, %v610
      %v657 = vadd.f32 %v641, %v612
      %v658 = vadd.f32 %v642, %v615
      %v659 = vadd.f32 %v643, %v617
      %v660 = vadd.f32 %v644, %v620
      %v661 = vadd.f32 %v645, %v622
      %v662 = vadd.f32 %v646, %v625
      %v663 = vadd.f32 %v647, %v627
      %v664 = vadd.f32 %v648, %v630
      %v665 = vadd.f32 %v649, %v632
      %666 = vst.msk [vmem:[#allocation2] sm:$0xff] %vm559, %v650
      %667 = vst.msk [vmem:[#allocation2 + $0x8] sm:$0xff] %vm559, %v651
      %668 = vst.msk [vmem:[#allocation2 + $0x10] sm:$0xff] %vm559, %v652
      %669 = vst.msk [vmem:[#allocation2 + $0x18] sm:$0xff] %vm559, %v653
      %670 = vst.msk [vmem:[#allocation2 + $0x20] sm:$0xff] %vm559, %v654
      %671 = vst.msk [vmem:[#allocation2 + $0x28] sm:$0xff] %vm559, %v655
      %672 = vst.msk [vmem:[#allocation2 + $0x30] sm:$0xff] %vm559, %v656
      %673 = vst.msk [vmem:[#allocation2 + $0x38] sm:$0xff] %vm559, %v657
      %674 = vst.msk [vmem:[#allocation2 + $0x40] sm:$0xff] %vm559, %v658
      %675 = vst.msk [vmem:[#allocation2 + $0x48] sm:$0xff] %vm559, %v659
      %676 = vst.msk [vmem:[#allocation2 + $0x50] sm:$0xff] %vm559, %v660
      %677 = vst.msk [vmem:[#allocation2 + $0x58] sm:$0xff] %vm559, %v661
      %678 = vst.msk [vmem:[#allocation2 + $0x60] sm:$0xff] %vm559, %v662
      %679 = vst.msk [vmem:[#allocation2 + $0x68] sm:$0xff] %vm559, %v663
      %680 = vst.msk [vmem:[#allocation2 + $0x70] sm:$0xff] %vm559, %v664
      %681 = vst.msk [vmem:[#allocation2 + $0x78] sm:$0xff] %vm559, %v665
      %v682 = vpack.c.bf16 %v470, %v469
      %s683 = scalar_lea.vmem %s5, 24
      %v684 = vld [vmem:[%s683] sm:$0xf]
      %v686 = vsel %vm481, %v682, 0
      %v689 = vsel %vm506, %v684, 0
      %691 = vmatpush.bf16.msra.mxu0 0
      %692 = vmatpush.bf16.msra.mxu0 0
      %693 = vmatpush.bf16.msra.mxu0 0
      %694 = vmatpush.bf16.msra.mxu0 0
      %695 = vmatpush.bf16.msra.mxu0 0
      %696 = vmatpush.bf16.msra.mxu0 0
      %697 = vmatpush.bf16.msra.mxu0 0
      %698 = vmatpush.bf16.msra.mxu0 %v689
      %699 = vmatmul.bf16.gmra.mxu0 %v489
      %v700 = vpop.f32.mrf.mxu0
      %v701 = vadd.f32 0.0, %v700
      %v702 = vpop.f32.mrf.mxu0
      %v703 = vadd.f32 0.0, %v702
      %704 = vmatmul.bf16.gmra.mxu0 %v492
      %v705 = vpop.f32.mrf.mxu0
      %v706 = vadd.f32 0.0, %v705
      %v707 = vpop.f32.mrf.mxu0
      %v708 = vadd.f32 0.0, %v707
      %709 = vmatmul.bf16.gmra.mxu0 %v495
      %v710 = vpop.f32.mrf.mxu0
      %v711 = vadd.f32 0.0, %v710
      %v712 = vpop.f32.mrf.mxu0
      %v713 = vadd.f32 0.0, %v712
      %714 = vmatmul.bf16.gmra.mxu0 %v498
      %v715 = vpop.f32.mrf.mxu0
      %v716 = vadd.f32 0.0, %v715
      %v717 = vpop.f32.mrf.mxu0
      %v718 = vadd.f32 0.0, %v717
      %719 = vmatmul.bf16.gmra.mxu0 %v501
      %v720 = vpop.f32.mrf.mxu0
      %v721 = vadd.f32 0.0, %v720
      %v722 = vpop.f32.mrf.mxu0
      %v723 = vadd.f32 0.0, %v722
      %724 = vmatmul.bf16.gmra.mxu0 %v504
      %v725 = vpop.f32.mrf.mxu0
      %v726 = vadd.f32 0.0, %v725
      %v727 = vpop.f32.mrf.mxu0
      %v728 = vadd.f32 0.0, %v727
      %729 = vmatmul.bf16.gmra.mxu0 %v580
      %v730 = vpop.f32.mrf.mxu0
      %v731 = vadd.f32 0.0, %v730
      %v732 = vpop.f32.mrf.mxu0
      %v733 = vadd.f32 0.0, %v732
      %734 = vmatmul.bf16.gmra.mxu0 %v686
      %v735 = vpop.f32.mrf.mxu0
      %v736 = vadd.f32 0.0, %v735
      %v737 = vpop.f32.mrf.mxu0
      %v738 = vadd.f32 0.0, %v737
      %739 = vdwg.mxu0
      %v740 = vld [vmem:[#allocation2] sm:$0xff]
      %v741 = vld [vmem:[#allocation2 + $0x8] sm:$0xff]
      %v742 = vld [vmem:[#allocation2 + $0x10] sm:$0xff]
      %v743 = vld [vmem:[#allocation2 + $0x18] sm:$0xff]
      %v744 = vld [vmem:[#allocation2 + $0x20] sm:$0xff]
      %v745 = vld [vmem:[#allocation2 + $0x28] sm:$0xff]
      %v746 = vld [vmem:[#allocation2 + $0x30] sm:$0xff]
      %v747 = vld [vmem:[#allocation2 + $0x38] sm:$0xff]
      %v748 = vld [vmem:[#allocation2 + $0x40] sm:$0xff]
      %v749 = vld [vmem:[#allocation2 + $0x48] sm:$0xff]
      %v750 = vld [vmem:[#allocation2 + $0x50] sm:$0xff]
      %v751 = vld [vmem:[#allocation2 + $0x58] sm:$0xff]
      %v752 = vld [vmem:[#allocation2 + $0x60] sm:$0xff]
      %v753 = vld [vmem:[#allocation2 + $0x68] sm:$0xff]
      %v754 = vld [vmem:[#allocation2 + $0x70] sm:$0xff]
      %v755 = vld [vmem:[#allocation2 + $0x78] sm:$0xff]
      %v756 = vadd.f32 %v740, %v701
      %v757 = vadd.f32 %v741, %v703
      %v758 = vadd.f32 %v742, %v706
      %v759 = vadd.f32 %v743, %v708
      %v760 = vadd.f32 %v744, %v711
      %v761 = vadd.f32 %v745, %v713
      %v762 = vadd.f32 %v746, %v716
      %v763 = vadd.f32 %v747, %v718
      %v764 = vadd.f32 %v748, %v721
      %v765 = vadd.f32 %v749, %v723
      %v766 = vadd.f32 %v750, %v726
      %v767 = vadd.f32 %v751, %v728
      %v768 = vadd.f32 %v752, %v731
      %v769 = vadd.f32 %v753, %v733
      %v770 = vadd.f32 %v754, %v736
      %v771 = vadd.f32 %v755, %v738
      %772 = vst.msk [vmem:[#allocation2] sm:$0xff] %vm559, %v756
      %773 = vst.msk [vmem:[#allocation2 + $0x8] sm:$0xff] %vm559, %v757
      %774 = vst.msk [vmem:[#allocation2 + $0x10] sm:$0xff] %vm559, %v758
      %775 = vst.msk [vmem:[#allocation2 + $0x18] sm:$0xff] %vm559, %v759
      %776 = vst.msk [vmem:[#allocation2 + $0x20] sm:$0xff] %vm559, %v760
      %777 = vst.msk [vmem:[#allocation2 + $0x28] sm:$0xff] %vm559, %v761
      %778 = vst.msk [vmem:[#allocation2 + $0x30] sm:$0xff] %vm559, %v762
      %779 = vst.msk [vmem:[#allocation2 + $0x38] sm:$0xff] %vm559, %v763
      %780 = vst.msk [vmem:[#allocation2 + $0x40] sm:$0xff] %vm559, %v764
      %781 = vst.msk [vmem:[#allocation2 + $0x48] sm:$0xff] %vm559, %v765
      %782 = vst.msk [vmem:[#allocation2 + $0x50] sm:$0xff] %vm559, %v766
      %783 = vst.msk [vmem:[#allocation2 + $0x58] sm:$0xff] %vm559, %v767
      %784 = vst.msk [vmem:[#allocation2 + $0x60] sm:$0xff] %vm559, %v768
      %785 = vst.msk [vmem:[#allocation2 + $0x68] sm:$0xff] %vm559, %v769
      %786 = vst.msk [vmem:[#allocation2 + $0x70] sm:$0xff] %vm559, %v770
      %787 = vst.msk [vmem:[#allocation2 + $0x78] sm:$0xff] %vm559, %v771
      %v788 = vrot.slane %v442, 1
      %v789 = vrot.slane %v445, 1
      %v790 = vrot.slane %v448, 1
      %v791 = vrot.slane %v451, 1
      %v792 = vrot.slane %v454, 1
      %v793 = vrot.slane %v457, 1
      %v794 = vrot.slane %v460, 1
      %v795 = vrot.slane %v463, 1
      %v796 = vrot.slane %v466, 1
      %v797 = vrot.slane %v469, 1
      %v798 = vrot.slane %v443, 1
      %v799 = vrot.slane %v446, 1
      %v800 = vrot.slane %v449, 1
      %v801 = vrot.slane %v452, 1
      %v802 = vrot.slane %v455, 1
      %v803 = vrot.slane %v458, 1
      %v804 = vrot.slane %v461, 1
      %v805 = vrot.slane %v464, 1
      %v806 = vrot.slane %v467, 1
      %v807 = vrot.slane %v470, 1
      %v808 = vrot.slane %v444, 1
      %v809 = vrot.slane %v447, 1
      %v810 = vrot.slane %v450, 1
      %v811 = vrot.slane %v453, 1
      %v812 = vrot.slane %v456, 1
      %v813 = vrot.slane %v459, 1
      %v814 = vrot.slane %v462, 1
      %v815 = vrot.slane %v465, 1
      %v816 = vrot.slane %v468, 1
      %v817 = vrot.slane %v471, 1
      %v818 = vlaneseq
      %v819 = vshrl.u32 %v818, 7
      %vm820 = vcmp.lt.s32.totalorder %v819, 7
      %v821 = vsel %vm820, %v798, %v808
      %v822 = vsel %vm820, %v799, %v809
      %v823 = vsel %vm820, %v800, %v810
      %v824 = vsel %vm820, %v801, %v811
      %v825 = vsel %vm820, %v802, %v812
      %v826 = vsel %vm820, %v803, %v813
      %v827 = vsel %vm820, %v804, %v814
      %v828 = vsel %vm820, %v805, %v815
      %v829 = vsel %vm820, %v806, %v816
      %v830 = vsel %vm820, %v807, %v817
      %v831 = vsel %vm820, %v788, %v798
      %v832 = vsel %vm820, %v789, %v799
      %v833 = vsel %vm820, %v790, %v800
      %v834 = vsel %vm820, %v791, %v801
      %v835 = vsel %vm820, %v792, %v802
      %v836 = vsel %vm820, %v793, %v803
      %v837 = vsel %vm820, %v794, %v804
      %v838 = vsel %vm820, %v795, %v805
      %v839 = vsel %vm820, %v796, %v806
      %v840 = vsel %vm820, %v797, %v807
      %v841 = vpack.c.bf16 %v821, %v831
      %v842 = vpack.c.bf16 %v822, %v832
      %v843 = vpack.c.bf16 %v823, %v833
      %v844 = vpack.c.bf16 %v824, %v834
      %v845 = vpack.c.bf16 %v825, %v835
      %v846 = vpack.c.bf16 %v826, %v836
      %v847 = vpack.c.bf16 %v827, %v837
      %v848 = vpack.c.bf16 %v828, %v838
      %s849 = scalar_lea.vmem %s5, 4
      %v850 = vld [vmem:[%s849] sm:$0xf]
      %v852 = vsel %vm481, %v841, 0
      %v855 = vsel %vm481, %v842, 0
      %v858 = vsel %vm481, %v843, 0
      %v861 = vsel %vm481, %v844, 0
      %v864 = vsel %vm481, %v845, 0
      %v867 = vsel %vm481, %v846, 0
      %v870 = vsel %vm481, %v847, 0
      %v873 = vsel %vm481, %v848, 0
      %v876 = vsel %vm506, %v850, 0
      %878 = vmatpush.bf16.msra.mxu0 0
      %879 = vmatpush.bf16.msra.mxu0 0
      %880 = vmatpush.bf16.msra.mxu0 0
      %881 = vmatpush.bf16.msra.mxu0 0
      %882 = vmatpush.bf16.msra.mxu0 0
      %883 = vmatpush.bf16.msra.mxu0 0
      %884 = vmatpush.bf16.msra.mxu0 0
      %885 = vmatpush.bf16.msra.mxu0 %v876
      %886 = vmatmul.bf16.gmra.mxu0 %v852
      %v887 = vpop.f32.mrf.mxu0
      %v888 = vadd.f32 0.0, %v887
      %v889 = vpop.f32.mrf.mxu0
      %v890 = vadd.f32 0.0, %v889
      %891 = vmatmul.bf16.gmra.mxu0 %v855
      %v892 = vpop.f32.mrf.mxu0
      %v893 = vadd.f32 0.0, %v892
      %v894 = vpop.f32.mrf.mxu0
      %v895 = vadd.f32 0.0, %v894
      %896 = vmatmul.bf16.gmra.mxu0 %v858
      %v897 = vpop.f32.mrf.mxu0
      %v898 = vadd.f32 0.0, %v897
      %v899 = vpop.f32.mrf.mxu0
      %v900 = vadd.f32 0.0, %v899
      %901 = vmatmul.bf16.gmra.mxu0 %v861
      %v902 = vpop.f32.mrf.mxu0
      %v903 = vadd.f32 0.0, %v902
      %v904 = vpop.f32.mrf.mxu0
      %v905 = vadd.f32 0.0, %v904
      %906 = vmatmul.bf16.gmra.mxu0 %v864
      %v907 = vpop.f32.mrf.mxu0
      %v908 = vadd.f32 0.0, %v907
      %v909 = vpop.f32.mrf.mxu0
      %v910 = vadd.f32 0.0, %v909
      %911 = vmatmul.bf16.gmra.mxu0 %v867
      %v912 = vpop.f32.mrf.mxu0
      %v913 = vadd.f32 0.0, %v912
      %v914 = vpop.f32.mrf.mxu0
      %v915 = vadd.f32 0.0, %v914
      %916 = vmatmul.bf16.gmra.mxu0 %v870
      %v917 = vpop.f32.mrf.mxu0
      %v918 = vadd.f32 0.0, %v917
      %v919 = vpop.f32.mrf.mxu0
      %v920 = vadd.f32 0.0, %v919
      %921 = vmatmul.bf16.gmra.mxu0 %v873
      %v922 = vpop.f32.mrf.mxu0
      %v923 = vadd.f32 0.0, %v922
      %v924 = vpop.f32.mrf.mxu0
      %v925 = vadd.f32 0.0, %v924
      %926 = vdwg.mxu0
      %v927 = vld [vmem:[#allocation2] sm:$0xff]
      %v928 = vld [vmem:[#allocation2 + $0x8] sm:$0xff]
      %v929 = vld [vmem:[#allocation2 + $0x10] sm:$0xff]
      %v930 = vld [vmem:[#allocation2 + $0x18] sm:$0xff]
      %v931 = vld [vmem:[#allocation2 + $0x20] sm:$0xff]
      %v932 = vld [vmem:[#allocation2 + $0x28] sm:$0xff]
      %v933 = vld [vmem:[#allocation2 + $0x30] sm:$0xff]
      %v934 = vld [vmem:[#allocation2 + $0x38] sm:$0xff]
      %v935 = vld [vmem:[#allocation2 + $0x40] sm:$0xff]
      %v936 = vld [vmem:[#allocation2 + $0x48] sm:$0xff]
      %v937 = vld [vmem:[#allocation2 + $0x50] sm:$0xff]
      %v938 = vld [vmem:[#allocation2 + $0x58] sm:$0xff]
      %v939 = vld [vmem:[#allocation2 + $0x60] sm:$0xff]
      %v940 = vld [vmem:[#allocation2 + $0x68] sm:$0xff]
      %v941 = vld [vmem:[#allocation2 + $0x70] sm:$0xff]
      %v942 = vld [vmem:[#allocation2 + $0x78] sm:$0xff]
      %v943 = vadd.f32 %v927, %v888
      %v944 = vadd.f32 %v928, %v890
      %v945 = vadd.f32 %v929, %v893
      %v946 = vadd.f32 %v930, %v895
      %v947 = vadd.f32 %v931, %v898
      %v948 = vadd.f32 %v932, %v900
      %v949 = vadd.f32 %v933, %v903
      %v950 = vadd.f32 %v934, %v905
      %v951 = vadd.f32 %v935, %v908
      %v952 = vadd.f32 %v936, %v910
      %v953 = vadd.f32 %v937, %v913
      %v954 = vadd.f32 %v938, %v915
      %v955 = vadd.f32 %v939, %v918
      %v956 = vadd.f32 %v940, %v920
      %v957 = vadd.f32 %v941, %v923
      %v958 = vadd.f32 %v942, %v925
      %959 = vst.msk [vmem:[#allocation2] sm:$0xff] %vm559, %v943
      %960 = vst.msk [vmem:[#allocation2 + $0x8] sm:$0xff] %vm559, %v944
      %961 = vst.msk [vmem:[#allocation2 + $0x10] sm:$0xff] %vm559, %v945
      %962 = vst.msk [vmem:[#allocation2 + $0x18] sm:$0xff] %vm559, %v946
      %963 = vst.msk [vmem:[#allocation2 + $0x20] sm:$0xff] %vm559, %v947
      %964 = vst.msk [vmem:[#allocation2 + $0x28] sm:$0xff] %vm559, %v948
      %965 = vst.msk [vmem:[#allocation2 + $0x30] sm:$0xff] %vm559, %v949
      %966 = vst.msk [vmem:[#allocation2 + $0x38] sm:$0xff] %vm559, %v950
      %967 = vst.msk [vmem:[#allocation2 + $0x40] sm:$0xff] %vm559, %v951
      %968 = vst.msk [vmem:[#allocation2 + $0x48] sm:$0xff] %vm559, %v952
      %969 = vst.msk [vmem:[#allocation2 + $0x50] sm:$0xff] %vm559, %v953
      %970 = vst.msk [vmem:[#allocation2 + $0x58] sm:$0xff] %vm559, %v954
      %971 = vst.msk [vmem:[#allocation2 + $0x60] sm:$0xff] %vm559, %v955
      %972 = vst.msk [vmem:[#allocation2 + $0x68] sm:$0xff] %vm559, %v956
      %973 = vst.msk [vmem:[#allocation2 + $0x70] sm:$0xff] %vm559, %v957
      %974 = vst.msk [vmem:[#allocation2 + $0x78] sm:$0xff] %vm559, %v958
      %v975 = vpack.c.bf16 %v829, %v839
      %s976 = scalar_lea.vmem %s5, 16
      %v977 = vld [vmem:[%s976] sm:$0xf]
      %v979 = vsel %vm481, %v975, 0
      %v982 = vsel %vm506, %v977, 0
      %984 = vmatpush.bf16.msra.mxu0 0
      %985 = vmatpush.bf16.msra.mxu0 0
      %986 = vmatpush.bf16.msra.mxu0 0
      %987 = vmatpush.bf16.msra.mxu0 0
      %988 = vmatpush.bf16.msra.mxu0 0
      %989 = vmatpush.bf16.msra.mxu0 0
      %990 = vmatpush.bf16.msra.mxu0 0
      %991 = vmatpush.bf16.msra.mxu0 %v982
      %992 = vmatmul.bf16.gmra.mxu0 %v855
      %v993 = vpop.f32.mrf.mxu0
      %v994 = vadd.f32 0.0, %v993
      %v995 = vpop.f32.mrf.mxu0
      %v996 = vadd.f32 0.0, %v995
      %997 = vmatmul.bf16.gmra.mxu0 %v858
      %v998 = vpop.f32.mrf.mxu0
      %v999 = vadd.f32 0.0, %v998
      %v1000 = vpop.f32.mrf.mxu0
      %v1001 = vadd.f32 0.0, %v1000
      %1002 = vmatmul.bf16.gmra.mxu0 %v861
      %v1003 = vpop.f32.mrf.mxu0
      %v1004 = vadd.f32 0.0, %v1003
      %v1005 = vpop.f32.mrf.mxu0
      %v1006 = vadd.f32 0.0, %v1005
      %1007 = vmatmul.bf16.gmra.mxu0 %v864
      %v1008 = vpop.f32.mrf.mxu0
      %v1009 = vadd.f32 0.0, %v1008
      %v1010 = vpop.f32.mrf.mxu0
      %v1011 = vadd.f32 0.0, %v1010
      %1012 = vmatmul.bf16.gmra.mxu0 %v867
      %v1013 = vpop.f32.mrf.mxu0
      %v1014 = vadd.f32 0.0, %v1013
      %v1015 = vpop.f32.mrf.mxu0
      %v1016 = vadd.f32 0.0, %v1015
      %1017 = vmatmul.bf16.gmra.mxu0 %v870
      %v1018 = vpop.f32.mrf.mxu0
      %v1019 = vadd.f32 0.0, %v1018
      %v1020 = vpop.f32.mrf.mxu0
      %v1021 = vadd.f32 0.0, %v1020
      %1022 = vmatmul.bf16.gmra.mxu0 %v873
      %v1023 = vpop.f32.mrf.mxu0
      %v1024 = vadd.f32 0.0, %v1023
      %v1025 = vpop.f32.mrf.mxu0
      %v1026 = vadd.f32 0.0, %v1025
      %1027 = vmatmul.bf16.gmra.mxu0 %v979
      %v1028 = vpop.f32.mrf.mxu0
      %v1029 = vadd.f32 0.0, %v1028
      %v1030 = vpop.f32.mrf.mxu0
      %v1031 = vadd.f32 0.0, %v1030
      %1032 = vdwg.mxu0
      %v1033 = vld [vmem:[#allocation2] sm:$0xff]
      %v1034 = vld [vmem:[#allocation2 + $0x8] sm:$0xff]
      %v1035 = vld [vmem:[#allocation2 + $0x10] sm:$0xff]
      %v1036 = vld [vmem:[#allocation2 + $0x18] sm:$0xff]
      %v1037 = vld [vmem:[#allocation2 + $0x20] sm:$0xff]
      %v1038 = vld [vmem:[#allocation2 + $0x28] sm:$0xff]
      %v1039 = vld [vmem:[#allocation2 + $0x30] sm:$0xff]
      %v1040 = vld [vmem:[#allocation2 + $0x38] sm:$0xff]
      %v1041 = vld [vmem:[#allocation2 + $0x40] sm:$0xff]
      %v1042 = vld [vmem:[#allocation2 + $0x48] sm:$0xff]
      %v1043 = vld [vmem:[#allocation2 + $0x50] sm:$0xff]
      %v1044 = vld [vmem:[#allocation2 + $0x58] sm:$0xff]
      %v1045 = vld [vmem:[#allocation2 + $0x60] sm:$0xff]
      %v1046 = vld [vmem:[#allocation2 + $0x68] sm:$0xff]
      %v1047 = vld [vmem:[#allocation2 + $0x70] sm:$0xff]
      %v1048 = vld [vmem:[#allocation2 + $0x78] sm:$0xff]
      %v1049 = vadd.f32 %v1033, %v994
      %v1050 = vadd.f32 %v1034, %v996
      %v1051 = vadd.f32 %v1035, %v999
      %v1052 = vadd.f32 %v1036, %v1001
      %v1053 = vadd.f32 %v1037, %v1004
      %v1054 = vadd.f32 %v1038, %v1006
      %v1055 = vadd.f32 %v1039, %v1009
      %v1056 = vadd.f32 %v1040, %v1011
      %v1057 = vadd.f32 %v1041, %v1014
      %v1058 = vadd.f32 %v1042, %v1016
      %v1059 = vadd.f32 %v1043, %v1019
      %v1060 = vadd.f32 %v1044, %v1021
      %v1061 = vadd.f32 %v1045, %v1024
      %v1062 = vadd.f32 %v1046, %v1026
      %v1063 = vadd.f32 %v1047, %v1029
      %v1064 = vadd.f32 %v1048, %v1031
      %1065 = vst.msk [vmem:[#allocation2] sm:$0xff] %vm559, %v1049
      %1066 = vst.msk [vmem:[#allocation2 + $0x8] sm:$0xff] %vm559, %v1050
      %1067 = vst.msk [vmem:[#allocation2 + $0x10] sm:$0xff] %vm559, %v1051
      %1068 = vst.msk [vmem:[#allocation2 + $0x18] sm:$0xff] %vm559, %v1052
      %1069 = vst.msk [vmem:[#allocation2 + $0x20] sm:$0xff] %vm559, %v1053
      %1070 = vst.msk [vmem:[#allocation2 + $0x28] sm:$0xff] %vm559, %v1054
      %1071 = vst.msk [vmem:[#allocation2 + $0x30] sm:$0xff] %vm559, %v1055
      %1072 = vst.msk [vmem:[#allocation2 + $0x38] sm:$0xff] %vm559, %v1056
      %1073 = vst.msk [vmem:[#allocation2 + $0x40] sm:$0xff] %vm559, %v1057
      %1074 = vst.msk [vmem:[#allocation2 + $0x48] sm:$0xff] %vm559, %v1058
      %1075 = vst.msk [vmem:[#allocation2 + $0x50] sm:$0xff] %vm559, %v1059
      %1076 = vst.msk [vmem:[#allocation2 + $0x58] sm:$0xff] %vm559, %v1060
      %1077 = vst.msk [vmem:[#allocation2 + $0x60] sm:$0xff] %vm559, %v1061
      %1078 = vst.msk [vmem:[#allocation2 + $0x68] sm:$0xff] %vm559, %v1062
      %1079 = vst.msk [vmem:[#allocation2 + $0x70] sm:$0xff] %vm559, %v1063
      %1080 = vst.msk [vmem:[#allocation2 + $0x78] sm:$0xff] %vm559, %v1064
      %v1081 = vpack.c.bf16 %v830, %v840
      %s1082 = scalar_lea.vmem %s5, 28
      %v1083 = vld [vmem:[%s1082] sm:$0xf]
      %v1085 = vsel %vm481, %v1081, 0
      %v1088 = vsel %vm506, %v1083, 0
      %1090 = vmatpush.bf16.msra.mxu0 0
      %1091 = vmatpush.bf16.msra.mxu0 0
      %1092 = vmatpush.bf16.msra.mxu0 0
      %1093 = vmatpush.bf16.msra.mxu0 0
      %1094 = vmatpush.bf16.msra.mxu0 0
      %1095 = vmatpush.bf16.msra.mxu0 0
      %1096 = vmatpush.bf16.msra.mxu0 0
      %1097 = vmatpush.bf16.msra.mxu0 %v1088
      %1098 = vmatmul.bf16.gmra.mxu0 %v858
      %v1099 = vpop.f32.mrf.mxu0
      %v1100 = vadd.f32 0.0, %v1099
      %v1101 = vpop.f32.mrf.mxu0
      %v1102 = vadd.f32 0.0, %v1101
      %1103 = vmatmul.bf16.gmra.mxu0 %v861
      %v1104 = vpop.f32.mrf.mxu0
      %v1105 = vadd.f32 0.0, %v1104
      %v1106 = vpop.f32.mrf.mxu0
      %v1107 = vadd.f32 0.0, %v1106
      %1108 = vmatmul.bf16.gmra.mxu0 %v864
      %v1109 = vpop.f32.mrf.mxu0
      %v1110 = vadd.f32 0.0, %v1109
      %v1111 = vpop.f32.mrf.mxu0
      %v1112 = vadd.f32 0.0, %v1111
      %1113 = vmatmul.bf16.gmra.mxu0 %v867
      %v1114 = vpop.f32.mrf.mxu0
      %v1115 = vadd.f32 0.0, %v1114
      %v1116 = vpop.f32.mrf.mxu0
      %v1117 = vadd.f32 0.0, %v1116
      %1118 = vmatmul.bf16.gmra.mxu0 %v870
      %v1119 = vpop.f32.mrf.mxu0
      %v1120 = vadd.f32 0.0, %v1119
      %v1121 = vpop.f32.mrf.mxu0
      %v1122 = vadd.f32 0.0, %v1121
      %1123 = vmatmul.bf16.gmra.mxu0 %v873
      %v1124 = vpop.f32.mrf.mxu0
      %v1125 = vadd.f32 0.0, %v1124
      %v1126 = vpop.f32.mrf.mxu0
      %v1127 = vadd.f32 0.0, %v1126
      %1128 = vmatmul.bf16.gmra.mxu0 %v979
      %v1129 = vpop.f32.mrf.mxu0
      %v1130 = vadd.f32 0.0, %v1129
      %v1131 = vpop.f32.mrf.mxu0
      %v1132 = vadd.f32 0.0, %v1131
      %1133 = vmatmul.bf16.gmra.mxu0 %v1085
      %v1134 = vpop.f32.mrf.mxu0
      %v1135 = vadd.f32 0.0, %v1134
      %v1136 = vpop.f32.mrf.mxu0
      %v1137 = vadd.f32 0.0, %v1136
      %1138 = vdwg.mxu0
      %v1139 = vld [vmem:[#allocation2] sm:$0xff]
      %v1140 = vld [vmem:[#allocation2 + $0x8] sm:$0xff]
      %v1141 = vld [vmem:[#allocation2 + $0x10] sm:$0xff]
      %v1142 = vld [vmem:[#allocation2 + $0x18] sm:$0xff]
      %v1143 = vld [vmem:[#allocation2 + $0x20] sm:$0xff]
      %v1144 = vld [vmem:[#allocation2 + $0x28] sm:$0xff]
      %v1145 = vld [vmem:[#allocation2 + $0x30] sm:$0xff]
      %v1146 = vld [vmem:[#allocation2 + $0x38] sm:$0xff]
      %v1147 = vld [vmem:[#allocation2 + $0x40] sm:$0xff]
      %v1148 = vld [vmem:[#allocation2 + $0x48] sm:$0xff]
      %v1149 = vld [vmem:[#allocation2 + $0x50] sm:$0xff]
      %v1150 = vld [vmem:[#allocation2 + $0x58] sm:$0xff]
      %v1151 = vld [vmem:[#allocation2 + $0x60] sm:$0xff]
      %v1152 = vld [vmem:[#allocation2 + $0x68] sm:$0xff]
      %v1153 = vld [vmem:[#allocation2 + $0x70] sm:$0xff]
      %v1154 = vld [vmem:[#allocation2 + $0x78] sm:$0xff]
      %v1155 = vadd.f32 %v1139, %v1100
      %v1156 = vadd.f32 %v1140, %v1102
      %v1157 = vadd.f32 %v1141, %v1105
      %v1158 = vadd.f32 %v1142, %v1107
      %v1159 = vadd.f32 %v1143, %v1110
      %v1160 = vadd.f32 %v1144, %v1112
      %v1161 = vadd.f32 %v1145, %v1115
      %v1162 = vadd.f32 %v1146, %v1117
      %v1163 = vadd.f32 %v1147, %v1120
      %v1164 = vadd.f32 %v1148, %v1122
      %v1165 = vadd.f32 %v1149, %v1125
      %v1166 = vadd.f32 %v1150, %v1127
      %v1167 = vadd.f32 %v1151, %v1130
      %v1168 = vadd.f32 %v1152, %v1132
      %v1169 = vadd.f32 %v1153, %v1135
      %v1170 = vadd.f32 %v1154, %v1137
      %1171 = vst.msk [vmem:[#allocation2] sm:$0xff] %vm559, %v1155
      %1172 = vst.msk [vmem:[#allocation2 + $0x8] sm:$0xff] %vm559, %v1156
      %1173 = vst.msk [vmem:[#allocation2 + $0x10] sm:$0xff] %vm559, %v1157
      %1174 = vst.msk [vmem:[#allocation2 + $0x18] sm:$0xff] %vm559, %v1158
      %1175 = vst.msk [vmem:[#allocation2 + $0x20] sm:$0xff] %vm559, %v1159
      %1176 = vst.msk [vmem:[#allocation2 + $0x28] sm:$0xff] %vm559, %v1160
      %1177 = vst.msk [vmem:[#allocation2 + $0x30] sm:$0xff] %vm559, %v1161
      %1178 = vst.msk [vmem:[#allocation2 + $0x38] sm:$0xff] %vm559, %v1162
      %1179 = vst.msk [vmem:[#allocation2 + $0x40] sm:$0xff] %vm559, %v1163
      %1180 = vst.msk [vmem:[#allocation2 + $0x48] sm:$0xff] %vm559, %v1164
      %1181 = vst.msk [vmem:[#allocation2 + $0x50] sm:$0xff] %vm559, %v1165
      %1182 = vst.msk [vmem:[#allocation2 + $0x58] sm:$0xff] %vm559, %v1166
      %1183 = vst.msk [vmem:[#allocation2 + $0x60] sm:$0xff] %vm559, %v1167
      %1184 = vst.msk [vmem:[#allocation2 + $0x68] sm:$0xff] %vm559, %v1168
      %1185 = vst.msk [vmem:[#allocation2 + $0x70] sm:$0xff] %vm559, %v1169
      %1186 = vst.msk [vmem:[#allocation2 + $0x78] sm:$0xff] %vm559, %v1170
      %v1187 = vrot.slane %v442, 2
      %v1188 = vrot.slane %v445, 2
      %v1189 = vrot.slane %v448, 2
      %v1190 = vrot.slane %v451, 2
      %v1191 = vrot.slane %v454, 2
      %v1192 = vrot.slane %v457, 2
      %v1193 = vrot.slane %v460, 2
      %v1194 = vrot.slane %v463, 2
      %v1195 = vrot.slane %v466, 2
      %v1196 = vrot.slane %v469, 2
      %v1197 = vrot.slane %v443, 2
      %v1198 = vrot.slane %v446, 2
      %v1199 = vrot.slane %v449, 2
      %v1200 = vrot.slane %v452, 2
      %v1201 = vrot.slane %v455, 2
      %v1202 = vrot.slane %v458, 2
      %v1203 = vrot.slane %v461, 2
      %v1204 = vrot.slane %v464, 2
      %v1205 = vrot.slane %v467, 2
      %v1206 = vrot.slane %v470, 2
      %v1207 = vrot.slane %v444, 2
      %v1208 = vrot.slane %v447, 2
      %v1209 = vrot.slane %v450, 2
      %v1210 = vrot.slane %v453, 2
      %v1211 = vrot.slane %v456, 2
      %v1212 = vrot.slane %v459, 2
      %v1213 = vrot.slane %v462, 2
      %v1214 = vrot.slane %v465, 2
      %v1215 = vrot.slane %v468, 2
      %v1216 = vrot.slane %v471, 2
      %vm1217 = vcmp.lt.s32.totalorder %v819, 6
      %v1218 = vsel %vm1217, %v1197, %v1207
      %v1219 = vsel %vm1217, %v1198, %v1208
      %v1220 = vsel %vm1217, %v1199, %v1209
      %v1221 = vsel %vm1217, %v1200, %v1210
      %v1222 = vsel %vm1217, %v1201, %v1211
      %v1223 = vsel %vm1217, %v1202, %v1212
      %v1224 = vsel %vm1217, %v1203, %v1213
      %v1225 = vsel %vm1217, %v1204, %v1214
      %v1226 = vsel %vm1217, %v1205, %v1215
      %v1227 = vsel %vm1217, %v1206, %v1216
      %v1228 = vsel %vm1217, %v1187, %v1197
      %v1229 = vsel %vm1217, %v1188, %v1198
      %v1230 = vsel %vm1217, %v1189, %v1199
      %v1231 = vsel %vm1217, %v1190, %v1200
      %v1232 = vsel %vm1217, %v1191, %v1201
      %v1233 = vsel %vm1217, %v1192, %v1202
      %v1234 = vsel %vm1217, %v1193, %v1203
      %v1235 = vsel %vm1217, %v1194, %v1204
      %v1236 = vsel %vm1217, %v1195, %v1205
      %v1237 = vsel %vm1217, %v1196, %v1206
      %v1238 = vpack.c.bf16 %v1218, %v1228
      %v1239 = vpack.c.bf16 %v1219, %v1229
      %v1240 = vpack.c.bf16 %v1220, %v1230
      %v1241 = vpack.c.bf16 %v1221, %v1231
      %v1242 = vpack.c.bf16 %v1222, %v1232
      %v1243 = vpack.c.bf16 %v1223, %v1233
      %v1244 = vpack.c.bf16 %v1224, %v1234
      %v1245 = vpack.c.bf16 %v1225, %v1235
      %s1246 = scalar_lea.vmem %s5, 8
      %v1247 = vld [vmem:[%s1246] sm:$0xf]
      %v1249 = vsel %vm481, %v1238, 0
      %v1252 = vsel %vm481, %v1239, 0
      %v1255 = vsel %vm481, %v1240, 0
      %v1258 = vsel %vm481, %v1241, 0
      %v1261 = vsel %vm481, %v1242, 0
      %v1264 = vsel %vm481, %v1243, 0
      %v1267 = vsel %vm481, %v1244, 0
      %v1270 = vsel %vm481, %v1245, 0
      %v1273 = vsel %vm506, %v1247, 0
      %1275 = vmatpush.bf16.msra.mxu0 0
      %1276 = vmatpush.bf16.msra.mxu0 0
      %1277 = vmatpush.bf16.msra.mxu0 0
      %1278 = vmatpush.bf16.msra.mxu0 0
      %1279 = vmatpush.bf16.msra.mxu0 0
      %1280 = vmatpush.bf16.msra.mxu0 0
      %1281 = vmatpush.bf16.msra.mxu0 0
      %1282 = vmatpush.bf16.msra.mxu0 %v1273
      %1283 = vmatmul.bf16.gmra.mxu0 %v1249
      %v1284 = vpop.f32.mrf.mxu0
      %v1285 = vadd.f32 0.0, %v1284
      %v1286 = vpop.f32.mrf.mxu0
      %v1287 = vadd.f32 0.0, %v1286
      %1288 = vmatmul.bf16.gmra.mxu0 %v1252
      %v1289 = vpop.f32.mrf.mxu0
      %v1290 = vadd.f32 0.0, %v1289
      %v1291 = vpop.f32.mrf.mxu0
      %v1292 = vadd.f32 0.0, %v1291
      %1293 = vmatmul.bf16.gmra.mxu0 %v1255
      %v1294 = vpop.f32.mrf.mxu0
      %v1295 = vadd.f32 0.0, %v1294
      %v1296 = vpop.f32.mrf.mxu0
      %v1297 = vadd.f32 0.0, %v1296
      %1298 = vmatmul.bf16.gmra.mxu0 %v1258
      %v1299 = vpop.f32.mrf.mxu0
      %v1300 = vadd.f32 0.0, %v1299
      %v1301 = vpop.f32.mrf.mxu0
      %v1302 = vadd.f32 0.0, %v1301
      %1303 = vmatmul.bf16.gmra.mxu0 %v1261
      %v1304 = vpop.f32.mrf.mxu0
      %v1305 = vadd.f32 0.0, %v1304
      %v1306 = vpop.f32.mrf.mxu0
      %v1307 = vadd.f32 0.0, %v1306
      %1308 = vmatmul.bf16.gmra.mxu0 %v1264
      %v1309 = vpop.f32.mrf.mxu0
      %v1310 = vadd.f32 0.0, %v1309
      %v1311 = vpop.f32.mrf.mxu0
      %v1312 = vadd.f32 0.0, %v1311
      %1313 = vmatmul.bf16.gmra.mxu0 %v1267
      %v1314 = vpop.f32.mrf.mxu0
      %v1315 = vadd.f32 0.0, %v1314
      %v1316 = vpop.f32.mrf.mxu0
      %v1317 = vadd.f32 0.0, %v1316
      %1318 = vmatmul.bf16.gmra.mxu0 %v1270
      %v1319 = vpop.f32.mrf.mxu0
      %v1320 = vadd.f32 0.0, %v1319
      %v1321 = vpop.f32.mrf.mxu0
      %v1322 = vadd.f32 0.0, %v1321
      %1323 = vdwg.mxu0
      %v1324 = vld [vmem:[#allocation2] sm:$0xff]
      %v1325 = vld [vmem:[#allocation2 + $0x8] sm:$0xff]
      %v1326 = vld [vmem:[#allocation2 + $0x10] sm:$0xff]
      %v1327 = vld [vmem:[#allocation2 + $0x18] sm:$0xff]
      %v1328 = vld [vmem:[#allocation2 + $0x20] sm:$0xff]
      %v1329 = vld [vmem:[#allocation2 + $0x28] sm:$0xff]
      %v1330 = vld [vmem:[#allocation2 + $0x30] sm:$0xff]
      %v1331 = vld [vmem:[#allocation2 + $0x38] sm:$0xff]
      %v1332 = vld [vmem:[#allocation2 + $0x40] sm:$0xff]
      %v1333 = vld [vmem:[#allocation2 + $0x48] sm:$0xff]
      %v1334 = vld [vmem:[#allocation2 + $0x50] sm:$0xff]
      %v1335 = vld [vmem:[#allocation2 + $0x58] sm:$0xff]
      %v1336 = vld [vmem:[#allocation2 + $0x60] sm:$0xff]
      %v1337 = vld [vmem:[#allocation2 + $0x68] sm:$0xff]
      %v1338 = vld [vmem:[#allocation2 + $0x70] sm:$0xff]
      %v1339 = vld [vmem:[#allocation2 + $0x78] sm:$0xff]
      %v1340 = vadd.f32 %v1324, %v1285
      %v1341 = vadd.f32 %v1325, %v1287
      %v1342 = vadd.f32 %v1326, %v1290
      %v1343 = vadd.f32 %v1327, %v1292
      %v1344 = vadd.f32 %v1328, %v1295
      %v1345 = vadd.f32 %v1329, %v1297
      %v1346 = vadd.f32 %v1330, %v1300
      %v1347 = vadd.f32 %v1331, %v1302
      %v1348 = vadd.f32 %v1332, %v1305
      %v1349 = vadd.f32 %v1333, %v1307
      %v1350 = vadd.f32 %v1334, %v1310
      %v1351 = vadd.f32 %v1335, %v1312
      %v1352 = vadd.f32 %v1336, %v1315
      %v1353 = vadd.f32 %v1337, %v1317
      %v1354 = vadd.f32 %v1338, %v1320
      %v1355 = vadd.f32 %v1339, %v1322
      %1356 = vst.msk [vmem:[#allocation2] sm:$0xff] %vm559, %v1340
      %1357 = vst.msk [vmem:[#allocation2 + $0x8] sm:$0xff] %vm559, %v1341
      %1358 = vst.msk [vmem:[#allocation2 + $0x10] sm:$0xff] %vm559, %v1342
      %1359 = vst.msk [vmem:[#allocation2 + $0x18] sm:$0xff] %vm559, %v1343
      %1360 = vst.msk [vmem:[#allocation2 + $0x20] sm:$0xff] %vm559, %v1344
      %1361 = vst.msk [vmem:[#allocation2 + $0x28] sm:$0xff] %vm559, %v1345
      %1362 = vst.msk [vmem:[#allocation2 + $0x30] sm:$0xff] %vm559, %v1346
      %1363 = vst.msk [vmem:[#allocation2 + $0x38] sm:$0xff] %vm559, %v1347
      %1364 = vst.msk [vmem:[#allocation2 + $0x40] sm:$0xff] %vm559, %v1348
      %1365 = vst.msk [vmem:[#allocation2 + $0x48] sm:$0xff] %vm559, %v1349
      %1366 = vst.msk [vmem:[#allocation2 + $0x50] sm:$0xff] %vm559, %v1350
      %1367 = vst.msk [vmem:[#allocation2 + $0x58] sm:$0xff] %vm559, %v1351
      %1368 = vst.msk [vmem:[#allocation2 + $0x60] sm:$0xff] %vm559, %v1352
      %1369 = vst.msk [vmem:[#allocation2 + $0x68] sm:$0xff] %vm559, %v1353
      %1370 = vst.msk [vmem:[#allocation2 + $0x70] sm:$0xff] %vm559, %v1354
      %1371 = vst.msk [vmem:[#allocation2 + $0x78] sm:$0xff] %vm559, %v1355
      %v1372 = vpack.c.bf16 %v1226, %v1236
      %s1373 = scalar_lea.vmem %s5, 20
      %v1374 = vld [vmem:[%s1373] sm:$0xf]
      %v1376 = vsel %vm481, %v1372, 0
      %v1379 = vsel %vm506, %v1374, 0
      %1381 = vmatpush.bf16.msra.mxu0 0
      %1382 = vmatpush.bf16.msra.mxu0 0
      %1383 = vmatpush.bf16.msra.mxu0 0
      %1384 = vmatpush.bf16.msra.mxu0 0
      %1385 = vmatpush.bf16.msra.mxu0 0
      %1386 = vmatpush.bf16.msra.mxu0 0
      %1387 = vmatpush.bf16.msra.mxu0 0
      %1388 = vmatpush.bf16.msra.mxu0 %v1379
      %1389 = vmatmul.bf16.gmra.mxu0 %v1252
      %v1390 = vpop.f32.mrf.mxu0
      %v1391 = vadd.f32 0.0, %v1390
      %v1392 = vpop.f32.mrf.mxu0
      %v1393 = vadd.f32 0.0, %v1392
      %1394 = vmatmul.bf16.gmra.mxu0 %v1255
      %v1395 = vpop.f32.mrf.mxu0
      %v1396 = vadd.f32 0.0, %v1395
      %v1397 = vpop.f32.mrf.mxu0
      %v1398 = vadd.f32 0.0, %v1397
      %1399 = vmatmul.bf16.gmra.mxu0 %v1258
      %v1400 = vpop.f32.mrf.mxu0
      %v1401 = vadd.f32 0.0, %v1400
      %v1402 = vpop.f32.mrf.mxu0
      %v1403 = vadd.f32 0.0, %v1402
      %1404 = vmatmul.bf16.gmra.mxu0 %v1261
      %v1405 = vpop.f32.mrf.mxu0
      %v1406 = vadd.f32 0.0, %v1405
      %v1407 = vpop.f32.mrf.mxu0
      %v1408 = vadd.f32 0.0, %v1407
      %1409 = vmatmul.bf16.gmra.mxu0 %v1264
      %v1410 = vpop.f32.mrf.mxu0
      %v1411 = vadd.f32 0.0, %v1410
      %v1412 = vpop.f32.mrf.mxu0
      %v1413 = vadd.f32 0.0, %v1412
      %1414 = vmatmul.bf16.gmra.mxu0 %v1267
      %v1415 = vpop.f32.mrf.mxu0
      %v1416 = vadd.f32 0.0, %v1415
      %v1417 = vpop.f32.mrf.mxu0
      %v1418 = vadd.f32 0.0, %v1417
      %1419 = vmatmul.bf16.gmra.mxu0 %v1270
      %v1420 = vpop.f32.mrf.mxu0
      %v1421 = vadd.f32 0.0, %v1420
      %v1422 = vpop.f32.mrf.mxu0
      %v1423 = vadd.f32 0.0, %v1422
      %1424 = vmatmul.bf16.gmra.mxu0 %v1376
      %v1425 = vpop.f32.mrf.mxu0
      %v1426 = vadd.f32 0.0, %v1425
      %v1427 = vpop.f32.mrf.mxu0
      %v1428 = vadd.f32 0.0, %v1427
      %1429 = vdwg.mxu0
      %v1430 = vld [vmem:[#allocation2] sm:$0xff]
      %v1431 = vld [vmem:[#allocation2 + $0x8] sm:$0xff]
      %v1432 = vld [vmem:[#allocation2 + $0x10] sm:$0xff]
      %v1433 = vld [vmem:[#allocation2 + $0x18] sm:$0xff]
      %v1434 = vld [vmem:[#allocation2 + $0x20] sm:$0xff]
      %v1435 = vld [vmem:[#allocation2 + $0x28] sm:$0xff]
      %v1436 = vld [vmem:[#allocation2 + $0x30] sm:$0xff]
      %v1437 = vld [vmem:[#allocation2 + $0x38] sm:$0xff]
      %v1438 = vld [vmem:[#allocation2 + $0x40] sm:$0xff]
      %v1439 = vld [vmem:[#allocation2 + $0x48] sm:$0xff]
      %v1440 = vld [vmem:[#allocation2 + $0x50] sm:$0xff]
      %v1441 = vld [vmem:[#allocation2 + $0x58] sm:$0xff]
      %v1442 = vld [vmem:[#allocation2 + $0x60] sm:$0xff]
      %v1443 = vld [vmem:[#allocation2 + $0x68] sm:$0xff]
      %v1444 = vld [vmem:[#allocation2 + $0x70] sm:$0xff]
      %v1445 = vld [vmem:[#allocation2 + $0x78] sm:$0xff]
      %v1446 = vadd.f32 %v1430, %v1391
      %v1447 = vadd.f32 %v1431, %v1393
      %v1448 = vadd.f32 %v1432, %v1396
      %v1449 = vadd.f32 %v1433, %v1398
      %v1450 = vadd.f32 %v1434, %v1401
      %v1451 = vadd.f32 %v1435, %v1403
      %v1452 = vadd.f32 %v1436, %v1406
      %v1453 = vadd.f32 %v1437, %v1408
      %v1454 = vadd.f32 %v1438, %v1411
      %v1455 = vadd.f32 %v1439, %v1413
      %v1456 = vadd.f32 %v1440, %v1416
      %v1457 = vadd.f32 %v1441, %v1418
      %v1458 = vadd.f32 %v1442, %v1421
      %v1459 = vadd.f32 %v1443, %v1423
      %v1460 = vadd.f32 %v1444, %v1426
      %v1461 = vadd.f32 %v1445, %v1428
      %1462 = vst.msk [vmem:[#allocation2] sm:$0xff] %vm559, %v1446
      %1463 = vst.msk [vmem:[#allocation2 + $0x8] sm:$0xff] %vm559, %v1447
      %1464 = vst.msk [vmem:[#allocation2 + $0x10] sm:$0xff] %vm559, %v1448
      %1465 = vst.msk [vmem:[#allocation2 + $0x18] sm:$0xff] %vm559, %v1449
      %1466 = vst.msk [vmem:[#allocation2 + $0x20] sm:$0xff] %vm559, %v1450
      %1467 = vst.msk [vmem:[#allocation2 + $0x28] sm:$0xff] %vm559, %v1451
      %1468 = vst.msk [vmem:[#allocation2 + $0x30] sm:$0xff] %vm559, %v1452
      %1469 = vst.msk [vmem:[#allocation2 + $0x38] sm:$0xff] %vm559, %v1453
      %1470 = vst.msk [vmem:[#allocation2 + $0x40] sm:$0xff] %vm559, %v1454
      %1471 = vst.msk [vmem:[#allocation2 + $0x48] sm:$0xff] %vm559, %v1455
      %1472 = vst.msk [vmem:[#allocation2 + $0x50] sm:$0xff] %vm559, %v1456
      %1473 = vst.msk [vmem:[#allocation2 + $0x58] sm:$0xff] %vm559, %v1457
      %1474 = vst.msk [vmem:[#allocation2 + $0x60] sm:$0xff] %vm559, %v1458
      %1475 = vst.msk [vmem:[#allocation2 + $0x68] sm:$0xff] %vm559, %v1459
      %1476 = vst.msk [vmem:[#allocation2 + $0x70] sm:$0xff] %vm559, %v1460
      %1477 = vst.msk [vmem:[#allocation2 + $0x78] sm:$0xff] %vm559, %v1461
      %v1478 = vpack.c.bf16 %v1227, %v1237
      %s1479 = scalar_lea.vmem %s5, 32
      %v1480 = vld [vmem:[%s1479] sm:$0xf]
      %v1482 = vsel %vm481, %v1478, 0
      %v1485 = vsel %vm506, %v1480, 0
      %1487 = vmatpush.bf16.msra.mxu0 0
      %1488 = vmatpush.bf16.msra.mxu0 0
      %1489 = vmatpush.bf16.msra.mxu0 0
      %1490 = vmatpush.bf16.msra.mxu0 0
      %1491 = vmatpush.bf16.msra.mxu0 0
      %1492 = vmatpush.bf16.msra.mxu0 0
      %1493 = vmatpush.bf16.msra.mxu0 0
      %1494 = vmatpush.bf16.msra.mxu0 %v1485
      %1495 = vmatmul.bf16.gmra.mxu0 %v1255
      %v1496 = vpop.f32.mrf.mxu0
      %v1497 = vadd.f32 0.0, %v1496
      %v1498 = vpop.f32.mrf.mxu0
      %v1499 = vadd.f32 0.0, %v1498
      %1500 = vmatmul.bf16.gmra.mxu0 %v1258
      %v1501 = vpop.f32.mrf.mxu0
      %v1502 = vadd.f32 0.0, %v1501
      %v1503 = vpop.f32.mrf.mxu0
      %v1504 = vadd.f32 0.0, %v1503
      %1505 = vmatmul.bf16.gmra.mxu0 %v1261
      %v1506 = vpop.f32.mrf.mxu0
      %v1507 = vadd.f32 0.0, %v1506
      %v1508 = vpop.f32.mrf.mxu0
      %v1509 = vadd.f32 0.0, %v1508
      %1510 = vmatmul.bf16.gmra.mxu0 %v1264
      %v1511 = vpop.f32.mrf.mxu0
      %v1512 = vadd.f32 0.0, %v1511
      %v1513 = vpop.f32.mrf.mxu0
      %v1514 = vadd.f32 0.0, %v1513
      %1515 = vmatmul.bf16.gmra.mxu0 %v1267
      %v1516 = vpop.f32.mrf.mxu0
      %v1517 = vadd.f32 0.0, %v1516
      %v1518 = vpop.f32.mrf.mxu0
      %v1519 = vadd.f32 0.0, %v1518
      %1520 = vmatmul.bf16.gmra.mxu0 %v1270
      %v1521 = vpop.f32.mrf.mxu0
      %v1522 = vadd.f32 0.0, %v1521
      %v1523 = vpop.f32.mrf.mxu0
      %v1524 = vadd.f32 0.0, %v1523
      %1525 = vmatmul.bf16.gmra.mxu0 %v1376
      %v1526 = vpop.f32.mrf.mxu0
      %v1527 = vadd.f32 0.0, %v1526
      %v1528 = vpop.f32.mrf.mxu0
      %v1529 = vadd.f32 0.0, %v1528
      %1530 = vmatmul.bf16.gmra.mxu0 %v1482
      %v1531 = vpop.f32.mrf.mxu0
      %v1532 = vadd.f32 0.0, %v1531
      %v1533 = vpop.f32.mrf.mxu0
      %v1534 = vadd.f32 0.0, %v1533
      %1535 = vdwg.mxu0
      %v1536 = vld [vmem:[#allocation2] sm:$0xff]
      %v1537 = vld [vmem:[#allocation2 + $0x8] sm:$0xff]
      %v1538 = vld [vmem:[#allocation2 + $0x10] sm:$0xff]
      %v1539 = vld [vmem:[#allocation2 + $0x18] sm:$0xff]
      %v1540 = vld [vmem:[#allocation2 + $0x20] sm:$0xff]
      %v1541 = vld [vmem:[#allocation2 + $0x28] sm:$0xff]
      %v1542 = vld [vmem:[#allocation2 + $0x30] sm:$0xff]
      %v1543 = vld [vmem:[#allocation2 + $0x38] sm:$0xff]
      %v1544 = vld [vmem:[#allocation2 + $0x40] sm:$0xff]
      %v1545 = vld [vmem:[#allocation2 + $0x48] sm:$0xff]
      %v1546 = vld [vmem:[#allocation2 + $0x50] sm:$0xff]
      %v1547 = vld [vmem:[#allocation2 + $0x58] sm:$0xff]
      %v1548 = vld [vmem:[#allocation2 + $0x60] sm:$0xff]
      %v1549 = vld [vmem:[#allocation2 + $0x68] sm:$0xff]
      %v1550 = vld [vmem:[#allocation2 + $0x70] sm:$0xff]
      %v1551 = vld [vmem:[#allocation2 + $0x78] sm:$0xff]
      %v1552 = vadd.f32 %v1536, %v1497
      %v1553 = vadd.f32 %v1537, %v1499
      %v1554 = vadd.f32 %v1538, %v1502
      %v1555 = vadd.f32 %v1539, %v1504
      %v1556 = vadd.f32 %v1540, %v1507
      %v1557 = vadd.f32 %v1541, %v1509
      %v1558 = vadd.f32 %v1542, %v1512
      %v1559 = vadd.f32 %v1543, %v1514
      %v1560 = vadd.f32 %v1544, %v1517
      %v1561 = vadd.f32 %v1545, %v1519
      %v1562 = vadd.f32 %v1546, %v1522
      %v1563 = vadd.f32 %v1547, %v1524
      %v1564 = vadd.f32 %v1548, %v1527
      %v1565 = vadd.f32 %v1549, %v1529
      %v1566 = vadd.f32 %v1550, %v1532
      %v1567 = vadd.f32 %v1551, %v1534
      %1568 = vst.msk [vmem:[#allocation2] sm:$0xff] %vm559, %v1552
      %1569 = vst.msk [vmem:[#allocation2 + $0x8] sm:$0xff] %vm559, %v1553
      %1570 = vst.msk [vmem:[#allocation2 + $0x10] sm:$0xff] %vm559, %v1554
      %1571 = vst.msk [vmem:[#allocation2 + $0x18] sm:$0xff] %vm559, %v1555
      %1572 = vst.msk [vmem:[#allocation2 + $0x20] sm:$0xff] %vm559, %v1556
      %1573 = vst.msk [vmem:[#allocation2 + $0x28] sm:$0xff] %vm559, %v1557
      %1574 = vst.msk [vmem:[#allocation2 + $0x30] sm:$0xff] %vm559, %v1558
      %1575 = vst.msk [vmem:[#allocation2 + $0x38] sm:$0xff] %vm559, %v1559
      %1576 = vst.msk [vmem:[#allocation2 + $0x40] sm:$0xff] %vm559, %v1560
      %1577 = vst.msk [vmem:[#allocation2 + $0x48] sm:$0xff] %vm559, %v1561
      %1578 = vst.msk [vmem:[#allocation2 + $0x50] sm:$0xff] %vm559, %v1562
      %1579 = vst.msk [vmem:[#allocation2 + $0x58] sm:$0xff] %vm559, %v1563
      %1580 = vst.msk [vmem:[#allocation2 + $0x60] sm:$0xff] %vm559, %v1564
      %1581 = vst.msk [vmem:[#allocation2 + $0x68] sm:$0xff] %vm559, %v1565
      %1582 = vst.msk [vmem:[#allocation2 + $0x70] sm:$0xff] %vm559, %v1566
      %1583 = vst.msk [vmem:[#allocation2 + $0x78] sm:$0xff] %vm559, %v1567
      %v1584 = vld [vmem:[#allocation2] sm:$0xff]
      %v1585 = vld [vmem:[#allocation2 + $0x8] sm:$0xff]
      %v1586 = vld [vmem:[#allocation2 + $0x10] sm:$0xff]
      %v1587 = vld [vmem:[#allocation2 + $0x18] sm:$0xff]
      %v1588 = vld [vmem:[#allocation2 + $0x20] sm:$0xff]
      %v1589 = vld [vmem:[#allocation2 + $0x28] sm:$0xff]
      %v1590 = vld [vmem:[#allocation2 + $0x30] sm:$0xff]
      %v1591 = vld [vmem:[#allocation2 + $0x38] sm:$0xff]
      %v1592 = vld [vmem:[#allocation2 + $0x40] sm:$0xff]
      %v1593 = vld [vmem:[#allocation2 + $0x48] sm:$0xff]
      %v1594 = vld [vmem:[#allocation2 + $0x50] sm:$0xff]
      %v1595 = vld [vmem:[#allocation2 + $0x58] sm:$0xff]
      %v1596 = vld [vmem:[#allocation2 + $0x60] sm:$0xff]
      %v1597 = vld [vmem:[#allocation2 + $0x68] sm:$0xff]
      %v1598 = vld [vmem:[#allocation2 + $0x70] sm:$0xff]
      %v1599 = vld [vmem:[#allocation2 + $0x78] sm:$0xff]
      %v1600 = vld [vmem:[%s6] sm:$0x1]
      %v1602 = vperm.slane %v1600, 0
      %v1604 = vadd.f32 %v1584, %v1602
      %v1605 = vadd.f32 %v1585, %v1602
      %v1606 = vadd.f32 %v1586, %v1602
      %v1607 = vadd.f32 %v1587, %v1602
      %v1608 = vadd.f32 %v1588, %v1602
      %v1609 = vadd.f32 %v1589, %v1602
      %v1610 = vadd.f32 %v1590, %v1602
      %v1611 = vadd.f32 %v1591, %v1602
      %v1612 = vadd.f32 %v1592, %v1602
      %v1613 = vadd.f32 %v1593, %v1602
      %v1614 = vadd.f32 %v1594, %v1602
      %v1615 = vadd.f32 %v1595, %v1602
      %v1616 = vadd.f32 %v1596, %v1602
      %v1617 = vadd.f32 %v1597, %v1602
      %v1618 = vadd.f32 %v1598, %v1602
      %v1619 = vadd.f32 %v1599, %v1602
      %v1620 = vadd.f32 %v1604, 1.0
      %v1621 = vadd.f32 %v1605, 1.0
      %v1622 = vadd.f32 %v1606, 1.0
      %v1623 = vadd.f32 %v1607, 1.0
      %v1624 = vadd.f32 %v1608, 1.0
      %v1625 = vadd.f32 %v1609, 1.0
      %v1626 = vadd.f32 %v1610, 1.0
      %v1627 = vadd.f32 %v1611, 1.0
      %v1628 = vadd.f32 %v1612, 1.0
      %v1629 = vadd.f32 %v1613, 1.0
      %v1630 = vadd.f32 %v1614, 1.0
      %v1631 = vadd.f32 %v1615, 1.0
      %v1632 = vadd.f32 %v1616, 1.0
      %v1633 = vadd.f32 %v1617, 1.0
      %v1634 = vadd.f32 %v1618, 1.0
      %v1635 = vadd.f32 %v1619, 1.0
      %v1636 = vxor.u32 %v1620, 2147483648
      %v1637 = vxor.u32 %v1621, 2147483648
      %v1638 = vxor.u32 %v1622, 2147483648
      %v1639 = vxor.u32 %v1623, 2147483648
      %v1640 = vxor.u32 %v1624, 2147483648
      %v1641 = vxor.u32 %v1625, 2147483648
      %v1642 = vxor.u32 %v1626, 2147483648
      %v1643 = vxor.u32 %v1627, 2147483648
      %v1644 = vxor.u32 %v1628, 2147483648
      %v1645 = vxor.u32 %v1629, 2147483648
      %v1646 = vxor.u32 %v1630, 2147483648
      %v1647 = vxor.u32 %v1631, 2147483648
      %v1648 = vxor.u32 %v1632, 2147483648
      %v1649 = vxor.u32 %v1633, 2147483648
      %v1650 = vxor.u32 %v1634, 2147483648
      %v1651 = vxor.u32 %v1635, 2147483648
      %v1652 = vmul.f32 %v1636, 1.442695
      %v1653 = vpow.pop %v1652
      %v1654 = vmul.f32 %v1637, 1.442695
      %v1655 = vpow.pop %v1654
      %v1656 = vmul.f32 %v1638, 1.442695
      %v1657 = vpow.pop %v1656
      %v1658 = vmul.f32 %v1639, 1.442695
      %v1659 = vpow.pop %v1658
      %v1660 = vmul.f32 %v1640, 1.442695
      %v1661 = vpow.pop %v1660
      %v1662 = vmul.f32 %v1641, 1.442695
      %v1663 = vpow.pop %v1662
      %v1664 = vmul.f32 %v1642, 1.442695
      %v1665 = vpow.pop %v1664
      %v1666 = vmul.f32 %v1643, 1.442695
      %v1667 = vpow.pop %v1666
      %v1668 = vmul.f32 %v1644, 1.442695
      %v1669 = vpow.pop %v1668
      %v1670 = vmul.f32 %v1645, 1.442695
      %v1671 = vpow.pop %v1670
      %v1672 = vmul.f32 %v1646, 1.442695
      %v1673 = vpow.pop %v1672
      %v1674 = vmul.f32 %v1647, 1.442695
      %v1675 = vpow.pop %v1674
      %v1676 = vmul.f32 %v1648, 1.442695
      %v1677 = vpow.pop %v1676
      %v1678 = vmul.f32 %v1649, 1.442695
      %v1679 = vpow.pop %v1678
      %v1680 = vmul.f32 %v1650, 1.442695
      %v1681 = vpow.pop %v1680
      %v1682 = vmul.f32 %v1651, 1.442695
      %v1683 = vpow.pop %v1682
      %v1684 = vadd.f32 %v1653, 1.0
      %v1685 = vadd.f32 %v1655, 1.0
      %v1686 = vadd.f32 %v1657, 1.0
      %v1687 = vadd.f32 %v1659, 1.0
      %v1688 = vadd.f32 %v1661, 1.0
      %v1689 = vadd.f32 %v1663, 1.0
      %v1690 = vadd.f32 %v1665, 1.0
      %v1691 = vadd.f32 %v1667, 1.0
      %v1692 = vadd.f32 %v1669, 1.0
      %v1693 = vadd.f32 %v1671, 1.0
      %v1694 = vadd.f32 %v1673, 1.0
      %v1695 = vadd.f32 %v1675, 1.0
      %v1696 = vadd.f32 %v1677, 1.0
      %v1697 = vadd.f32 %v1679, 1.0
      %v1698 = vadd.f32 %v1681, 1.0
      %v1699 = vadd.f32 %v1683, 1.0
      %v1700 = vrcp.pop %v1684
      %v1701 = vmul.f32 %v1684, %v1700
      %v1702 = vsub.f32 1.0, %v1701
      %v1703 = vmul.f32 %v1700, %v1702
      %v1704 = vadd.f32 %v1700, %v1703
      %vm1705 = vweird.f32 %v1684
      %vm1706 = vweird.f32 %v1700
      %vm1707 = vmor %vm1705, %vm1706
      %v1708 = vsel %vm1707, %v1700, %v1704
      %v1709 = vand.u32 2147483647, %v1684
      %vm1710 = vcmp.eq.f32.partialorder %v1709, 8.507059e+37
      %v1711 = vand.u32 %v1684, 2147483648
      %v1712 = vor.u32 1.1754944e-38, %v1711
      %v1713 = vsel %vm1710, %v1712, %v1708
      %v1714 = vmul.f32 1.0, %v1713
      %v1715 = vrcp.pop %v1685
      %v1716 = vmul.f32 %v1685, %v1715
      %v1717 = vsub.f32 1.0, %v1716
      %v1718 = vmul.f32 %v1715, %v1717
      %v1719 = vadd.f32 %v1715, %v1718
      %vm1720 = vweird.f32 %v1685
      %vm1721 = vweird.f32 %v1715
      %vm1722 = vmor %vm1720, %vm1721
      %v1723 = vsel %vm1722, %v1715, %v1719
      %v1724 = vand.u32 2147483647, %v1685
      %vm1725 = vcmp.eq.f32.partialorder %v1724, 8.507059e+37
      %v1726 = vand.u32 %v1685, 2147483648
      %v1727 = vor.u32 1.1754944e-38, %v1726
      %v1728 = vsel %vm1725, %v1727, %v1723
      %v1729 = vmul.f32 1.0, %v1728
      %v1730 = vrcp.pop %v1686
      %v1731 = vmul.f32 %v1686, %v1730
      %v1732 = vsub.f32 1.0, %v1731
      %v1733 = vmul.f32 %v1730, %v1732
      %v1734 = vadd.f32 %v1730, %v1733
      %vm1735 = vweird.f32 %v1686
      %vm1736 = vweird.f32 %v1730
      %vm1737 = vmor %vm1735, %vm1736
      %v1738 = vsel %vm1737, %v1730, %v1734
      %v1739 = vand.u32 2147483647, %v1686
      %vm1740 = vcmp.eq.f32.partialorder %v1739, 8.507059e+37
      %v1741 = vand.u32 %v1686, 2147483648
      %v1742 = vor.u32 1.1754944e-38, %v1741
      %v1743 = vsel %vm1740, %v1742, %v1738
      %v1744 = vmul.f32 1.0, %v1743
      %v1745 = vrcp.pop %v1687
      %v1746 = vmul.f32 %v1687, %v1745
      %v1747 = vsub.f32 1.0, %v1746
      %v1748 = vmul.f32 %v1745, %v1747
      %v1749 = vadd.f32 %v1745, %v1748
      %vm1750 = vweird.f32 %v1687
      %vm1751 = vweird.f32 %v1745
      %vm1752 = vmor %vm1750, %vm1751
      %v1753 = vsel %vm1752, %v1745, %v1749
      %v1754 = vand.u32 2147483647, %v1687
      %vm1755 = vcmp.eq.f32.partialorder %v1754, 8.507059e+37
      %v1756 = vand.u32 %v1687, 2147483648
      %v1757 = vor.u32 1.1754944e-38, %v1756
      %v1758 = vsel %vm1755, %v1757, %v1753
      %v1759 = vmul.f32 1.0, %v1758
      %v1760 = vrcp.pop %v1688
      %v1761 = vmul.f32 %v1688, %v1760
      %v1762 = vsub.f32 1.0, %v1761
      %v1763 = vmul.f32 %v1760, %v1762
      %v1764 = vadd.f32 %v1760, %v1763
      %vm1765 = vweird.f32 %v1688
      %vm1766 = vweird.f32 %v1760
      %vm1767 = vmor %vm1765, %vm1766
      %v1768 = vsel %vm1767, %v1760, %v1764
      %v1769 = vand.u32 2147483647, %v1688
      %vm1770 = vcmp.eq.f32.partialorder %v1769, 8.507059e+37
      %v1771 = vand.u32 %v1688, 2147483648
      %v1772 = vor.u32 1.1754944e-38, %v1771
      %v1773 = vsel %vm1770, %v1772, %v1768
      %v1774 = vmul.f32 1.0, %v1773
      %v1775 = vrcp.pop %v1689
      %v1776 = vmul.f32 %v1689, %v1775
      %v1777 = vsub.f32 1.0, %v1776
      %v1778 = vmul.f32 %v1775, %v1777
      %v1779 = vadd.f32 %v1775, %v1778
      %vm1780 = vweird.f32 %v1689
      %vm1781 = vweird.f32 %v1775
      %vm1782 = vmor %vm1780, %vm1781
      %v1783 = vsel %vm1782, %v1775, %v1779
      %v1784 = vand.u32 2147483647, %v1689
      %vm1785 = vcmp.eq.f32.partialorder %v1784, 8.507059e+37
      %v1786 = vand.u32 %v1689, 2147483648
      %v1787 = vor.u32 1.1754944e-38, %v1786
      %v1788 = vsel %vm1785, %v1787, %v1783
      %v1789 = vmul.f32 1.0, %v1788
      %v1790 = vrcp.pop %v1690
      %v1791 = vmul.f32 %v1690, %v1790
      %v1792 = vsub.f32 1.0, %v1791
      %v1793 = vmul.f32 %v1790, %v1792
      %v1794 = vadd.f32 %v1790, %v1793
      %vm1795 = vweird.f32 %v1690
      %vm1796 = vweird.f32 %v1790
      %vm1797 = vmor %vm1795, %vm1796
      %v1798 = vsel %vm1797, %v1790, %v1794
      %v1799 = vand.u32 2147483647, %v1690
      %vm1800 = vcmp.eq.f32.partialorder %v1799, 8.507059e+37
      %v1801 = vand.u32 %v1690, 2147483648
      %v1802 = vor.u32 1.1754944e-38, %v1801
      %v1803 = vsel %vm1800, %v1802, %v1798
      %v1804 = vmul.f32 1.0, %v1803
      %v1805 = vrcp.pop %v1691
      %v1806 = vmul.f32 %v1691, %v1805
      %v1807 = vsub.f32 1.0, %v1806
      %v1808 = vmul.f32 %v1805, %v1807
      %v1809 = vadd.f32 %v1805, %v1808
      %vm1810 = vweird.f32 %v1691
      %vm1811 = vweird.f32 %v1805
      %vm1812 = vmor %vm1810, %vm1811
      %v1813 = vsel %vm1812, %v1805, %v1809
      %v1814 = vand.u32 2147483647, %v1691
      %vm1815 = vcmp.eq.f32.partialorder %v1814, 8.507059e+37
      %v1816 = vand.u32 %v1691, 2147483648
      %v1817 = vor.u32 1.1754944e-38, %v1816
      %v1818 = vsel %vm1815, %v1817, %v1813
      %v1819 = vmul.f32 1.0, %v1818
      %v1820 = vrcp.pop %v1692
      %v1821 = vmul.f32 %v1692, %v1820
      %v1822 = vsub.f32 1.0, %v1821
      %v1823 = vmul.f32 %v1820, %v1822
      %v1824 = vadd.f32 %v1820, %v1823
      %vm1825 = vweird.f32 %v1692
      %vm1826 = vweird.f32 %v1820
      %vm1827 = vmor %vm1825, %vm1826
      %v1828 = vsel %vm1827, %v1820, %v1824
      %v1829 = vand.u32 2147483647, %v1692
      %vm1830 = vcmp.eq.f32.partialorder %v1829, 8.507059e+37
      %v1831 = vand.u32 %v1692, 2147483648
      %v1832 = vor.u32 1.1754944e-38, %v1831
      %v1833 = vsel %vm1830, %v1832, %v1828
      %v1834 = vmul.f32 1.0, %v1833
      %v1835 = vrcp.pop %v1693
      %v1836 = vmul.f32 %v1693, %v1835
      %v1837 = vsub.f32 1.0, %v1836
      %v1838 = vmul.f32 %v1835, %v1837
      %v1839 = vadd.f32 %v1835, %v1838
      %vm1840 = vweird.f32 %v1693
      %vm1841 = vweird.f32 %v1835
      %vm1842 = vmor %vm1840, %vm1841
      %v1843 = vsel %vm1842, %v1835, %v1839
      %v1844 = vand.u32 2147483647, %v1693
      %vm1845 = vcmp.eq.f32.partialorder %v1844, 8.507059e+37
      %v1846 = vand.u32 %v1693, 2147483648
      %v1847 = vor.u32 1.1754944e-38, %v1846
      %v1848 = vsel %vm1845, %v1847, %v1843
      %v1849 = vmul.f32 1.0, %v1848
      %v1850 = vrcp.pop %v1694
      %v1851 = vmul.f32 %v1694, %v1850
      %v1852 = vsub.f32 1.0, %v1851
      %v1853 = vmul.f32 %v1850, %v1852
      %v1854 = vadd.f32 %v1850, %v1853
      %vm1855 = vweird.f32 %v1694
      %vm1856 = vweird.f32 %v1850
      %vm1857 = vmor %vm1855, %vm1856
      %v1858 = vsel %vm1857, %v1850, %v1854
      %v1859 = vand.u32 2147483647, %v1694
      %vm1860 = vcmp.eq.f32.partialorder %v1859, 8.507059e+37
      %v1861 = vand.u32 %v1694, 2147483648
      %v1862 = vor.u32 1.1754944e-38, %v1861
      %v1863 = vsel %vm1860, %v1862, %v1858
      %v1864 = vmul.f32 1.0, %v1863
      %v1865 = vrcp.pop %v1695
      %v1866 = vmul.f32 %v1695, %v1865
      %v1867 = vsub.f32 1.0, %v1866
      %v1868 = vmul.f32 %v1865, %v1867
      %v1869 = vadd.f32 %v1865, %v1868
      %vm1870 = vweird.f32 %v1695
      %vm1871 = vweird.f32 %v1865
      %vm1872 = vmor %vm1870, %vm1871
      %v1873 = vsel %vm1872, %v1865, %v1869
      %v1874 = vand.u32 2147483647, %v1695
      %vm1875 = vcmp.eq.f32.partialorder %v1874, 8.507059e+37
      %v1876 = vand.u32 %v1695, 2147483648
      %v1877 = vor.u32 1.1754944e-38, %v1876
      %v1878 = vsel %vm1875, %v1877, %v1873
      %v1879 = vmul.f32 1.0, %v1878
      %v1880 = vrcp.pop %v1696
      %v1881 = vmul.f32 %v1696, %v1880
      %v1882 = vsub.f32 1.0, %v1881
      %v1883 = vmul.f32 %v1880, %v1882
      %v1884 = vadd.f32 %v1880, %v1883
      %vm1885 = vweird.f32 %v1696
      %vm1886 = vweird.f32 %v1880
      %vm1887 = vmor %vm1885, %vm1886
      %v1888 = vsel %vm1887, %v1880, %v1884
      %v1889 = vand.u32 2147483647, %v1696
      %vm1890 = vcmp.eq.f32.partialorder %v1889, 8.507059e+37
      %v1891 = vand.u32 %v1696, 2147483648
      %v1892 = vor.u32 1.1754944e-38, %v1891
      %v1893 = vsel %vm1890, %v1892, %v1888
      %v1894 = vmul.f32 1.0, %v1893
      %v1895 = vrcp.pop %v1697
      %v1896 = vmul.f32 %v1697, %v1895
      %v1897 = vsub.f32 1.0, %v1896
      %v1898 = vmul.f32 %v1895, %v1897
      %v1899 = vadd.f32 %v1895, %v1898
      %vm1900 = vweird.f32 %v1697
      %vm1901 = vweird.f32 %v1895
      %vm1902 = vmor %vm1900, %vm1901
      %v1903 = vsel %vm1902, %v1895, %v1899
      %v1904 = vand.u32 2147483647, %v1697
      %vm1905 = vcmp.eq.f32.partialorder %v1904, 8.507059e+37
      %v1906 = vand.u32 %v1697, 2147483648
      %v1907 = vor.u32 1.1754944e-38, %v1906
      %v1908 = vsel %vm1905, %v1907, %v1903
      %v1909 = vmul.f32 1.0, %v1908
      %v1910 = vrcp.pop %v1698
      %v1911 = vmul.f32 %v1698, %v1910
      %v1912 = vsub.f32 1.0, %v1911
      %v1913 = vmul.f32 %v1910, %v1912
      %v1914 = vadd.f32 %v1910, %v1913
      %vm1915 = vweird.f32 %v1698
      %vm1916 = vweird.f32 %v1910
      %vm1917 = vmor %vm1915, %vm1916
      %v1918 = vsel %vm1917, %v1910, %v1914
      %v1919 = vand.u32 2147483647, %v1698
      %vm1920 = vcmp.eq.f32.partialorder %v1919, 8.507059e+37
      %v1921 = vand.u32 %v1698, 2147483648
      %v1922 = vor.u32 1.1754944e-38, %v1921
      %v1923 = vsel %vm1920, %v1922, %v1918
      %v1924 = vmul.f32 1.0, %v1923
      %v1925 = vrcp.pop %v1699
      %v1926 = vmul.f32 %v1699, %v1925
      %v1927 = vsub.f32 1.0, %v1926
      %v1928 = vmul.f32 %v1925, %v1927
      %v1929 = vadd.f32 %v1925, %v1928
      %vm1930 = vweird.f32 %v1699
      %vm1931 = vweird.f32 %v1925
      %vm1932 = vmor %vm1930, %vm1931
      %v1933 = vsel %vm1932, %v1925, %v1929
      %v1934 = vand.u32 2147483647, %v1699
      %vm1935 = vcmp.eq.f32.partialorder %v1934, 8.507059e+37
      %v1936 = vand.u32 %v1699, 2147483648
      %v1937 = vor.u32 1.1754944e-38, %v1936
      %v1938 = vsel %vm1935, %v1937, %v1933
      %v1939 = vmul.f32 1.0, %v1938
      %v1940 = vld [vmem:[%s406] sm:$0xff]
      %v1941 = vld [vmem:[%s406 + $0x8] sm:$0xff]
      %v1942 = vld [vmem:[%s406 + $0x10] sm:$0xff]
      %v1943 = vld [vmem:[%s406 + $0x18] sm:$0xff]
      %v1944 = vld [vmem:[%s406 + $0x20] sm:$0xff]
      %v1945 = vld [vmem:[%s406 + $0x28] sm:$0xff]
      %v1946 = vld [vmem:[%s406 + $0x30] sm:$0xff]
      %v1947 = vld [vmem:[%s406 + $0x38] sm:$0xff]
      %v1948 = vld [vmem:[%s406 + $0x40] sm:$0xff]
      %v1949 = vld [vmem:[%s406 + $0x48] sm:$0xff]
      %v1950 = vld [vmem:[%s406 + $0x50] sm:$0xff]
      %v1951 = vld [vmem:[%s406 + $0x58] sm:$0xff]
      %v1952 = vld [vmem:[%s406 + $0x60] sm:$0xff]
      %v1953 = vld [vmem:[%s406 + $0x68] sm:$0xff]
      %v1954 = vld [vmem:[%s406 + $0x70] sm:$0xff]
      %v1955 = vld [vmem:[%s406 + $0x78] sm:$0xff]
      %v1956 = vld [vmem:[%s417] sm:$0xff]
      %v1957 = vld [vmem:[%s417 + $0x8] sm:$0xff]
      %v1958 = vld [vmem:[%s417 + $0x10] sm:$0xff]
      %v1959 = vld [vmem:[%s417 + $0x18] sm:$0xff]
      %v1960 = vld [vmem:[%s417 + $0x20] sm:$0xff]
      %v1961 = vld [vmem:[%s417 + $0x28] sm:$0xff]
      %v1962 = vld [vmem:[%s417 + $0x30] sm:$0xff]
      %v1963 = vld [vmem:[%s417 + $0x38] sm:$0xff]
      %v1964 = vld [vmem:[%s417 + $0x40] sm:$0xff]
      %v1965 = vld [vmem:[%s417 + $0x48] sm:$0xff]
      %v1966 = vld [vmem:[%s417 + $0x50] sm:$0xff]
      %v1967 = vld [vmem:[%s417 + $0x58] sm:$0xff]
      %v1968 = vld [vmem:[%s417 + $0x60] sm:$0xff]
      %v1969 = vld [vmem:[%s417 + $0x68] sm:$0xff]
      %v1970 = vld [vmem:[%s417 + $0x70] sm:$0xff]
      %v1971 = vld [vmem:[%s417 + $0x78] sm:$0xff]
      %v1972 = vld [vmem:[%s428] sm:$0xff]
      %v1973 = vld [vmem:[%s428 + $0x8] sm:$0xff]
      %v1974 = vld [vmem:[%s428 + $0x10] sm:$0xff]
      %v1975 = vld [vmem:[%s428 + $0x18] sm:$0xff]
      %v1976 = vld [vmem:[%s428 + $0x20] sm:$0xff]
      %v1977 = vld [vmem:[%s428 + $0x28] sm:$0xff]
      %v1978 = vld [vmem:[%s428 + $0x30] sm:$0xff]
      %v1979 = vld [vmem:[%s428 + $0x38] sm:$0xff]
      %v1980 = vld [vmem:[%s428 + $0x40] sm:$0xff]
      %v1981 = vld [vmem:[%s428 + $0x48] sm:$0xff]
      %v1982 = vld [vmem:[%s428 + $0x50] sm:$0xff]
      %v1983 = vld [vmem:[%s428 + $0x58] sm:$0xff]
      %v1984 = vld [vmem:[%s428 + $0x60] sm:$0xff]
      %v1985 = vld [vmem:[%s428 + $0x68] sm:$0xff]
      %v1986 = vld [vmem:[%s428 + $0x70] sm:$0xff]
      %v1987 = vld [vmem:[%s428 + $0x78] sm:$0xff]
      %s1988 = sld [smem:[#allocation3]]
      %v1989 = vstv %s1988
      %v1990 = vmul.f32 %v1989, %v1956
      %v1991 = vmul.f32 %v1989, %v1957
      %v1992 = vmul.f32 %v1989, %v1958
      %v1993 = vmul.f32 %v1989, %v1959
      %v1994 = vmul.f32 %v1989, %v1960
      %v1995 = vmul.f32 %v1989, %v1961
      %v1996 = vmul.f32 %v1989, %v1962
      %v1997 = vmul.f32 %v1989, %v1963
      %v1998 = vmul.f32 %v1989, %v1964
      %v1999 = vmul.f32 %v1989, %v1965
      %v2000 = vmul.f32 %v1989, %v1966
      %v2001 = vmul.f32 %v1989, %v1967
      %v2002 = vmul.f32 %v1989, %v1968
      %v2003 = vmul.f32 %v1989, %v1969
      %v2004 = vmul.f32 %v1989, %v1970
      %v2005 = vmul.f32 %v1989, %v1971
      %s2006 = ssub.f32 1.0, %s1988
      %v2007 = vstv %s2006
      %v2008 = vmul.f32 %v2007, %v1972
      %v2009 = vmul.f32 %v2007, %v1973
      %v2010 = vmul.f32 %v2007, %v1974
      %v2011 = vmul.f32 %v2007, %v1975
      %v2012 = vmul.f32 %v2007, %v1976
      %v2013 = vmul.f32 %v2007, %v1977
      %v2014 = vmul.f32 %v2007, %v1978
      %v2015 = vmul.f32 %v2007, %v1979
      %v2016 = vmul.f32 %v2007, %v1980
      %v2017 = vmul.f32 %v2007, %v1981
      %v2018 = vmul.f32 %v2007, %v1982
      %v2019 = vmul.f32 %v2007, %v1983
      %v2020 = vmul.f32 %v2007, %v1984
      %v2021 = vmul.f32 %v2007, %v1985
      %v2022 = vmul.f32 %v2007, %v1986
      %v2023 = vmul.f32 %v2007, %v1987
      %v2024 = vadd.f32 %v1990, %v2008
      %v2025 = vadd.f32 %v1991, %v2009
      %v2026 = vadd.f32 %v1992, %v2010
      %v2027 = vadd.f32 %v1993, %v2011
      %v2028 = vadd.f32 %v1994, %v2012
      %v2029 = vadd.f32 %v1995, %v2013
      %v2030 = vadd.f32 %v1996, %v2014
      %v2031 = vadd.f32 %v1997, %v2015
      %v2032 = vadd.f32 %v1998, %v2016
      %v2033 = vadd.f32 %v1999, %v2017
      %v2034 = vadd.f32 %v2000, %v2018
      %v2035 = vadd.f32 %v2001, %v2019
      %v2036 = vadd.f32 %v2002, %v2020
      %v2037 = vadd.f32 %v2003, %v2021
      %v2038 = vadd.f32 %v2004, %v2022
      %v2039 = vadd.f32 %v2005, %v2023
      %v2040 = vsub.f32 %v2024, %v1604
      %v2041 = vsub.f32 %v2025, %v1605
      %v2042 = vsub.f32 %v2026, %v1606
      %v2043 = vsub.f32 %v2027, %v1607
      %v2044 = vsub.f32 %v2028, %v1608
      %v2045 = vsub.f32 %v2029, %v1609
      %v2046 = vsub.f32 %v2030, %v1610
      %v2047 = vsub.f32 %v2031, %v1611
      %v2048 = vsub.f32 %v2032, %v1612
      %v2049 = vsub.f32 %v2033, %v1613
      %v2050 = vsub.f32 %v2034, %v1614
      %v2051 = vsub.f32 %v2035, %v1615
      %v2052 = vsub.f32 %v2036, %v1616
      %v2053 = vsub.f32 %v2037, %v1617
      %v2054 = vsub.f32 %v2038, %v1618
      %v2055 = vsub.f32 %v2039, %v1619
      %2072 = vrot.lane.b32.xlu0 %v2040, 8
      %v2073 = vpop.permute.xlu0 %2072
      %2074 = vrot.lane.b32.xlu0 %v2041, 8
      %v2075 = vpop.permute.xlu0 %2074
      %2076 = vrot.lane.b32.xlu0 %v2042, 8
      %v2077 = vpop.permute.xlu0 %2076
      %2078 = vrot.lane.b32.xlu0 %v2043, 8
      %v2079 = vpop.permute.xlu0 %2078
      %2080 = vrot.lane.b32.xlu0 %v2044, 8
      %v2081 = vpop.permute.xlu0 %2080
      %2082 = vrot.lane.b32.xlu0 %v2045, 8
      %v2083 = vpop.permute.xlu0 %2082
      %2084 = vrot.lane.b32.xlu0 %v2046, 8
      %v2085 = vpop.permute.xlu0 %2084
      %2086 = vrot.lane.b32.xlu0 %v2047, 8
      %v2087 = vpop.permute.xlu0 %2086
      %2088 = vrot.lane.b32.xlu0 %v2048, 8
      %v2089 = vpop.permute.xlu0 %2088
      %2090 = vrot.lane.b32.xlu0 %v2049, 8
      %v2091 = vpop.permute.xlu0 %2090
      %2092 = vrot.lane.b32.xlu0 %v2050, 8
      %v2093 = vpop.permute.xlu0 %2092
      %2094 = vrot.lane.b32.xlu0 %v2051, 8
      %v2095 = vpop.permute.xlu0 %2094
      %2096 = vrot.lane.b32.xlu0 %v2052, 8
      %v2097 = vpop.permute.xlu0 %2096
      %2098 = vrot.lane.b32.xlu0 %v2053, 8
      %v2099 = vpop.permute.xlu0 %2098
      %2100 = vrot.lane.b32.xlu0 %v2054, 8
      %v2101 = vpop.permute.xlu0 %2100
      %2102 = vrot.lane.b32.xlu0 %v2055, 8
      %v2103 = vpop.permute.xlu0 %2102
      %v2120 = vmul.f32 %v1714, %v2073
      %v2121 = vmul.f32 %v1729, %v2075
      %v2122 = vmul.f32 %v1744, %v2077
      %v2123 = vmul.f32 %v1759, %v2079
      %v2124 = vmul.f32 %v1774, %v2081
      %v2125 = vmul.f32 %v1789, %v2083
      %v2126 = vmul.f32 %v1804, %v2085
      %v2127 = vmul.f32 %v1819, %v2087
      %v2128 = vmul.f32 %v1834, %v2089
      %v2129 = vmul.f32 %v1849, %v2091
      %v2130 = vmul.f32 %v1864, %v2093
      %v2131 = vmul.f32 %v1879, %v2095
      %v2132 = vmul.f32 %v1894, %v2097
      %v2133 = vmul.f32 %v1909, %v2099
      %v2134 = vmul.f32 %v1924, %v2101
      %v2135 = vmul.f32 %v1939, %v2103
      %2152 = vrot.lane.b32.xlu0 %v1604, 8
      %v2153 = vpop.permute.xlu0 %2152
      %2154 = vrot.lane.b32.xlu0 %v1605, 8
      %v2155 = vpop.permute.xlu0 %2154
      %2156 = vrot.lane.b32.xlu0 %v1606, 8
      %v2157 = vpop.permute.xlu0 %2156
      %2158 = vrot.lane.b32.xlu0 %v1607, 8
      %v2159 = vpop.permute.xlu0 %2158
      %2160 = vrot.lane.b32.xlu0 %v1608, 8
      %v2161 = vpop.permute.xlu0 %2160
      %2162 = vrot.lane.b32.xlu0 %v1609, 8
      %v2163 = vpop.permute.xlu0 %2162
      %2164 = vrot.lane.b32.xlu0 %v1610, 8
      %v2165 = vpop.permute.xlu0 %2164
      %2166 = vrot.lane.b32.xlu0 %v1611, 8
      %v2167 = vpop.permute.xlu0 %2166
      %2168 = vrot.lane.b32.xlu0 %v1612, 8
      %v2169 = vpop.permute.xlu0 %2168
      %2170 = vrot.lane.b32.xlu0 %v1613, 8
      %v2171 = vpop.permute.xlu0 %2170
      %2172 = vrot.lane.b32.xlu0 %v1614, 8
      %v2173 = vpop.permute.xlu0 %2172
      %2174 = vrot.lane.b32.xlu0 %v1615, 8
      %v2175 = vpop.permute.xlu0 %2174
      %2176 = vrot.lane.b32.xlu0 %v1616, 8
      %v2177 = vpop.permute.xlu0 %2176
      %2178 = vrot.lane.b32.xlu0 %v1617, 8
      %v2179 = vpop.permute.xlu0 %2178
      %2180 = vrot.lane.b32.xlu0 %v1618, 8
      %v2181 = vpop.permute.xlu0 %2180
      %2182 = vrot.lane.b32.xlu0 %v1619, 8
      %v2183 = vpop.permute.xlu0 %2182
      %v2200 = vadd.f32 %v2120, %v2153
      %v2201 = vadd.f32 %v2121, %v2155
      %v2202 = vadd.f32 %v2122, %v2157
      %v2203 = vadd.f32 %v2123, %v2159
      %v2204 = vadd.f32 %v2124, %v2161
      %v2205 = vadd.f32 %v2125, %v2163
      %v2206 = vadd.f32 %v2126, %v2165
      %v2207 = vadd.f32 %v2127, %v2167
      %v2208 = vadd.f32 %v2128, %v2169
      %v2209 = vadd.f32 %v2129, %v2171
      %v2210 = vadd.f32 %v2130, %v2173
      %v2211 = vadd.f32 %v2131, %v2175
      %v2212 = vadd.f32 %v2132, %v2177
      %v2213 = vadd.f32 %v2133, %v2179
      %v2214 = vadd.f32 %v2134, %v2181
      %v2215 = vadd.f32 %v2135, %v2183
      %v2216 = vtanh.pop %v2200
      %v2217 = vtanh.pop %v2201
      %v2218 = vtanh.pop %v2202
      %v2219 = vtanh.pop %v2203
      %v2220 = vtanh.pop %v2204
      %v2221 = vtanh.pop %v2205
      %v2222 = vtanh.pop %v2206
      %v2223 = vtanh.pop %v2207
      %v2224 = vtanh.pop %v2208
      %v2225 = vtanh.pop %v2209
      %v2226 = vtanh.pop %v2210
      %v2227 = vtanh.pop %v2211
      %v2228 = vtanh.pop %v2212
      %v2229 = vtanh.pop %v2213
      %v2230 = vtanh.pop %v2214
      %v2231 = vtanh.pop %v2215
      %2248 = vrot.lane.b32.xlu0 %v1940, 8
      %v2249 = vpop.permute.xlu0 %2248
      %2250 = vrot.lane.b32.xlu0 %v1941, 8
      %v2251 = vpop.permute.xlu0 %2250
      %2252 = vrot.lane.b32.xlu0 %v1942, 8
      %v2253 = vpop.permute.xlu0 %2252
      %2254 = vrot.lane.b32.xlu0 %v1943, 8
      %v2255 = vpop.permute.xlu0 %2254
      %2256 = vrot.lane.b32.xlu0 %v1944, 8
      %v2257 = vpop.permute.xlu0 %2256
      %2258 = vrot.lane.b32.xlu0 %v1945, 8
      %v2259 = vpop.permute.xlu0 %2258
      %2260 = vrot.lane.b32.xlu0 %v1946, 8
      %v2261 = vpop.permute.xlu0 %2260
      %2262 = vrot.lane.b32.xlu0 %v1947, 8
      %v2263 = vpop.permute.xlu0 %2262
      %2264 = vrot.lane.b32.xlu0 %v1948, 8
      %v2265 = vpop.permute.xlu0 %2264
      %2266 = vrot.lane.b32.xlu0 %v1949, 8
      %v2267 = vpop.permute.xlu0 %2266
      %2268 = vrot.lane.b32.xlu0 %v1950, 8
      %v2269 = vpop.permute.xlu0 %2268
      %2270 = vrot.lane.b32.xlu0 %v1951, 8
      %v2271 = vpop.permute.xlu0 %2270
      %2272 = vrot.lane.b32.xlu0 %v1952, 8
      %v2273 = vpop.permute.xlu0 %2272
      %2274 = vrot.lane.b32.xlu0 %v1953, 8
      %v2275 = vpop.permute.xlu0 %2274
      %2276 = vrot.lane.b32.xlu0 %v1954, 8
      %v2277 = vpop.permute.xlu0 %2276
      %2278 = vrot.lane.b32.xlu0 %v1955, 8
      %v2279 = vpop.permute.xlu0 %2278
      %v2296 = vsub.f32 %v2216, %v2249
      %v2297 = vsub.f32 %v2217, %v2251
      %v2298 = vsub.f32 %v2218, %v2253
      %v2299 = vsub.f32 %v2219, %v2255
      %v2300 = vsub.f32 %v2220, %v2257
      %v2301 = vsub.f32 %v2221, %v2259
      %v2302 = vsub.f32 %v2222, %v2261
      %v2303 = vsub.f32 %v2223, %v2263
      %v2304 = vsub.f32 %v2224, %v2265
      %v2305 = vsub.f32 %v2225, %v2267
      %v2306 = vsub.f32 %v2226, %v2269
      %v2307 = vsub.f32 %v2227, %v2271
      %v2308 = vsub.f32 %v2228, %v2273
      %v2309 = vsub.f32 %v2229, %v2275
      %v2310 = vsub.f32 %v2230, %v2277
      %v2311 = vsub.f32 %v2231, %v2279
      %2328 = vrot.lane.b32.xlu0 %v2296, 8
      %v2329 = vpop.permute.xlu0 %2328
      %2330 = vrot.lane.b32.xlu0 %v2297, 8
      %v2331 = vpop.permute.xlu0 %2330
      %2332 = vrot.lane.b32.xlu0 %v2298, 8
      %v2333 = vpop.permute.xlu0 %2332
      %2334 = vrot.lane.b32.xlu0 %v2299, 8
      %v2335 = vpop.permute.xlu0 %2334
      %2336 = vrot.lane.b32.xlu0 %v2300, 8
      %v2337 = vpop.permute.xlu0 %2336
      %2338 = vrot.lane.b32.xlu0 %v2301, 8
      %v2339 = vpop.permute.xlu0 %2338
      %2340 = vrot.lane.b32.xlu0 %v2302, 8
      %v2341 = vpop.permute.xlu0 %2340
      %2342 = vrot.lane.b32.xlu0 %v2303, 8
      %v2343 = vpop.permute.xlu0 %2342
      %2344 = vrot.lane.b32.xlu0 %v2304, 8
      %v2345 = vpop.permute.xlu0 %2344
      %2346 = vrot.lane.b32.xlu0 %v2305, 8
      %v2347 = vpop.permute.xlu0 %2346
      %2348 = vrot.lane.b32.xlu0 %v2306, 8
      %v2349 = vpop.permute.xlu0 %2348
      %2350 = vrot.lane.b32.xlu0 %v2307, 8
      %v2351 = vpop.permute.xlu0 %2350
      %2352 = vrot.lane.b32.xlu0 %v2308, 8
      %v2353 = vpop.permute.xlu0 %2352
      %2354 = vrot.lane.b32.xlu0 %v2309, 8
      %v2355 = vpop.permute.xlu0 %2354
      %2356 = vrot.lane.b32.xlu0 %v2310, 8
      %v2357 = vpop.permute.xlu0 %2356
      %2358 = vrot.lane.b32.xlu0 %v2311, 8
      %v2359 = vpop.permute.xlu0 %2358
      %v2376 = vmul.f32 %v1714, %v2329
      %v2377 = vmul.f32 %v1729, %v2331
      %v2378 = vmul.f32 %v1744, %v2333
      %v2379 = vmul.f32 %v1759, %v2335
      %v2380 = vmul.f32 %v1774, %v2337
      %v2381 = vmul.f32 %v1789, %v2339
      %v2382 = vmul.f32 %v1804, %v2341
      %v2383 = vmul.f32 %v1819, %v2343
      %v2384 = vmul.f32 %v1834, %v2345
      %v2385 = vmul.f32 %v1849, %v2347
      %v2386 = vmul.f32 %v1864, %v2349
      %v2387 = vmul.f32 %v1879, %v2351
      %v2388 = vmul.f32 %v1894, %v2353
      %v2389 = vmul.f32 %v1909, %v2355
      %v2390 = vmul.f32 %v1924, %v2357
      %v2391 = vmul.f32 %v1939, %v2359
      %2392 = vrot.lane.b32.xlu0 %v1940, 16
      %v2393 = vpop.permute.xlu0 %2392
      %2394 = vrot.lane.b32.xlu0 %v1941, 16
      %v2395 = vpop.permute.xlu0 %2394
      %2396 = vrot.lane.b32.xlu0 %v1942, 16
      %v2397 = vpop.permute.xlu0 %2396
      %2398 = vrot.lane.b32.xlu0 %v1943, 16
      %v2399 = vpop.permute.xlu0 %2398
      %2400 = vrot.lane.b32.xlu0 %v1944, 16
      %v2401 = vpop.permute.xlu0 %2400
      %2402 = vrot.lane.b32.xlu0 %v1945, 16
      %v2403 = vpop.permute.xlu0 %2402
      %2404 = vrot.lane.b32.xlu0 %v1946, 16
      %v2405 = vpop.permute.xlu0 %2404
      %2406 = vrot.lane.b32.xlu0 %v1947, 16
      %v2407 = vpop.permute.xlu0 %2406
      %2408 = vrot.lane.b32.xlu0 %v1948, 16
      %v2409 = vpop.permute.xlu0 %2408
      %2410 = vrot.lane.b32.xlu0 %v1949, 16
      %v2411 = vpop.permute.xlu0 %2410
      %2412 = vrot.lane.b32.xlu0 %v1950, 16
      %v2413 = vpop.permute.xlu0 %2412
      %2414 = vrot.lane.b32.xlu0 %v1951, 16
      %v2415 = vpop.permute.xlu0 %2414
      %2416 = vrot.lane.b32.xlu0 %v1952, 16
      %v2417 = vpop.permute.xlu0 %2416
      %2418 = vrot.lane.b32.xlu0 %v1953, 16
      %v2419 = vpop.permute.xlu0 %2418
      %2420 = vrot.lane.b32.xlu0 %v1954, 16
      %v2421 = vpop.permute.xlu0 %2420
      %2422 = vrot.lane.b32.xlu0 %v1955, 16
      %v2423 = vpop.permute.xlu0 %2422
      %v2440 = vadd.f32 %v2376, %v2393
      %v2441 = vadd.f32 %v2377, %v2395
      %v2442 = vadd.f32 %v2378, %v2397
      %v2443 = vadd.f32 %v2379, %v2399
      %v2444 = vadd.f32 %v2380, %v2401
      %v2445 = vadd.f32 %v2381, %v2403
      %v2446 = vadd.f32 %v2382, %v2405
      %v2447 = vadd.f32 %v2383, %v2407
      %v2448 = vadd.f32 %v2384, %v2409
      %v2449 = vadd.f32 %v2385, %v2411
      %v2450 = vadd.f32 %v2386, %v2413
      %v2451 = vadd.f32 %v2387, %v2415
      %v2452 = vadd.f32 %v2388, %v2417
      %v2453 = vadd.f32 %v2389, %v2419
      %v2454 = vadd.f32 %v2390, %v2421
      %v2455 = vadd.f32 %v2391, %v2423
      %2472 = vrot.lane.b32.xlu0 %v2440, 112
      %v2473 = vpop.permute.xlu0 %2472
      %2474 = vrot.lane.b32.xlu0 %v2441, 112
      %v2475 = vpop.permute.xlu0 %2474
      %2476 = vrot.lane.b32.xlu0 %v2442, 112
      %v2477 = vpop.permute.xlu0 %2476
      %2478 = vrot.lane.b32.xlu0 %v2443, 112
      %v2479 = vpop.permute.xlu0 %2478
      %2480 = vrot.lane.b32.xlu0 %v2444, 112
      %v2481 = vpop.permute.xlu0 %2480
      %2482 = vrot.lane.b32.xlu0 %v2445, 112
      %v2483 = vpop.permute.xlu0 %2482
      %2484 = vrot.lane.b32.xlu0 %v2446, 112
      %v2485 = vpop.permute.xlu0 %2484
      %2486 = vrot.lane.b32.xlu0 %v2447, 112
      %v2487 = vpop.permute.xlu0 %2486
      %2488 = vrot.lane.b32.xlu0 %v2448, 112
      %v2489 = vpop.permute.xlu0 %2488
      %2490 = vrot.lane.b32.xlu0 %v2449, 112
      %v2491 = vpop.permute.xlu0 %2490
      %2492 = vrot.lane.b32.xlu0 %v2450, 112
      %v2493 = vpop.permute.xlu0 %2492
      %2494 = vrot.lane.b32.xlu0 %v2451, 112
      %v2495 = vpop.permute.xlu0 %2494
      %2496 = vrot.lane.b32.xlu0 %v2452, 112
      %v2497 = vpop.permute.xlu0 %2496
      %2498 = vrot.lane.b32.xlu0 %v2453, 112
      %v2499 = vpop.permute.xlu0 %2498
      %2500 = vrot.lane.b32.xlu0 %v2454, 112
      %v2501 = vpop.permute.xlu0 %2500
      %2502 = vrot.lane.b32.xlu0 %v2455, 112
      %v2503 = vpop.permute.xlu0 %2502
      %2520 = vst.msk [vmem:[%s439] sm:$0xff] %vm481, %v2473
      %2521 = vst.msk [vmem:[%s439 + $0x8] sm:$0xff] %vm481, %v2475
      %2522 = vst.msk [vmem:[%s439 + $0x10] sm:$0xff] %vm481, %v2477
      %2523 = vst.msk [vmem:[%s439 + $0x18] sm:$0xff] %vm481, %v2479
      %2524 = vst.msk [vmem:[%s439 + $0x20] sm:$0xff] %vm481, %v2481
      %2525 = vst.msk [vmem:[%s439 + $0x28] sm:$0xff] %vm481, %v2483
      %2526 = vst.msk [vmem:[%s439 + $0x30] sm:$0xff] %vm481, %v2485
      %2527 = vst.msk [vmem:[%s439 + $0x38] sm:$0xff] %vm481, %v2487
      %2528 = vst.msk [vmem:[%s439 + $0x40] sm:$0xff] %vm481, %v2489
      %2529 = vst.msk [vmem:[%s439 + $0x48] sm:$0xff] %vm481, %v2491
      %2530 = vst.msk [vmem:[%s439 + $0x50] sm:$0xff] %vm481, %v2493
      %2531 = vst.msk [vmem:[%s439 + $0x58] sm:$0xff] %vm481, %v2495
      %2532 = vst.msk [vmem:[%s439 + $0x60] sm:$0xff] %vm481, %v2497
      %2533 = vst.msk [vmem:[%s439 + $0x68] sm:$0xff] %vm481, %v2499
      %2534 = vst.msk [vmem:[%s439 + $0x70] sm:$0xff] %vm481, %v2501
      %2535 = vst.msk [vmem:[%s439 + $0x78] sm:$0xff] %vm481, %v2503
      %s2536 = smul.u32 8, %s24
      %p2537 = scmp.lt.s32.totalorder %s23, 1
      %s2538 = scalar_select %p2537, %s23, 1
      %p2539 = scmp.lt.s32.totalorder %s2536, 15
      %s2540 = scalar_select %p2539, %s2536, 15
      %s2541 = smul.addr %s2540, 2
      %s2542 = smul.addr %s2538, 32
      %s2543 = sadd.s32 %s2541, %s2542
      %s2544 = smul.addr %s2543, 8
      %s2545 = scalar_lea.vmem %s7, %s2544
      // Predicated region
      $region49: #{tpu_custom_call.1} parent=47 // pred_check
        %p2546 = pneg %p226
      $region50: #{tpu_custom_call.1} parent=47 // pred_check_branch
        %2548 = sbr.rel (%p2546) target = $region52
      $region51: #{tpu_custom_call.1} parent=47 // pred_region
        %s2549 = smul.u32 8, %s24
      $region52: #{tpu_custom_call.1} parent=47 // pred_fallthru
        _
    $region48: #{tpu_custom_call.1} parent=5 // pred_fallthru
      _
    %p2550 = scmp.le.s32.totalorder 2, %s14
    // Predicated region
    $region53: #{tpu_custom_call.1} parent=5 // pred_check
      %p2551 = pneg %p2550
    $region54: #{tpu_custom_call.1} parent=5 // pred_check_branch
      %2553 = sbr.rel (%p2551) target = $region56
    $region55: #{tpu_custom_call.1} parent=5 // pred_region
      %s2554 = ssub.s32 %s14, 2
      // Predicated region
      $region57: #{tpu_custom_call.1} parent=55 // pred_check
        %p2555 = pneg %p232
      $region58: #{tpu_custom_call.1} parent=55 // pred_check_branch
        %2557 = sbr.rel (%p2555) target = $region60
      $region59: #{tpu_custom_call.1} parent=55 // pred_region
        %s2558 = smul.u32 8, %s26
        %p2559 = scmp.lt.s32.totalorder %s25, 1
        %s2560 = scalar_select %p2559, %s25, 1
        %p2561 = scmp.lt.s32.totalorder %s2558, 15
        %s2562 = scalar_select %p2561, %s2558, 15
        %s2563 = smul.addr %s2562, 2
        %s2564 = smul.addr %s2560, 32
        %s2565 = sadd.s32 %s2563, %s2564
        %s2566 = smul.addr %s2565, 8
        %s2567 = scalar_lea.vmem %s7, %s2566
      $region60: #{tpu_custom_call.1} parent=55 // pred_fallthru
        _
    $region56: #{tpu_custom_call.1} parent=5 // pred_fallthru
      _
  $region6: #{tpu_custom_call.1} parent=0 // loop_footer
    %s18 = sadd.s32 1, %s14
  $region7: #{tpu_custom_call.1} parent=0 // loop_footer_branch
    %13 = sbr.rel target = $region3
  $region8: #{tpu_custom_call.1} parent=0 // loop_exit
    _

// kernel: tpu_custom_call.1
$region0: #{tpu_custom_call.1}
  #allocation0 [shape = 'u32[]', space=smem, size = 0x4, offset = 0x4, fixed_abs, tag = 'smem constant byte address 0x4 - core index']
  #allocation1 [shape = 'u32[72,128]{1,0:T(1,128)}', space=vmem, size = 0x9000, scoped, tag = 'internal scratch']
  #allocation2 [shape = 'f32[128,24]{1,0:T(8,128)}', space=vmem, size = 0x10000, scoped, tag = 'scratch operand']
  #allocation3 [shape = 'f32[1,1]{1,0:T(1,128)S(6)}', space=smem, size = 0x200, scoped, tag = 'scoped memory for tpu_custom_call.1']
  %s0 = inlined_call_operand.<no memory space> [shape: f32[1,1], index: 0, kind: input, shape index: {}]
  %s1 = inlined_call_operand.vmem [shape: f32[2,20,24,8], index: 1, kind: input, shape index: {}]
  %s2 = inlined_call_operand.vmem [shape: f32[2,16,16,8], index: 2, kind: input, shape index: {}]
  %s3 = inlined_call_operand.vmem [shape: f32[2,16,16,8], index: 3, kind: input, shape index: {}]
  %s4 = inlined_call_operand.vmem [shape: f32[2,16,16,8], index: 4, kind: input, shape index: {}]
  %s5 = inlined_call_operand.vmem [shape: bf16[3,3,8,24], index: 5, kind: input, shape index: {}]
  %s6 = inlined_call_operand.vmem [shape: f32[1,24], index: 6, kind: input, shape index: {}]
  %s7 = inlined_call_operand.vmem [shape: f32[2,16,16,8], index: 7, kind: output, shape index: {}]
  %s8 = sld [smem:[#allocation0]]
  $region61: #{tpu_custom_call.1} parent=0
    _
  %s10 = ssub.s32 1, %s8
  %s11 = scalar_select 0, %s10, %s8
  %12 = sst [smem:[#allocation3]] %s0
  loop: start=0, step=1, limit=6
  $region2: #{tpu_custom_call.1} parent=0 // loop_pre_header
    _
  $region3: #{tpu_custom_call.1} parent=0 // loop_header
    %s14 = sphi 0, %s18
    %p15 = scmp.ge.s32.totalorder %s14, 6
    %s21 = sphi 0, %s33
    %s22 = sphi 0, %s29
    %s23 = sphi 0, %s21
    %s24 = sphi 0, %s22
    %s25 = sphi 0, %s23
    %s26 = sphi 0, %s24
    %s34 = sphi 0, %s34
    %s36 = sphi 0, %s34
    %s37 = sphi 0, %s36
    %s51 = sphi 0, %s37
    %s59 = sphi 0, %s61
    %s62 = sphi 0, %s59
    %s63 = sphi 0, %s62
    %s79 = sphi 0, %s63
    %s87 = sphi 0, %s89
    %s90 = sphi 0, %s87
    %s91 = sphi 0, %s90
    %s107 = sphi 0, %s91
    %s115 = sphi 0, %s117
    %s118 = sphi 0, %s115
    %s119 = sphi 0, %s118
    %s135 = sphi 0, %s119
    %s143 = sphi 0, %s145
    %s146 = sphi 0, %s143
    %s147 = sphi 0, %s146
    %s163 = sphi 0, %s147
    %s167 = sphi 0, %s167
    %s169 = sphi 0, %s167
    %s170 = sphi 0, %s169
    %s184 = sphi 0, %s170
    %s188 = sphi 0, %s188
    %s190 = sphi 0, %s188
    %s191 = sphi 0, %s190
    %s205 = sphi 0, %s191
    %s213 = sphi 0, %s215
    %s216 = sphi 0, %s213
    %s217 = sphi 0, %s216
    %s233 = sphi 0, %s217
  $region4: #{tpu_custom_call.1} parent=0 // loop_header_branch
    %17 = sbr.rel (%p15) target = $region8
  $region5: #{tpu_custom_call.1} parent=0 // loop_body
    %s19 = ssub.s32 %s14, 1
    %s20 = ssub.s32 %s14, 2
    %s27 = sadd.s32 1, %s22
    %p28 = scmp.ge.s32.totalorder %s27, 2
    %s29 = scalar_select %p28, 0, %s27
    %s30 = sadd.s32 1, %s21
    %s31 = scalar_select %p28, %s30, %s21
    %p32 = scmp.ge.s32.totalorder %s31, 2
    %s33 = scalar_select %p32, 0, %s31
    %s35 = sadd.s32 %s34, 1
    %p38 = scmp.eq.s32.totalorder %s14, 3
    %p39 = scmp.ne.s32.totalorder %s34, %s36
    %p40 = scmp.eq.s32.totalorder %s14, 0
    %p41 = por %p39, %p40
    %p42 = scmp.ne.s32.totalorder %s34, %s36
    %p43 = scmp.eq.s32.totalorder %s19, 3
    %p44 = por %p42, %p43
    %p45 = scmp.ne.s32.totalorder %s36, %s37
    %p46 = scmp.eq.s32.totalorder %s19, 0
    %p47 = por %p45, %p46
    %p48 = scmp.ne.s32.totalorder %s36, %s37
    %p49 = scmp.eq.s32.totalorder %s20, 3
    %p50 = por %p48, %p49
    %p52 = scmp.ne.s32.totalorder %s37, %s51
    %p53 = scmp.eq.s32.totalorder %s20, 0
    %p54 = por %p52, %p53
    %s55 = ssub.s32 %s21, %s33
    %s56 = ssub.s32 %s22, %s29
    %s57 = sor.u32 %s55, %s56
    %p58 = scmp.eq.s32.totalorder %s57, 0
    %s60 = sadd.s32 %s59, 1
    %s61 = scalar_select %p58, %s59, %s60
    %p64 = pneg %p58
    %p65 = scmp.eq.s32.totalorder %s14, 3
    %p66 = por %p64, %p65
    %p67 = scmp.ne.s32.totalorder %s59, %s62
    %p68 = scmp.eq.s32.totalorder %s14, 0
    %p69 = por %p67, %p68
    %p70 = scmp.ne.s32.totalorder %s59, %s62
    %p71 = scmp.eq.s32.totalorder %s19, 3
    %p72 = por %p70, %p71
    %p73 = scmp.ne.s32.totalorder %s62, %s63
    %p74 = scmp.eq.s32.totalorder %s19, 0
    %p75 = por %p73, %p74
    %p76 = scmp.ne.s32.totalorder %s62, %s63
    %p77 = scmp.eq.s32.totalorder %s20, 3
    %p78 = por %p76, %p77
    %p80 = scmp.ne.s32.totalorder %s63, %s79
    %p81 = scmp.eq.s32.totalorder %s20, 0
    %p82 = por %p80, %p81
    %s83 = ssub.s32 %s21, %s33
    %s84 = ssub.s32 %s22, %s29
    %s85 = sor.u32 %s83, %s84
    %p86 = scmp.eq.s32.totalorder %s85, 0
    %s88 = sadd.s32 %s87, 1
    %s89 = scalar_select %p86, %s87, %s88
    %p92 = pneg %p86
    %p93 = scmp.eq.s32.totalorder %s14, 3
    %p94 = por %p92, %p93
    %p95 = scmp.ne.s32.totalorder %s87, %s90
    %p96 = scmp.eq.s32.totalorder %s14, 0
    %p97 = por %p95, %p96
    %p98 = scmp.ne.s32.totalorder %s87, %s90
    %p99 = scmp.eq.s32.totalorder %s19, 3
    %p100 = por %p98, %p99
    %p101 = scmp.ne.s32.totalorder %s90, %s91
    %p102 = scmp.eq.s32.totalorder %s19, 0
    %p103 = por %p101, %p102
    %p104 = scmp.ne.s32.totalorder %s90, %s91
    %p105 = scmp.eq.s32.totalorder %s20, 3
    %p106 = por %p104, %p105
    %p108 = scmp.ne.s32.totalorder %s91, %s107
    %p109 = scmp.eq.s32.totalorder %s20, 0
    %p110 = por %p108, %p109
    %s111 = ssub.s32 %s21, %s33
    %s112 = ssub.s32 %s22, %s29
    %s113 = sor.u32 %s111, %s112
    %p114 = scmp.eq.s32.totalorder %s113, 0
    %s116 = sadd.s32 %s115, 1
    %s117 = scalar_select %p114, %s115, %s116
    %p120 = pneg %p114
    %p121 = scmp.eq.s32.totalorder %s14, 3
    %p122 = por %p120, %p121
    %p123 = scmp.ne.s32.totalorder %s115, %s118
    %p124 = scmp.eq.s32.totalorder %s14, 0
    %p125 = por %p123, %p124
    %p126 = scmp.ne.s32.totalorder %s115, %s118
    %p127 = scmp.eq.s32.totalorder %s19, 3
    %p128 = por %p126, %p127
    %p129 = scmp.ne.s32.totalorder %s118, %s119
    %p130 = scmp.eq.s32.totalorder %s19, 0
    %p131 = por %p129, %p130
    %p132 = scmp.ne.s32.totalorder %s118, %s119
    %p133 = scmp.eq.s32.totalorder %s20, 3
    %p134 = por %p132, %p133
    %p136 = scmp.ne.s32.totalorder %s119, %s135
    %p137 = scmp.eq.s32.totalorder %s20, 0
    %p138 = por %p136, %p137
    %s139 = ssub.s32 %s21, %s33
    %s140 = ssub.s32 %s22, %s29
    %s141 = sor.u32 %s139, %s140
    %p142 = scmp.eq.s32.totalorder %s141, 0
    %s144 = sadd.s32 %s143, 1
    %s145 = scalar_select %p142, %s143, %s144
    %p148 = pneg %p142
    %p149 = scmp.eq.s32.totalorder %s14, 3
    %p150 = por %p148, %p149
    %p151 = scmp.ne.s32.totalorder %s143, %s146
    %p152 = scmp.eq.s32.totalorder %s14, 0
    %p153 = por %p151, %p152
    %p154 = scmp.ne.s32.totalorder %s143, %s146
    %p155 = scmp.eq.s32.totalorder %s19, 3
    %p156 = por %p154, %p155
    %p157 = scmp.ne.s32.totalorder %s146, %s147
    %p158 = scmp.eq.s32.totalorder %s19, 0
    %p159 = por %p157, %p158
    %p160 = scmp.ne.s32.totalorder %s146, %s147
    %p161 = scmp.eq.s32.totalorder %s20, 3
    %p162 = por %p160, %p161
    %p164 = scmp.ne.s32.totalorder %s147, %s163
    %p165 = scmp.eq.s32.totalorder %s20, 0
    %p166 = por %p164, %p165
    %s168 = sadd.s32 %s167, 1
    %p171 = scmp.eq.s32.totalorder %s14, 3
    %p172 = scmp.ne.s32.totalorder %s167, %s169
    %p173 = scmp.eq.s32.totalorder %s14, 0
    %p174 = por %p172, %p173
    %p175 = scmp.ne.s32.totalorder %s167, %s169
    %p176 = scmp.eq.s32.totalorder %s19, 3
    %p177 = por %p175, %p176
    %p178 = scmp.ne.s32.totalorder %s169, %s170
    %p179 = scmp.eq.s32.totalorder %s19, 0
    %p180 = por %p178, %p179
    %p181 = scmp.ne.s32.totalorder %s169, %s170
    %p182 = scmp.eq.s32.totalorder %s20, 3
    %p183 = por %p181, %p182
    %p185 = scmp.ne.s32.totalorder %s170, %s184
    %p186 = scmp.eq.s32.totalorder %s20, 0
    %p187 = por %p185, %p186
    %s189 = sadd.s32 %s188, 1
    %p192 = scmp.eq.s32.totalorder %s14, 3
    %p193 = scmp.ne.s32.totalorder %s188, %s190
    %p194 = scmp.eq.s32.totalorder %s14, 0
    %p195 = por %p193, %p194
    %p196 = scmp.ne.s32.totalorder %s188, %s190
    %p197 = scmp.eq.s32.totalorder %s19, 3
    %p198 = por %p196, %p197
    %p199 = scmp.ne.s32.totalorder %s190, %s191
    %p200 = scmp.eq.s32.totalorder %s19, 0
    %p201 = por %p199, %p200
    %p202 = scmp.ne.s32.totalorder %s190, %s191
    %p203 = scmp.eq.s32.totalorder %s20, 3
    %p204 = por %p202, %p203
    %p206 = scmp.ne.s32.totalorder %s191, %s205
    %p207 = scmp.eq.s32.totalorder %s20, 0
    %p208 = por %p206, %p207
    %s209 = ssub.s32 %s21, %s33
    %s210 = ssub.s32 %s22, %s29
    %s211 = sor.u32 %s209, %s210
    %p212 = scmp.eq.s32.totalorder %s211, 0
    %s214 = sadd.s32 %s213, 1
    %s215 = scalar_select %p212, %s213, %s214
    %p218 = pneg %p212
    %p219 = scmp.eq.s32.totalorder %s14, 3
    %p220 = por %p218, %p219
    %p221 = scmp.ne.s32.totalorder %s213, %s216
    %p222 = scmp.eq.s32.totalorder %s14, 0
    %p223 = por %p221, %p222
    %p224 = scmp.ne.s32.totalorder %s213, %s216
    %p225 = scmp.eq.s32.totalorder %s19, 3
    %p226 = por %p224, %p225
    %p227 = scmp.ne.s32.totalorder %s216, %s217
    %p228 = scmp.eq.s32.totalorder %s19, 0
    %p229 = por %p227, %p228
    %p230 = scmp.ne.s32.totalorder %s216, %s217
    %p231 = scmp.eq.s32.totalorder %s20, 3
    %p232 = por %p230, %p231
    %p234 = scmp.ne.s32.totalorder %s217, %s233
    %p235 = scmp.eq.s32.totalorder %s20, 0
    %p236 = por %p234, %p235
    %p237 = scmp.le.s32.totalorder 1, %s14
    %p238 = scmp.lt.s32.totalorder %s14, 5
    %p239 = pnand %p237, %p238
    %p240 = pneg %p239
    // Predicated region
    $region9: #{tpu_custom_call.1} parent=5 // pred_check
      _
    $region10: #{tpu_custom_call.1} parent=5 // pred_check_branch
      %242 = sbr.rel (%p239) target = $region12
    $region11: #{tpu_custom_call.1} parent=5 // pred_region
      %s243 = ssub.s32 %s14, 1
      // Predicated region
      $region13: #{tpu_custom_call.1} parent=11 // pred_check
        %p244 = pneg %p47
      $region14: #{tpu_custom_call.1} parent=11 // pred_check_branch
        %246 = sbr.rel (%p244) target = $region16
      $region15: #{tpu_custom_call.1} parent=11 // pred_region
        _
      $region16: #{tpu_custom_call.1} parent=11 // pred_fallthru
        _
      // Predicated region
      $region17: #{tpu_custom_call.1} parent=11 // pred_check
        %p247 = pneg %p180
      $region18: #{tpu_custom_call.1} parent=11 // pred_check_branch
        %249 = sbr.rel (%p247) target = $region20
      $region19: #{tpu_custom_call.1} parent=11 // pred_region
        _
      $region20: #{tpu_custom_call.1} parent=11 // pred_fallthru
        _
      // Predicated region
      $region21: #{tpu_custom_call.1} parent=11 // pred_check
        %p250 = pneg %p201
      $region22: #{tpu_custom_call.1} parent=11 // pred_check_branch
        %252 = sbr.rel (%p250) target = $region24
      $region23: #{tpu_custom_call.1} parent=11 // pred_region
        _
      $region24: #{tpu_custom_call.1} parent=11 // pred_fallthru
        _
    $region12: #{tpu_custom_call.1} parent=5 // pred_fallthru
      _
    %p253 = scmp.lt.s32.totalorder %s14, 4
    // Predicated region
    $region25: #{tpu_custom_call.1} parent=5 // pred_check
      %p254 = pneg %p253
    $region26: #{tpu_custom_call.1} parent=5 // pred_check_branch
      %256 = sbr.rel (%p254) target = $region28
    $region27: #{tpu_custom_call.1} parent=5 // pred_region
      // Predicated region
      $region29: #{tpu_custom_call.1} parent=27 // pred_check
        %p257 = pneg %p69
      $region30: #{tpu_custom_call.1} parent=27 // pred_check_branch
        %259 = sbr.rel (%p257) target = $region32
      $region31: #{tpu_custom_call.1} parent=27 // pred_region
        %s260 = smul.u32 10, %s22
        %p261 = scmp.lt.s32.totalorder %s21, 1
        %s262 = scalar_select %p261, %s21, 1
        %p263 = scmp.lt.s32.totalorder %s260, 19
        %s264 = scalar_select %p263, %s260, 19
        %s265 = smul.addr %s264, 3
        %s266 = smul.addr %s262, 60
        %s267 = sadd.s32 %s265, %s266
        %s268 = smul.addr %s267, 8
        %s269 = scalar_lea.vmem %s1, %s268
        %s270 = smul.u32 10, %s22
      $region32: #{tpu_custom_call.1} parent=27 // pred_fallthru
        _
      // Predicated region
      $region33: #{tpu_custom_call.1} parent=27 // pred_check
        %p271 = pneg %p97
      $region34: #{tpu_custom_call.1} parent=27 // pred_check_branch
        %273 = sbr.rel (%p271) target = $region36
      $region35: #{tpu_custom_call.1} parent=27 // pred_region
        %s274 = smul.u32 8, %s22
        %p275 = scmp.lt.s32.totalorder %s21, 1
        %s276 = scalar_select %p275, %s21, 1
        %p277 = scmp.lt.s32.totalorder %s274, 15
        %s278 = scalar_select %p277, %s274, 15
        %s279 = smul.addr %s278, 2
        %s280 = smul.addr %s276, 32
        %s281 = sadd.s32 %s279, %s280
        %s282 = smul.addr %s281, 8
        %s283 = scalar_lea.vmem %s2, %s282
        %s284 = smul.u32 8, %s22
      $region36: #{tpu_custom_call.1} parent=27 // pred_fallthru
        _
      // Predicated region
      $region37: #{tpu_custom_call.1} parent=27 // pred_check
        %p285 = pneg %p125
      $region38: #{tpu_custom_call.1} parent=27 // pred_check_branch
        %287 = sbr.rel (%p285) target = $region40
      $region39: #{tpu_custom_call.1} parent=27 // pred_region
        %s288 = smul.u32 8, %s22
        %p289 = scmp.lt.s32.totalorder %s21, 1
        %s290 = scalar_select %p289, %s21, 1
        %p291 = scmp.lt.s32.totalorder %s288, 15
        %s292 = scalar_select %p291, %s288, 15
        %s293 = smul.addr %s292, 2
        %s294 = smul.addr %s290, 32
        %s295 = sadd.s32 %s293, %s294
        %s296 = smul.addr %s295, 8
        %s297 = scalar_lea.vmem %s3, %s296
        %s298 = smul.u32 8, %s22
      $region40: #{tpu_custom_call.1} parent=27 // pred_fallthru
        _
      // Predicated region
      $region41: #{tpu_custom_call.1} parent=27 // pred_check
        %p299 = pneg %p153
      $region42: #{tpu_custom_call.1} parent=27 // pred_check_branch
        %301 = sbr.rel (%p299) target = $region44
      $region43: #{tpu_custom_call.1} parent=27 // pred_region
        %s302 = smul.u32 8, %s22
        %p303 = scmp.lt.s32.totalorder %s21, 1
        %s304 = scalar_select %p303, %s21, 1
        %p305 = scmp.lt.s32.totalorder %s302, 15
        %s306 = scalar_select %p305, %s302, 15
        %s307 = smul.addr %s306, 2
        %s308 = smul.addr %s304, 32
        %s309 = sadd.s32 %s307, %s308
        %s310 = smul.addr %s309, 8
        %s311 = scalar_lea.vmem %s4, %s310
        %s312 = smul.u32 8, %s22
      $region44: #{tpu_custom_call.1} parent=27 // pred_fallthru
        _
    $region28: #{tpu_custom_call.1} parent=5 // pred_fallthru
      _
    %p313 = scmp.le.s32.totalorder 1, %s14
    %p314 = scmp.lt.s32.totalorder %s14, 5
    %p315 = pnand %p313, %p314
    %p316 = pneg %p315
    // Predicated region
    $region45: #{tpu_custom_call.1} parent=5 // pred_check
      _
    $region46: #{tpu_custom_call.1} parent=5 // pred_check_branch
      %318 = sbr.rel (%p315) target = $region48
    $region47: #{tpu_custom_call.1} parent=5 // pred_region
      %s319 = ssub.s32 %s14, 1
      %p320 = pneg %p47
      %p321 = pneg %p44
      %s322 = smul.u32 10, %s24
      %p323 = scmp.lt.s32.totalorder %s23, 1
      %s324 = scalar_select %p323, %s23, 1
      %p325 = scmp.lt.s32.totalorder %s322, 19
      %s326 = scalar_select %p325, %s322, 19
      %s327 = smul.addr %s326, 3
      %s328 = smul.addr %s324, 60
      %s329 = sadd.s32 %s327, %s328
      %s330 = smul.addr %s329, 8
      %s331 = scalar_lea.vmem %s1, %s330
      %p332 = pneg %p75
      %p333 = pneg %p72
      %s334 = smul.u32 8, %s24
      %p335 = scmp.lt.s32.totalorder %s23, 1
      %s336 = scalar_select %p335, %s23, 1
      %p337 = scmp.lt.s32.totalorder %s334, 15
      %s338 = scalar_select %p337, %s334, 15
      %s339 = smul.addr %s338, 2
      %s340 = smul.addr %s336, 32
      %s341 = sadd.s32 %s339, %s340
      %s342 = smul.addr %s341, 8
      %s343 = scalar_lea.vmem %s2, %s342
      %p344 = pneg %p103
      %p345 = pneg %p100
      %s346 = smul.u32 8, %s24
      %p347 = scmp.lt.s32.totalorder %s23, 1
      %s348 = scalar_select %p347, %s23, 1
      %p349 = scmp.lt.s32.totalorder %s346, 15
      %s350 = scalar_select %p349, %s346, 15
      %s351 = smul.addr %s350, 2
      %s352 = smul.addr %s348, 32
      %s353 = sadd.s32 %s351, %s352
      %s354 = smul.addr %s353, 8
      %s355 = scalar_lea.vmem %s3, %s354
      %p356 = pneg %p131
      %p357 = pneg %p128
      %s358 = smul.u32 8, %s24
      %p359 = scmp.lt.s32.totalorder %s23, 1
      %s360 = scalar_select %p359, %s23, 1
      %p361 = scmp.lt.s32.totalorder %s358, 15
      %s362 = scalar_select %p361, %s358, 15
      %s363 = smul.addr %s362, 2
      %s364 = smul.addr %s360, 32
      %s365 = sadd.s32 %s363, %s364
      %s366 = smul.addr %s365, 8
      %s367 = scalar_lea.vmem %s4, %s366
      %p368 = pneg %p159
      %p369 = pneg %p156
      %p370 = pneg %p180
      %p371 = pneg %p177
      %p372 = pneg %p201
      %p373 = pneg %p198
      %p374 = pneg %p229
      %p375 = pneg %p226
      %s376 = smul.u32 8, %s24
      %p377 = scmp.lt.s32.totalorder %s23, 1
      %s378 = scalar_select %p377, %s23, 1
      %p379 = scmp.lt.s32.totalorder %s376, 15
      %s380 = scalar_select %p379, %s376, 15
      %s381 = smul.addr %s380, 2
      %s382 = smul.addr %s378, 32
      %s383 = sadd.s32 %s381, %s382
      %s384 = smul.addr %s383, 8
      %s385 = scalar_lea.vmem %s7, %s384
      %s386 = smul.u32 10, %s24
      %p387 = scmp.lt.s32.totalorder %s23, 1
      %s388 = scalar_select %p387, %s23, 1
      %p389 = scmp.lt.s32.totalorder %s386, 19
      %s390 = scalar_select %p389, %s386, 19
      %s391 = smul.addr %s390, 3
      %s392 = smul.addr %s388, 60
      %s393 = sadd.s32 %s391, %s392
      %s394 = smul.addr %s393, 8
      %s395 = scalar_lea.vmem %s1, %s394
      %s396 = smul.u32 10, %s24
      %s397 = smul.u32 8, %s24
      %p398 = scmp.lt.s32.totalorder %s23, 1
      %s399 = scalar_select %p398, %s23, 1
      %p400 = scmp.lt.s32.totalorder %s397, 15
      %s401 = scalar_select %p400, %s397, 15
      %s402 = smul.addr %s401, 2
      %s403 = smul.addr %s399, 32
      %s404 = sadd.s32 %s402, %s403
      %s405 = smul.addr %s404, 8
      %s406 = scalar_lea.vmem %s2, %s405
      %s407 = smul.u32 8, %s24
      %s408 = smul.u32 8, %s24
      %p409 = scmp.lt.s32.totalorder %s23, 1
      %s410 = scalar_select %p409, %s23, 1
      %p411 = scmp.lt.s32.totalorder %s408, 15
      %s412 = scalar_select %p411, %s408, 15
      %s413 = smul.addr %s412, 2
      %s414 = smul.addr %s410, 32
      %s415 = sadd.s32 %s413, %s414
      %s416 = smul.addr %s415, 8
      %s417 = scalar_lea.vmem %s3, %s416
      %s418 = smul.u32 8, %s24
      %s419 = smul.u32 8, %s24
      %p420 = scmp.lt.s32.totalorder %s23, 1
      %s421 = scalar_select %p420, %s23, 1
      %p422 = scmp.lt.s32.totalorder %s419, 15
      %s423 = scalar_select %p422, %s419, 15
      %s424 = smul.addr %s423, 2
      %s425 = smul.addr %s421, 32
      %s426 = sadd.s32 %s424, %s425
      %s427 = smul.addr %s426, 8
      %s428 = scalar_lea.vmem %s4, %s427
      %s429 = smul.u32 8, %s24
      %s430 = smul.u32 8, %s24
      %p431 = scmp.lt.s32.totalorder %s23, 1
      %s432 = scalar_select %p431, %s23, 1
      %p433 = scmp.lt.s32.totalorder %s430, 15
      %s434 = scalar_select %p433, %s430, 15
      %s435 = smul.addr %s434, 2
      %s436 = smul.addr %s432, 32
      %s437 = sadd.s32 %s435, %s436
      %s438 = smul.addr %s437, 8
      %s439 = scalar_lea.vmem %s7, %s438
      %s440 = smul.u32 8, %s24
      %v442 = vld [vmem:[%s395] sm:$0xff]
      %v443 = vld [vmem:[%s395 + $0x8] sm:$0xff]
      %v444 = vld [vmem:[%s395 + $0x10] sm:$0xff]
      %v445 = vld [vmem:[%s395 + $0x18] sm:$0xff]
      %v446 = vld [vmem:[%s395 + $0x20] sm:$0xff]
      %v447 = vld [vmem:[%s395 + $0x28] sm:$0xff]
      %v448 = vld [vmem:[%s395 + $0x30] sm:$0xff]
      %v449 = vld [vmem:[%s395 + $0x38] sm:$0xff]
      %v450 = vld [vmem:[%s395 + $0x40] sm:$0xff]
      %v451 = vld [vmem:[%s395 + $0x48] sm:$0xff]
      %v452 = vld [vmem:[%s395 + $0x50] sm:$0xff]
      %v453 = vld [vmem:[%s395 + $0x58] sm:$0xff]
      %v454 = vld [vmem:[%s395 + $0x60] sm:$0xff]
      %v455 = vld [vmem:[%s395 + $0x68] sm:$0xff]
      %v456 = vld [vmem:[%s395 + $0x70] sm:$0xff]
      %v457 = vld [vmem:[%s395 + $0x78] sm:$0xff]
      %v458 = vld [vmem:[%s395 + $0x80] sm:$0xff]
      %v459 = vld [vmem:[%s395 + $0x88] sm:$0xff]
      %v460 = vld [vmem:[%s395 + $0x90] sm:$0xff]
      %v461 = vld [vmem:[%s395 + $0x98] sm:$0xff]
      %v462 = vld [vmem:[%s395 + $0xa0] sm:$0xff]
      %v463 = vld [vmem:[%s395 + $0xa8] sm:$0xff]
      %v464 = vld [vmem:[%s395 + $0xb0] sm:$0xff]
      %v465 = vld [vmem:[%s395 + $0xb8] sm:$0xff]
      %v466 = vld [vmem:[%s395 + $0xc0] sm:$0xff]
      %v467 = vld [vmem:[%s395 + $0xc8] sm:$0xff]
      %v468 = vld [vmem:[%s395 + $0xd0] sm:$0xff]
      %v469 = vld [vmem:[%s395 + $0xd8] sm:$0xff]
      %v470 = vld [vmem:[%s395 + $0xe0] sm:$0xff]
      %v471 = vld [vmem:[%s395 + $0xe8] sm:$0xff]
      %v472 = vpack.c.bf16 %v443, %v442
      %v473 = vpack.c.bf16 %v446, %v445
      %v474 = vpack.c.bf16 %v449, %v448
      %v475 = vpack.c.bf16 %v452, %v451
      %v476 = vpack.c.bf16 %v455, %v454
      %v477 = vpack.c.bf16 %v458, %v457
      %v478 = vpack.c.bf16 %v461, %v460
      %v479 = vpack.c.bf16 %v464, %v463
      %v480 = vld [vmem:[%s5] sm:$0xf]
      %vm481 = vcmask 64512
      %v483 = vsel %vm481, %v472, 0
      %v486 = vsel %vm481, %v473, 0
      %v489 = vsel %vm481, %v474, 0
      %v492 = vsel %vm481, %v475, 0
      %v495 = vsel %vm481, %v476, 0
      %v498 = vsel %vm481, %v477, 0
      %v501 = vsel %vm481, %v478, 0
      %v504 = vsel %vm481, %v479, 0
      %vm506 = vcmask 1043456
      %v508 = vsel %vm506, %v480, 0
      %510 = vmatpush.bf16.msra.mxu0 0
      %511 = vmatpush.bf16.msra.mxu0 0
      %512 = vmatpush.bf16.msra.mxu0 0
      %513 = vmatpush.bf16.msra.mxu0 0
      %514 = vmatpush.bf16.msra.mxu0 0
      %515 = vmatpush.bf16.msra.mxu0 0
      %516 = vmatpush.bf16.msra.mxu0 0
      %517 = vmatpush.bf16.msra.mxu0 %v508
      %518 = vmatmul.bf16.gmra.mxu0 %v483
      %v519 = vpop.f32.mrf.mxu0
      %v520 = vadd.f32 0.0, %v519
      %v521 = vpop.f32.mrf.mxu0
      %v522 = vadd.f32 0.0, %v521
      %523 = vmatmul.bf16.gmra.mxu0 %v486
      %v524 = vpop.f32.mrf.mxu0
      %v525 = vadd.f32 0.0, %v524
      %v526 = vpop.f32.mrf.mxu0
      %v527 = vadd.f32 0.0, %v526
      %528 = vmatmul.bf16.gmra.mxu0 %v489
      %v529 = vpop.f32.mrf.mxu0
      %v530 = vadd.f32 0.0, %v529
      %v531 = vpop.f32.mrf.mxu0
      %v532 = vadd.f32 0.0, %v531
      %533 = vmatmul.bf16.gmra.mxu0 %v492
      %v534 = vpop.f32.mrf.mxu0
      %v535 = vadd.f32 0.0, %v534
      %v536 = vpop.f32.mrf.mxu0
      %v537 = vadd.f32 0.0, %v536
      %538 = vmatmul.bf16.gmra.mxu0 %v495
      %v539 = vpop.f32.mrf.mxu0
      %v540 = vadd.f32 0.0, %v539
      %v541 = vpop.f32.mrf.mxu0
      %v542 = vadd.f32 0.0, %v541
      %543 = vmatmul.bf16.gmra.mxu0 %v498
      %v544 = vpop.f32.mrf.mxu0
      %v545 = vadd.f32 0.0, %v544
      %v546 = vpop.f32.mrf.mxu0
      %v547 = vadd.f32 0.0, %v546
      %548 = vmatmul.bf16.gmra.mxu0 %v501
      %v549 = vpop.f32.mrf.mxu0
      %v550 = vadd.f32 0.0, %v549
      %v551 = vpop.f32.mrf.mxu0
      %v552 = vadd.f32 0.0, %v551
      %553 = vmatmul.bf16.gmra.mxu0 %v504
      %v554 = vpop.f32.mrf.mxu0
      %v555 = vadd.f32 0.0, %v554
      %v556 = vpop.f32.mrf.mxu0
      %v557 = vadd.f32 0.0, %v556
      %558 = vdwg.mxu0
      %vm559 = vcmask 195584
      %560 = vst.msk [vmem:[#allocation2] sm:$0xff] %vm559, %v520
      %561 = vst.msk [vmem:[#allocation2 + $0x8] sm:$0xff] %vm559, %v522
      %562 = vst.msk [vmem:[#allocation2 + $0x10] sm:$0xff] %vm559, %v525
      %563 = vst.msk [vmem:[#allocation2 + $0x18] sm:$0xff] %vm559, %v527
      %564 = vst.msk [vmem:[#allocation2 + $0x20] sm:$0xff] %vm559, %v530
      %565 = vst.msk [vmem:[#allocation2 + $0x28] sm:$0xff] %vm559, %v532
      %566 = vst.msk [vmem:[#allocation2 + $0x30] sm:$0xff] %vm559, %v535
      %567 = vst.msk [vmem:[#allocation2 + $0x38] sm:$0xff] %vm559, %v537
      %568 = vst.msk [vmem:[#allocation2 + $0x40] sm:$0xff] %vm559, %v540
      %569 = vst.msk [vmem:[#allocation2 + $0x48] sm:$0xff] %vm559, %v542
      %570 = vst.msk [vmem:[#allocation2 + $0x50] sm:$0xff] %vm559, %v545
      %571 = vst.msk [vmem:[#allocation2 + $0x58] sm:$0xff] %vm559, %v547
      %572 = vst.msk [vmem:[#allocation2 + $0x60] sm:$0xff] %vm559, %v550
      %573 = vst.msk [vmem:[#allocation2 + $0x68] sm:$0xff] %vm559, %v552
      %574 = vst.msk [vmem:[#allocation2 + $0x70] sm:$0xff] %vm559, %v555
      %575 = vst.msk [vmem:[#allocation2 + $0x78] sm:$0xff] %vm559, %v557
      %v576 = vpack.c.bf16 %v467, %v466
      %s577 = scalar_lea.vmem %s5, 12
      %v578 = vld [vmem:[%s577] sm:$0xf]
      %v580 = vsel %vm481, %v576, 0
      %v583 = vsel %vm506, %v578, 0
      %585 = vmatpush.bf16.msra.mxu0 0
      %586 = vmatpush.bf16.msra.mxu0 0
      %587 = vmatpush.bf16.msra.mxu0 0
      %588 = vmatpush.bf16.msra.mxu0 0
      %589 = vmatpush.bf16.msra.mxu0 0
      %590 = vmatpush.bf16.msra.mxu0 0
      %591 = vmatpush.bf16.msra.mxu0 0
      %592 = vmatpush.bf16.msra.mxu0 %v583
      %593 = vmatmul.bf16.gmra.mxu0 %v486
      %v594 = vpop.f32.mrf.mxu0
      %v595 = vadd.f32 0.0, %v594
      %v596 = vpop.f32.mrf.mxu0
      %v597 = vadd.f32 0.0, %v596
      %598 = vmatmul.bf16.gmra.mxu0 %v489
      %v599 = vpop.f32.mrf.mxu0
      %v600 = vadd.f32 0.0, %v599
      %v601 = vpop.f32.mrf.mxu0
      %v602 = vadd.f32 0.0, %v601
      %603 = vmatmul.bf16.gmra.mxu0 %v492
      %v604 = vpop.f32.mrf.mxu0
      %v605 = vadd.f32 0.0, %v604
      %v606 = vpop.f32.mrf.mxu0
      %v607 = vadd.f32 0.0, %v606
      %608 = vmatmul.bf16.gmra.mxu0 %v495
      %v609 = vpop.f32.mrf.mxu0
      %v610 = vadd.f32 0.0, %v609
      %v611 = vpop.f32.mrf.mxu0
      %v612 = vadd.f32 0.0, %v611
      %613 = vmatmul.bf16.gmra.mxu0 %v498
      %v614 = vpop.f32.mrf.mxu0
      %v615 = vadd.f32 0.0, %v614
      %v616 = vpop.f32.mrf.mxu0
      %v617 = vadd.f32 0.0, %v616
      %618 = vmatmul.bf16.gmra.mxu0 %v501
      %v619 = vpop.f32.mrf.mxu0
      %v620 = vadd.f32 0.0, %v619
      %v621 = vpop.f32.mrf.mxu0
      %v622 = vadd.f32 0.0, %v621
      %623 = vmatmul.bf16.gmra.mxu0 %v504
      %v624 = vpop.f32.mrf.mxu0
      %v625 = vadd.f32 0.0, %v624
      %v626 = vpop.f32.mrf.mxu0
      %v627 = vadd.f32 0.0, %v626
      %628 = vmatmul.bf16.gmra.mxu0 %v580
      %v629 = vpop.f32.mrf.mxu0
      %v630 = vadd.f32 0.0, %v629
      %v631 = vpop.f32.mrf.mxu0
      %v632 = vadd.f32 0.0, %v631
      %633 = vdwg.mxu0
      %v634 = vld [vmem:[#allocation2] sm:$0xff]
      %v635 = vld [vmem:[#allocation2 + $0x8] sm:$0xff]
      %v636 = vld [vmem:[#allocation2 + $0x10] sm:$0xff]
      %v637 = vld [vmem:[#allocation2 + $0x18] sm:$0xff]
      %v638 = vld [vmem:[#allocation2 + $0x20] sm:$0xff]
      %v639 = vld [vmem:[#allocation2 + $0x28] sm:$0xff]
      %v640 = vld [vmem:[#allocation2 + $0x30] sm:$0xff]
      %v641 = vld [vmem:[#allocation2 + $0x38] sm:$0xff]
      %v642 = vld [vmem:[#allocation2 + $0x40] sm:$0xff]
      %v643 = vld [vmem:[#allocation2 + $0x48] sm:$0xff]
      %v644 = vld [vmem:[#allocation2 + $0x50] sm:$0xff]
      %v645 = vld [vmem:[#allocation2 + $0x58] sm:$0xff]
      %v646 = vld [vmem:[#allocation2 + $0x60] sm:$0xff]
      %v647 = vld [vmem:[#allocation2 + $0x68] sm:$0xff]
      %v648 = vld [vmem:[#allocation2 + $0x70] sm:$0xff]
      %v649 = vld [vmem:[#allocation2 + $0x78] sm:$0xff]
      %v650 = vadd.f32 %v634, %v595
      %v651 = vadd.f32 %v635, %v597
      %v652 = vadd.f32 %v636, %v600
      %v653 = vadd.f32 %v637, %v602
      %v654 = vadd.f32 %v638, %v605
      %v655 = vadd.f32 %v639, %v607
      %v656 = vadd.f32 %v640, %v610
      %v657 = vadd.f32 %v641, %v612
      %v658 = vadd.f32 %v642, %v615
      %v659 = vadd.f32 %v643, %v617
      %v660 = vadd.f32 %v644, %v620
      %v661 = vadd.f32 %v645, %v622
      %v662 = vadd.f32 %v646, %v625
      %v663 = vadd.f32 %v647, %v627
      %v664 = vadd.f32 %v648, %v630
      %v665 = vadd.f32 %v649, %v632
      %666 = vst.msk [vmem:[#allocation2] sm:$0xff] %vm559, %v650
      %667 = vst.msk [vmem:[#allocation2 + $0x8] sm:$0xff] %vm559, %v651
      %668 = vst.msk [vmem:[#allocation2 + $0x10] sm:$0xff] %vm559, %v652
      %669 = vst.msk [vmem:[#allocation2 + $0x18] sm:$0xff] %vm559, %v653
      %670 = vst.msk [vmem:[#allocation2 + $0x20] sm:$0xff] %vm559, %v654
      %671 = vst.msk [vmem:[#allocation2 + $0x28] sm:$0xff] %vm559, %v655
      %672 = vst.msk [vmem:[#allocation2 + $0x30] sm:$0xff] %vm559, %v656
      %673 = vst.msk [vmem:[#allocation2 + $0x38] sm:$0xff] %vm559, %v657
      %674 = vst.msk [vmem:[#allocation2 + $0x40] sm:$0xff] %vm559, %v658
      %675 = vst.msk [vmem:[#allocation2 + $0x48] sm:$0xff] %vm559, %v659
      %676 = vst.msk [vmem:[#allocation2 + $0x50] sm:$0xff] %vm559, %v660
      %677 = vst.msk [vmem:[#allocation2 + $0x58] sm:$0xff] %vm559, %v661
      %678 = vst.msk [vmem:[#allocation2 + $0x60] sm:$0xff] %vm559, %v662
      %679 = vst.msk [vmem:[#allocation2 + $0x68] sm:$0xff] %vm559, %v663
      %680 = vst.msk [vmem:[#allocation2 + $0x70] sm:$0xff] %vm559, %v664
      %681 = vst.msk [vmem:[#allocation2 + $0x78] sm:$0xff] %vm559, %v665
      %v682 = vpack.c.bf16 %v470, %v469
      %s683 = scalar_lea.vmem %s5, 24
      %v684 = vld [vmem:[%s683] sm:$0xf]
      %v686 = vsel %vm481, %v682, 0
      %v689 = vsel %vm506, %v684, 0
      %691 = vmatpush.bf16.msra.mxu0 0
      %692 = vmatpush.bf16.msra.mxu0 0
      %693 = vmatpush.bf16.msra.mxu0 0
      %694 = vmatpush.bf16.msra.mxu0 0
      %695 = vmatpush.bf16.msra.mxu0 0
      %696 = vmatpush.bf16.msra.mxu0 0
      %697 = vmatpush.bf16.msra.mxu0 0
      %698 = vmatpush.bf16.msra.mxu0 %v689
      %699 = vmatmul.bf16.gmra.mxu0 %v489
      %v700 = vpop.f32.mrf.mxu0
      %v701 = vadd.f32 0.0, %v700
      %v702 = vpop.f32.mrf.mxu0
      %v703 = vadd.f32 0.0, %v702
      %704 = vmatmul.bf16.gmra.mxu0 %v492
      %v705 = vpop.f32.mrf.mxu0
      %v706 = vadd.f32 0.0, %v705
      %v707 = vpop.f32.mrf.mxu0
      %v708 = vadd.f32 0.0, %v707
      %709 = vmatmul.bf16.gmra.mxu0 %v495
      %v710 = vpop.f32.mrf.mxu0
      %v711 = vadd.f32 0.0, %v710
      %v712 = vpop.f32.mrf.mxu0
      %v713 = vadd.f32 0.0, %v712
      %714 = vmatmul.bf16.gmra.mxu0 %v498
      %v715 = vpop.f32.mrf.mxu0
      %v716 = vadd.f32 0.0, %v715
      %v717 = vpop.f32.mrf.mxu0
      %v718 = vadd.f32 0.0, %v717
      %719 = vmatmul.bf16.gmra.mxu0 %v501
      %v720 = vpop.f32.mrf.mxu0
      %v721 = vadd.f32 0.0, %v720
      %v722 = vpop.f32.mrf.mxu0
      %v723 = vadd.f32 0.0, %v722
      %724 = vmatmul.bf16.gmra.mxu0 %v504
      %v725 = vpop.f32.mrf.mxu0
      %v726 = vadd.f32 0.0, %v725
      %v727 = vpop.f32.mrf.mxu0
      %v728 = vadd.f32 0.0, %v727
      %729 = vmatmul.bf16.gmra.mxu0 %v580
      %v730 = vpop.f32.mrf.mxu0
      %v731 = vadd.f32 0.0, %v730
      %v732 = vpop.f32.mrf.mxu0
      %v733 = vadd.f32 0.0, %v732
      %734 = vmatmul.bf16.gmra.mxu0 %v686
      %v735 = vpop.f32.mrf.mxu0
      %v736 = vadd.f32 0.0, %v735
      %v737 = vpop.f32.mrf.mxu0
      %v738 = vadd.f32 0.0, %v737
      %739 = vdwg.mxu0
      %v740 = vld [vmem:[#allocation2] sm:$0xff]
      %v741 = vld [vmem:[#allocation2 + $0x8] sm:$0xff]
      %v742 = vld [vmem:[#allocation2 + $0x10] sm:$0xff]
      %v743 = vld [vmem:[#allocation2 + $0x18] sm:$0xff]
      %v744 = vld [vmem:[#allocation2 + $0x20] sm:$0xff]
      %v745 = vld [vmem:[#allocation2 + $0x28] sm:$0xff]
      %v746 = vld [vmem:[#allocation2 + $0x30] sm:$0xff]
      %v747 = vld [vmem:[#allocation2 + $0x38] sm:$0xff]
      %v748 = vld [vmem:[#allocation2 + $0x40] sm:$0xff]
      %v749 = vld [vmem:[#allocation2 + $0x48] sm:$0xff]
      %v750 = vld [vmem:[#allocation2 + $0x50] sm:$0xff]
      %v751 = vld [vmem:[#allocation2 + $0x58] sm:$0xff]
      %v752 = vld [vmem:[#allocation2 + $0x60] sm:$0xff]
      %v753 = vld [vmem:[#allocation2 + $0x68] sm:$0xff]
      %v754 = vld [vmem:[#allocation2 + $0x70] sm:$0xff]
      %v755 = vld [vmem:[#allocation2 + $0x78] sm:$0xff]
      %v756 = vadd.f32 %v740, %v701
      %v757 = vadd.f32 %v741, %v703
      %v758 = vadd.f32 %v742, %v706
      %v759 = vadd.f32 %v743, %v708
      %v760 = vadd.f32 %v744, %v711
      %v761 = vadd.f32 %v745, %v713
      %v762 = vadd.f32 %v746, %v716
      %v763 = vadd.f32 %v747, %v718
      %v764 = vadd.f32 %v748, %v721
      %v765 = vadd.f32 %v749, %v723
      %v766 = vadd.f32 %v750, %v726
      %v767 = vadd.f32 %v751, %v728
      %v768 = vadd.f32 %v752, %v731
      %v769 = vadd.f32 %v753, %v733
      %v770 = vadd.f32 %v754, %v736
      %v771 = vadd.f32 %v755, %v738
      %772 = vst.msk [vmem:[#allocation2] sm:$0xff] %vm559, %v756
      %773 = vst.msk [vmem:[#allocation2 + $0x8] sm:$0xff] %vm559, %v757
      %774 = vst.msk [vmem:[#allocation2 + $0x10] sm:$0xff] %vm559, %v758
      %775 = vst.msk [vmem:[#allocation2 + $0x18] sm:$0xff] %vm559, %v759
      %776 = vst.msk [vmem:[#allocation2 + $0x20] sm:$0xff] %vm559, %v760
      %777 = vst.msk [vmem:[#allocation2 + $0x28] sm:$0xff] %vm559, %v761
      %778 = vst.msk [vmem:[#allocation2 + $0x30] sm:$0xff] %vm559, %v762
      %779 = vst.msk [vmem:[#allocation2 + $0x38] sm:$0xff] %vm559, %v763
      %780 = vst.msk [vmem:[#allocation2 + $0x40] sm:$0xff] %vm559, %v764
      %781 = vst.msk [vmem:[#allocation2 + $0x48] sm:$0xff] %vm559, %v765
      %782 = vst.msk [vmem:[#allocation2 + $0x50] sm:$0xff] %vm559, %v766
      %783 = vst.msk [vmem:[#allocation2 + $0x58] sm:$0xff] %vm559, %v767
      %784 = vst.msk [vmem:[#allocation2 + $0x60] sm:$0xff] %vm559, %v768
      %785 = vst.msk [vmem:[#allocation2 + $0x68] sm:$0xff] %vm559, %v769
      %786 = vst.msk [vmem:[#allocation2 + $0x70] sm:$0xff] %vm559, %v770
      %787 = vst.msk [vmem:[#allocation2 + $0x78] sm:$0xff] %vm559, %v771
      %v788 = vrot.slane %v442, 1
      %v789 = vrot.slane %v445, 1
      %v790 = vrot.slane %v448, 1
      %v791 = vrot.slane %v451, 1
      %v792 = vrot.slane %v454, 1
      %v793 = vrot.slane %v457, 1
      %v794 = vrot.slane %v460, 1
      %v795 = vrot.slane %v463, 1
      %v796 = vrot.slane %v466, 1
      %v797 = vrot.slane %v469, 1
      %v798 = vrot.slane %v443, 1
      %v799 = vrot.slane %v446, 1
      %v800 = vrot.slane %v449, 1
      %v801 = vrot.slane %v452, 1
      %v802 = vrot.slane %v455, 1
      %v803 = vrot.slane %v458, 1
      %v804 = vrot.slane %v461, 1
      %v805 = vrot.slane %v464, 1
      %v806 = vrot.slane %v467, 1
      %v807 = vrot.slane %v470, 1
      %v808 = vrot.slane %v444, 1
      %v809 = vrot.slane %v447, 1
      %v810 = vrot.slane %v450, 1
      %v811 = vrot.slane %v453, 1
      %v812 = vrot.slane %v456, 1
      %v813 = vrot.slane %v459, 1
      %v814 = vrot.slane %v462, 1
      %v815 = vrot.slane %v465, 1
      %v816 = vrot.slane %v468, 1
      %v817 = vrot.slane %v471, 1
      %v818 = vlaneseq
      %v819 = vshrl.u32 %v818, 7
      %vm820 = vcmp.lt.s32.totalorder %v819, 7
      %v821 = vsel %vm820, %v798, %v808
      %v822 = vsel %vm820, %v799, %v809
      %v823 = vsel %vm820, %v800, %v810
      %v824 = vsel %vm820, %v801, %v811
      %v825 = vsel %vm820, %v802, %v812
      %v826 = vsel %vm820, %v803, %v813
      %v827 = vsel %vm820, %v804, %v814
      %v828 = vsel %vm820, %v805, %v815
      %v829 = vsel %vm820, %v806, %v816
      %v830 = vsel %vm820, %v807, %v817
      %v831 = vsel %vm820, %v788, %v798
      %v832 = vsel %vm820, %v789, %v799
      %v833 = vsel %vm820, %v790, %v800
      %v834 = vsel %vm820, %v791, %v801
      %v835 = vsel %vm820, %v792, %v802
      %v836 = vsel %vm820, %v793, %v803
      %v837 = vsel %vm820, %v794, %v804
      %v838 = vsel %vm820, %v795, %v805
      %v839 = vsel %vm820, %v796, %v806
      %v840 = vsel %vm820, %v797, %v807
      %v841 = vpack.c.bf16 %v821, %v831
      %v842 = vpack.c.bf16 %v822, %v832
      %v843 = vpack.c.bf16 %v823, %v833
      %v844 = vpack.c.bf16 %v824, %v834
      %v845 = vpack.c.bf16 %v825, %v835
      %v846 = vpack.c.bf16 %v826, %v836
      %v847 = vpack.c.bf16 %v827, %v837
      %v848 = vpack.c.bf16 %v828, %v838
      %s849 = scalar_lea.vmem %s5, 4
      %v850 = vld [vmem:[%s849] sm:$0xf]
      %v852 = vsel %vm481, %v841, 0
      %v855 = vsel %vm481, %v842, 0
      %v858 = vsel %vm481, %v843, 0
      %v861 = vsel %vm481, %v844, 0
      %v864 = vsel %vm481, %v845, 0
      %v867 = vsel %vm481, %v846, 0
      %v870 = vsel %vm481, %v847, 0
      %v873 = vsel %vm481, %v848, 0
      %v876 = vsel %vm506, %v850, 0
      %878 = vmatpush.bf16.msra.mxu0 0
      %879 = vmatpush.bf16.msra.mxu0 0
      %880 = vmatpush.bf16.msra.mxu0 0
      %881 = vmatpush.bf16.msra.mxu0 0
      %882 = vmatpush.bf16.msra.mxu0 0
      %883 = vmatpush.bf16.msra.mxu0 0
      %884 = vmatpush.bf16.msra.mxu0 0
      %885 = vmatpush.bf16.msra.mxu0 %v876
      %886 = vmatmul.bf16.gmra.mxu0 %v852
      %v887 = vpop.f32.mrf.mxu0
      %v888 = vadd.f32 0.0, %v887
      %v889 = vpop.f32.mrf.mxu0
      %v890 = vadd.f32 0.0, %v889
      %891 = vmatmul.bf16.gmra.mxu0 %v855
      %v892 = vpop.f32.mrf.mxu0
      %v893 = vadd.f32 0.0, %v892
      %v894 = vpop.f32.mrf.mxu0
      %v895 = vadd.f32 0.0, %v894
      %896 = vmatmul.bf16.gmra.mxu0 %v858
      %v897 = vpop.f32.mrf.mxu0
      %v898 = vadd.f32 0.0, %v897
      %v899 = vpop.f32.mrf.mxu0
      %v900 = vadd.f32 0.0, %v899
      %901 = vmatmul.bf16.gmra.mxu0 %v861
      %v902 = vpop.f32.mrf.mxu0
      %v903 = vadd.f32 0.0, %v902
      %v904 = vpop.f32.mrf.mxu0
      %v905 = vadd.f32 0.0, %v904
      %906 = vmatmul.bf16.gmra.mxu0 %v864
      %v907 = vpop.f32.mrf.mxu0
      %v908 = vadd.f32 0.0, %v907
      %v909 = vpop.f32.mrf.mxu0
      %v910 = vadd.f32 0.0, %v909
      %911 = vmatmul.bf16.gmra.mxu0 %v867
      %v912 = vpop.f32.mrf.mxu0
      %v913 = vadd.f32 0.0, %v912
      %v914 = vpop.f32.mrf.mxu0
      %v915 = vadd.f32 0.0, %v914
      %916 = vmatmul.bf16.gmra.mxu0 %v870
      %v917 = vpop.f32.mrf.mxu0
      %v918 = vadd.f32 0.0, %v917
      %v919 = vpop.f32.mrf.mxu0
      %v920 = vadd.f32 0.0, %v919
      %921 = vmatmul.bf16.gmra.mxu0 %v873
      %v922 = vpop.f32.mrf.mxu0
      %v923 = vadd.f32 0.0, %v922
      %v924 = vpop.f32.mrf.mxu0
      %v925 = vadd.f32 0.0, %v924
      %926 = vdwg.mxu0
      %v927 = vld [vmem:[#allocation2] sm:$0xff]
      %v928 = vld [vmem:[#allocation2 + $0x8] sm:$0xff]
      %v929 = vld [vmem:[#allocation2 + $0x10] sm:$0xff]
      %v930 = vld [vmem:[#allocation2 + $0x18] sm:$0xff]
      %v931 = vld [vmem:[#allocation2 + $0x20] sm:$0xff]
      %v932 = vld [vmem:[#allocation2 + $0x28] sm:$0xff]
      %v933 = vld [vmem:[#allocation2 + $0x30] sm:$0xff]
      %v934 = vld [vmem:[#allocation2 + $0x38] sm:$0xff]
      %v935 = vld [vmem:[#allocation2 + $0x40] sm:$0xff]
      %v936 = vld [vmem:[#allocation2 + $0x48] sm:$0xff]
      %v937 = vld [vmem:[#allocation2 + $0x50] sm:$0xff]
      %v938 = vld [vmem:[#allocation2 + $0x58] sm:$0xff]
      %v939 = vld [vmem:[#allocation2 + $0x60] sm:$0xff]
      %v940 = vld [vmem:[#allocation2 + $0x68] sm:$0xff]
      %v941 = vld [vmem:[#allocation2 + $0x70] sm:$0xff]
      %v942 = vld [vmem:[#allocation2 + $0x78] sm:$0xff]
      %v943 = vadd.f32 %v927, %v888
      %v944 = vadd.f32 %v928, %v890
      %v945 = vadd.f32 %v929, %v893
      %v946 = vadd.f32 %v930, %v895
      %v947 = vadd.f32 %v931, %v898
      %v948 = vadd.f32 %v932, %v900
      %v949 = vadd.f32 %v933, %v903
      %v950 = vadd.f32 %v934, %v905
      %v951 = vadd.f32 %v935, %v908
      %v952 = vadd.f32 %v936, %v910
      %v953 = vadd.f32 %v937, %v913
      %v954 = vadd.f32 %v938, %v915
      %v955 = vadd.f32 %v939, %v918
      %v956 = vadd.f32 %v940, %v920
      %v957 = vadd.f32 %v941, %v923
      %v958 = vadd.f32 %v942, %v925
      %959 = vst.msk [vmem:[#allocation2] sm:$0xff] %vm559, %v943
      %960 = vst.msk [vmem:[#allocation2 + $0x8] sm:$0xff] %vm559, %v944
      %961 = vst.msk [vmem:[#allocation2 + $0x10] sm:$0xff] %vm559, %v945
      %962 = vst.msk [vmem:[#allocation2 + $0x18] sm:$0xff] %vm559, %v946
      %963 = vst.msk [vmem:[#allocation2 + $0x20] sm:$0xff] %vm559, %v947
      %964 = vst.msk [vmem:[#allocation2 + $0x28] sm:$0xff] %vm559, %v948
      %965 = vst.msk [vmem:[#allocation2 + $0x30] sm:$0xff] %vm559, %v949
      %966 = vst.msk [vmem:[#allocation2 + $0x38] sm:$0xff] %vm559, %v950
      %967 = vst.msk [vmem:[#allocation2 + $0x40] sm:$0xff] %vm559, %v951
      %968 = vst.msk [vmem:[#allocation2 + $0x48] sm:$0xff] %vm559, %v952
      %969 = vst.msk [vmem:[#allocation2 + $0x50] sm:$0xff] %vm559, %v953
      %970 = vst.msk [vmem:[#allocation2 + $0x58] sm:$0xff] %vm559, %v954
      %971 = vst.msk [vmem:[#allocation2 + $0x60] sm:$0xff] %vm559, %v955
      %972 = vst.msk [vmem:[#allocation2 + $0x68] sm:$0xff] %vm559, %v956
      %973 = vst.msk [vmem:[#allocation2 + $0x70] sm:$0xff] %vm559, %v957
      %974 = vst.msk [vmem:[#allocation2 + $0x78] sm:$0xff] %vm559, %v958
      %v975 = vpack.c.bf16 %v829, %v839
      %s976 = scalar_lea.vmem %s5, 16
      %v977 = vld [vmem:[%s976] sm:$0xf]
      %v979 = vsel %vm481, %v975, 0
      %v982 = vsel %vm506, %v977, 0
      %984 = vmatpush.bf16.msra.mxu0 0
      %985 = vmatpush.bf16.msra.mxu0 0
      %986 = vmatpush.bf16.msra.mxu0 0
      %987 = vmatpush.bf16.msra.mxu0 0
      %988 = vmatpush.bf16.msra.mxu0 0
      %989 = vmatpush.bf16.msra.mxu0 0
      %990 = vmatpush.bf16.msra.mxu0 0
      %991 = vmatpush.bf16.msra.mxu0 %v982
      %992 = vmatmul.bf16.gmra.mxu0 %v855
      %v993 = vpop.f32.mrf.mxu0
      %v994 = vadd.f32 0.0, %v993
      %v995 = vpop.f32.mrf.mxu0
      %v996 = vadd.f32 0.0, %v995
      %997 = vmatmul.bf16.gmra.mxu0 %v858
      %v998 = vpop.f32.mrf.mxu0
      %v999 = vadd.f32 0.0, %v998
      %v1000 = vpop.f32.mrf.mxu0
      %v1001 = vadd.f32 0.0, %v1000
      %1002 = vmatmul.bf16.gmra.mxu0 %v861
      %v1003 = vpop.f32.mrf.mxu0
      %v1004 = vadd.f32 0.0, %v1003
      %v1005 = vpop.f32.mrf.mxu0
      %v1006 = vadd.f32 0.0, %v1005
      %1007 = vmatmul.bf16.gmra.mxu0 %v864
      %v1008 = vpop.f32.mrf.mxu0
      %v1009 = vadd.f32 0.0, %v1008
      %v1010 = vpop.f32.mrf.mxu0
      %v1011 = vadd.f32 0.0, %v1010
      %1012 = vmatmul.bf16.gmra.mxu0 %v867
      %v1013 = vpop.f32.mrf.mxu0
      %v1014 = vadd.f32 0.0, %v1013
      %v1015 = vpop.f32.mrf.mxu0
      %v1016 = vadd.f32 0.0, %v1015
      %1017 = vmatmul.bf16.gmra.mxu0 %v870
      %v1018 = vpop.f32.mrf.mxu0
      %v1019 = vadd.f32 0.0, %v1018
      %v1020 = vpop.f32.mrf.mxu0
      %v1021 = vadd.f32 0.0, %v1020
      %1022 = vmatmul.bf16.gmra.mxu0 %v873
      %v1023 = vpop.f32.mrf.mxu0
      %v1024 = vadd.f32 0.0, %v1023
      %v1025 = vpop.f32.mrf.mxu0
      %v1026 = vadd.f32 0.0, %v1025
      %1027 = vmatmul.bf16.gmra.mxu0 %v979
      %v1028 = vpop.f32.mrf.mxu0
      %v1029 = vadd.f32 0.0, %v1028
      %v1030 = vpop.f32.mrf.mxu0
      %v1031 = vadd.f32 0.0, %v1030
      %1032 = vdwg.mxu0
      %v1033 = vld [vmem:[#allocation2] sm:$0xff]
      %v1034 = vld [vmem:[#allocation2 + $0x8] sm:$0xff]
      %v1035 = vld [vmem:[#allocation2 + $0x10] sm:$0xff]
      %v1036 = vld [vmem:[#allocation2 + $0x18] sm:$0xff]
      %v1037 = vld [vmem:[#allocation2 + $0x20] sm:$0xff]
      %v1038 = vld [vmem:[#allocation2 + $0x28] sm:$0xff]
      %v1039 = vld [vmem:[#allocation2 + $0x30] sm:$0xff]
      %v1040 = vld [vmem:[#allocation2 + $0x38] sm:$0xff]
      %v1041 = vld [vmem:[#allocation2 + $0x40] sm:$0xff]
      %v1042 = vld [vmem:[#allocation2 + $0x48] sm:$0xff]
      %v1043 = vld [vmem:[#allocation2 + $0x50] sm:$0xff]
      %v1044 = vld [vmem:[#allocation2 + $0x58] sm:$0xff]
      %v1045 = vld [vmem:[#allocation2 + $0x60] sm:$0xff]
      %v1046 = vld [vmem:[#allocation2 + $0x68] sm:$0xff]
      %v1047 = vld [vmem:[#allocation2 + $0x70] sm:$0xff]
      %v1048 = vld [vmem:[#allocation2 + $0x78] sm:$0xff]
      %v1049 = vadd.f32 %v1033, %v994
      %v1050 = vadd.f32 %v1034, %v996
      %v1051 = vadd.f32 %v1035, %v999
      %v1052 = vadd.f32 %v1036, %v1001
      %v1053 = vadd.f32 %v1037, %v1004
      %v1054 = vadd.f32 %v1038, %v1006
      %v1055 = vadd.f32 %v1039, %v1009
      %v1056 = vadd.f32 %v1040, %v1011
      %v1057 = vadd.f32 %v1041, %v1014
      %v1058 = vadd.f32 %v1042, %v1016
      %v1059 = vadd.f32 %v1043, %v1019
      %v1060 = vadd.f32 %v1044, %v1021
      %v1061 = vadd.f32 %v1045, %v1024
      %v1062 = vadd.f32 %v1046, %v1026
      %v1063 = vadd.f32 %v1047, %v1029
      %v1064 = vadd.f32 %v1048, %v1031
      %1065 = vst.msk [vmem:[#allocation2] sm:$0xff] %vm559, %v1049
      %1066 = vst.msk [vmem:[#allocation2 + $0x8] sm:$0xff] %vm559, %v1050
      %1067 = vst.msk [vmem:[#allocation2 + $0x10] sm:$0xff] %vm559, %v1051
      %1068 = vst.msk [vmem:[#allocation2 + $0x18] sm:$0xff] %vm559, %v1052
      %1069 = vst.msk [vmem:[#allocation2 + $0x20] sm:$0xff] %vm559, %v1053
      %1070 = vst.msk [vmem:[#allocation2 + $0x28] sm:$0xff] %vm559, %v1054
      %1071 = vst.msk [vmem:[#allocation2 + $0x30] sm:$0xff] %vm559, %v1055
      %1072 = vst.msk [vmem:[#allocation2 + $0x38] sm:$0xff] %vm559, %v1056
      %1073 = vst.msk [vmem:[#allocation2 + $0x40] sm:$0xff] %vm559, %v1057
      %1074 = vst.msk [vmem:[#allocation2 + $0x48] sm:$0xff] %vm559, %v1058
      %1075 = vst.msk [vmem:[#allocation2 + $0x50] sm:$0xff] %vm559, %v1059
      %1076 = vst.msk [vmem:[#allocation2 + $0x58] sm:$0xff] %vm559, %v1060
      %1077 = vst.msk [vmem:[#allocation2 + $0x60] sm:$0xff] %vm559, %v1061
      %1078 = vst.msk [vmem:[#allocation2 + $0x68] sm:$0xff] %vm559, %v1062
      %1079 = vst.msk [vmem:[#allocation2 + $0x70] sm:$0xff] %vm559, %v1063
      %1080 = vst.msk [vmem:[#allocation2 + $0x78] sm:$0xff] %vm559, %v1064
      %v1081 = vpack.c.bf16 %v830, %v840
      %s1082 = scalar_lea.vmem %s5, 28
      %v1083 = vld [vmem:[%s1082] sm:$0xf]
      %v1085 = vsel %vm481, %v1081, 0
      %v1088 = vsel %vm506, %v1083, 0
      %1090 = vmatpush.bf16.msra.mxu0 0
      %1091 = vmatpush.bf16.msra.mxu0 0
      %1092 = vmatpush.bf16.msra.mxu0 0
      %1093 = vmatpush.bf16.msra.mxu0 0
      %1094 = vmatpush.bf16.msra.mxu0 0
      %1095 = vmatpush.bf16.msra.mxu0 0
      %1096 = vmatpush.bf16.msra.mxu0 0
      %1097 = vmatpush.bf16.msra.mxu0 %v1088
      %1098 = vmatmul.bf16.gmra.mxu0 %v858
      %v1099 = vpop.f32.mrf.mxu0
      %v1100 = vadd.f32 0.0, %v1099
      %v1101 = vpop.f32.mrf.mxu0
      %v1102 = vadd.f32 0.0, %v1101
      %1103 = vmatmul.bf16.gmra.mxu0 %v861
      %v1104 = vpop.f32.mrf.mxu0
      %v1105 = vadd.f32 0.0, %v1104
      %v1106 = vpop.f32.mrf.mxu0
      %v1107 = vadd.f32 0.0, %v1106
      %1108 = vmatmul.bf16.gmra.mxu0 %v864
      %v1109 = vpop.f32.mrf.mxu0
      %v1110 = vadd.f32 0.0, %v1109
      %v1111 = vpop.f32.mrf.mxu0
      %v1112 = vadd.f32 0.0, %v1111
      %1113 = vmatmul.bf16.gmra.mxu0 %v867
      %v1114 = vpop.f32.mrf.mxu0
      %v1115 = vadd.f32 0.0, %v1114
      %v1116 = vpop.f32.mrf.mxu0
      %v1117 = vadd.f32 0.0, %v1116
      %1118 = vmatmul.bf16.gmra.mxu0 %v870
      %v1119 = vpop.f32.mrf.mxu0
      %v1120 = vadd.f32 0.0, %v1119
      %v1121 = vpop.f32.mrf.mxu0
      %v1122 = vadd.f32 0.0, %v1121
      %1123 = vmatmul.bf16.gmra.mxu0 %v873
      %v1124 = vpop.f32.mrf.mxu0
      %v1125 = vadd.f32 0.0, %v1124
      %v1126 = vpop.f32.mrf.mxu0
      %v1127 = vadd.f32 0.0, %v1126
      %1128 = vmatmul.bf16.gmra.mxu0 %v979
      %v1129 = vpop.f32.mrf.mxu0
      %v1130 = vadd.f32 0.0, %v1129
      %v1131 = vpop.f32.mrf.mxu0
      %v1132 = vadd.f32 0.0, %v1131
      %1133 = vmatmul.bf16.gmra.mxu0 %v1085
      %v1134 = vpop.f32.mrf.mxu0
      %v1135 = vadd.f32 0.0, %v1134
      %v1136 = vpop.f32.mrf.mxu0
      %v1137 = vadd.f32 0.0, %v1136
      %1138 = vdwg.mxu0
      %v1139 = vld [vmem:[#allocation2] sm:$0xff]
      %v1140 = vld [vmem:[#allocation2 + $0x8] sm:$0xff]
      %v1141 = vld [vmem:[#allocation2 + $0x10] sm:$0xff]
      %v1142 = vld [vmem:[#allocation2 + $0x18] sm:$0xff]
      %v1143 = vld [vmem:[#allocation2 + $0x20] sm:$0xff]
      %v1144 = vld [vmem:[#allocation2 + $0x28] sm:$0xff]
      %v1145 = vld [vmem:[#allocation2 + $0x30] sm:$0xff]
      %v1146 = vld [vmem:[#allocation2 + $0x38] sm:$0xff]
      %v1147 = vld [vmem:[#allocation2 + $0x40] sm:$0xff]
      %v1148 = vld [vmem:[#allocation2 + $0x48] sm:$0xff]
      %v1149 = vld [vmem:[#allocation2 + $0x50] sm:$0xff]
      %v1150 = vld [vmem:[#allocation2 + $0x58] sm:$0xff]
      %v1151 = vld [vmem:[#allocation2 + $0x60] sm:$0xff]
      %v1152 = vld [vmem:[#allocation2 + $0x68] sm:$0xff]
      %v1153 = vld [vmem:[#allocation2 + $0x70] sm:$0xff]
      %v1154 = vld [vmem:[#allocation2 + $0x78] sm:$0xff]
      %v1155 = vadd.f32 %v1139, %v1100
      %v1156 = vadd.f32 %v1140, %v1102
      %v1157 = vadd.f32 %v1141, %v1105
      %v1158 = vadd.f32 %v1142, %v1107
      %v1159 = vadd.f32 %v1143, %v1110
      %v1160 = vadd.f32 %v1144, %v1112
      %v1161 = vadd.f32 %v1145, %v1115
      %v1162 = vadd.f32 %v1146, %v1117
      %v1163 = vadd.f32 %v1147, %v1120
      %v1164 = vadd.f32 %v1148, %v1122
      %v1165 = vadd.f32 %v1149, %v1125
      %v1166 = vadd.f32 %v1150, %v1127
      %v1167 = vadd.f32 %v1151, %v1130
      %v1168 = vadd.f32 %v1152, %v1132
      %v1169 = vadd.f32 %v1153, %v1135
      %v1170 = vadd.f32 %v1154, %v1137
      %1171 = vst.msk [vmem:[#allocation2] sm:$0xff] %vm559, %v1155
      %1172 = vst.msk [vmem:[#allocation2 + $0x8] sm:$0xff] %vm559, %v1156
      %1173 = vst.msk [vmem:[#allocation2 + $0x10] sm:$0xff] %vm559, %v1157
      %1174 = vst.msk [vmem:[#allocation2 + $0x18] sm:$0xff] %vm559, %v1158
      %1175 = vst.msk [vmem:[#allocation2 + $0x20] sm:$0xff] %vm559, %v1159
      %1176 = vst.msk [vmem:[#allocation2 + $0x28] sm:$0xff] %vm559, %v1160
      %1177 = vst.msk [vmem:[#allocation2 + $0x30] sm:$0xff] %vm559, %v1161
      %1178 = vst.msk [vmem:[#allocation2 + $0x38] sm:$0xff] %vm559, %v1162
      %1179 = vst.msk [vmem:[#allocation2 + $0x40] sm:$0xff] %vm559, %v1163
      %1180 = vst.msk [vmem:[#allocation2 + $0x48] sm:$0xff] %vm559, %v1164
      %1181 = vst.msk [vmem:[#allocation2 + $0x50] sm:$0xff] %vm559, %v1165
      %1182 = vst.msk [vmem:[#allocation2 + $0x58] sm:$0xff] %vm559, %v1166
      %1183 = vst.msk [vmem:[#allocation2 + $0x60] sm:$0xff] %vm559, %v1167
      %1184 = vst.msk [vmem:[#allocation2 + $0x68] sm:$0xff] %vm559, %v1168
      %1185 = vst.msk [vmem:[#allocation2 + $0x70] sm:$0xff] %vm559, %v1169
      %1186 = vst.msk [vmem:[#allocation2 + $0x78] sm:$0xff] %vm559, %v1170
      %v1187 = vrot.slane %v442, 2
      %v1188 = vrot.slane %v445, 2
      %v1189 = vrot.slane %v448, 2
      %v1190 = vrot.slane %v451, 2
      %v1191 = vrot.slane %v454, 2
      %v1192 = vrot.slane %v457, 2
      %v1193 = vrot.slane %v460, 2
      %v1194 = vrot.slane %v463, 2
      %v1195 = vrot.slane %v466, 2
      %v1196 = vrot.slane %v469, 2
      %v1197 = vrot.slane %v443, 2
      %v1198 = vrot.slane %v446, 2
      %v1199 = vrot.slane %v449, 2
      %v1200 = vrot.slane %v452, 2
      %v1201 = vrot.slane %v455, 2
      %v1202 = vrot.slane %v458, 2
      %v1203 = vrot.slane %v461, 2
      %v1204 = vrot.slane %v464, 2
      %v1205 = vrot.slane %v467, 2
      %v1206 = vrot.slane %v470, 2
      %v1207 = vrot.slane %v444, 2
      %v1208 = vrot.slane %v447, 2
      %v1209 = vrot.slane %v450, 2
      %v1210 = vrot.slane %v453, 2
      %v1211 = vrot.slane %v456, 2
      %v1212 = vrot.slane %v459, 2
      %v1213 = vrot.slane %v462, 2
      %v1214 = vrot.slane %v465, 2
      %v1215 = vrot.slane %v468, 2
      %v1216 = vrot.slane %v471, 2
      %vm1217 = vcmp.lt.s32.totalorder %v819, 6
      %v1218 = vsel %vm1217, %v1197, %v1207
      %v1219 = vsel %vm1217, %v1198, %v1208
      %v1220 = vsel %vm1217, %v1199, %v1209
      %v1221 = vsel %vm1217, %v1200, %v1210
      %v1222 = vsel %vm1217, %v1201, %v1211
      %v1223 = vsel %vm1217, %v1202, %v1212
      %v1224 = vsel %vm1217, %v1203, %v1213
      %v1225 = vsel %vm1217, %v1204, %v1214
      %v1226 = vsel %vm1217, %v1205, %v1215
      %v1227 = vsel %vm1217, %v1206, %v1216
      %v1228 = vsel %vm1217, %v1187, %v1197
      %v1229 = vsel %vm1217, %v1188, %v1198
      %v1230 = vsel %vm1217, %v1189, %v1199
      %v1231 = vsel %vm1217, %v1190, %v1200
      %v1232 = vsel %vm1217, %v1191, %v1201
      %v1233 = vsel %vm1217, %v1192, %v1202
      %v1234 = vsel %vm1217, %v1193, %v1203
      %v1235 = vsel %vm1217, %v1194, %v1204
      %v1236 = vsel %vm1217, %v1195, %v1205
      %v1237 = vsel %vm1217, %v1196, %v1206
      %v1238 = vpack.c.bf16 %v1218, %v1228
      %v1239 = vpack.c.bf16 %v1219, %v1229
      %v1240 = vpack.c.bf16 %v1220, %v1230
      %v1241 = vpack.c.bf16 %v1221, %v1231
      %v1242 = vpack.c.bf16 %v1222, %v1232
      %v1243 = vpack.c.bf16 %v1223, %v1233
      %v1244 = vpack.c.bf16 %v1224, %v1234
      %v1245 = vpack.c.bf16 %v1225, %v1235
      %s1246 = scalar_lea.vmem %s5, 8
      %v1247 = vld [vmem:[%s1246] sm:$0xf]
      %v1249 = vsel %vm481, %v1238, 0
      %v1252 = vsel %vm481, %v1239, 0
      %v1255 = vsel %vm481, %v1240, 0
      %v1258 = vsel %vm481, %v1241, 0
      %v1261 = vsel %vm481, %v1242, 0
      %v1264 = vsel %vm481, %v1243, 0
      %v1267 = vsel %vm481, %v1244, 0
      %v1270 = vsel %vm481, %v1245, 0
      %v1273 = vsel %vm506, %v1247, 0
      %1275 = vmatpush.bf16.msra.mxu0 0
      %1276 = vmatpush.bf16.msra.mxu0 0
      %1277 = vmatpush.bf16.msra.mxu0 0
      %1278 = vmatpush.bf16.msra.mxu0 0
      %1279 = vmatpush.bf16.msra.mxu0 0
      %1280 = vmatpush.bf16.msra.mxu0 0
      %1281 = vmatpush.bf16.msra.mxu0 0
      %1282 = vmatpush.bf16.msra.mxu0 %v1273
      %1283 = vmatmul.bf16.gmra.mxu0 %v1249
      %v1284 = vpop.f32.mrf.mxu0
      %v1285 = vadd.f32 0.0, %v1284
      %v1286 = vpop.f32.mrf.mxu0
      %v1287 = vadd.f32 0.0, %v1286
      %1288 = vmatmul.bf16.gmra.mxu0 %v1252
      %v1289 = vpop.f32.mrf.mxu0
      %v1290 = vadd.f32 0.0, %v1289
      %v1291 = vpop.f32.mrf.mxu0
      %v1292 = vadd.f32 0.0, %v1291
      %1293 = vmatmul.bf16.gmra.mxu0 %v1255
      %v1294 = vpop.f32.mrf.mxu0
      %v1295 = vadd.f32 0.0, %v1294
      %v1296 = vpop.f32.mrf.mxu0
      %v1297 = vadd.f32 0.0, %v1296
      %1298 = vmatmul.bf16.gmra.mxu0 %v1258
      %v1299 = vpop.f32.mrf.mxu0
      %v1300 = vadd.f32 0.0, %v1299
      %v1301 = vpop.f32.mrf.mxu0
      %v1302 = vadd.f32 0.0, %v1301
      %1303 = vmatmul.bf16.gmra.mxu0 %v1261
      %v1304 = vpop.f32.mrf.mxu0
      %v1305 = vadd.f32 0.0, %v1304
      %v1306 = vpop.f32.mrf.mxu0
      %v1307 = vadd.f32 0.0, %v1306
      %1308 = vmatmul.bf16.gmra.mxu0 %v1264
      %v1309 = vpop.f32.mrf.mxu0
      %v1310 = vadd.f32 0.0, %v1309
      %v1311 = vpop.f32.mrf.mxu0
      %v1312 = vadd.f32 0.0, %v1311
      %1313 = vmatmul.bf16.gmra.mxu0 %v1267
      %v1314 = vpop.f32.mrf.mxu0
      %v1315 = vadd.f32 0.0, %v1314
      %v1316 = vpop.f32.mrf.mxu0
      %v1317 = vadd.f32 0.0, %v1316
      %1318 = vmatmul.bf16.gmra.mxu0 %v1270
      %v1319 = vpop.f32.mrf.mxu0
      %v1320 = vadd.f32 0.0, %v1319
      %v1321 = vpop.f32.mrf.mxu0
      %v1322 = vadd.f32 0.0, %v1321
      %1323 = vdwg.mxu0
      %v1324 = vld [vmem:[#allocation2] sm:$0xff]
      %v1325 = vld [vmem:[#allocation2 + $0x8] sm:$0xff]
      %v1326 = vld [vmem:[#allocation2 + $0x10] sm:$0xff]
      %v1327 = vld [vmem:[#allocation2 + $0x18] sm:$0xff]
      %v1328 = vld [vmem:[#allocation2 + $0x20] sm:$0xff]
      %v1329 = vld [vmem:[#allocation2 + $0x28] sm:$0xff]
      %v1330 = vld [vmem:[#allocation2 + $0x30] sm:$0xff]
      %v1331 = vld [vmem:[#allocation2 + $0x38] sm:$0xff]
      %v1332 = vld [vmem:[#allocation2 + $0x40] sm:$0xff]
      %v1333 = vld [vmem:[#allocation2 + $0x48] sm:$0xff]
      %v1334 = vld [vmem:[#allocation2 + $0x50] sm:$0xff]
      %v1335 = vld [vmem:[#allocation2 + $0x58] sm:$0xff]
      %v1336 = vld [vmem:[#allocation2 + $0x60] sm:$0xff]
      %v1337 = vld [vmem:[#allocation2 + $0x68] sm:$0xff]
      %v1338 = vld [vmem:[#allocation2 + $0x70] sm:$0xff]
      %v1339 = vld [vmem:[#allocation2 + $0x78] sm:$0xff]
      %v1340 = vadd.f32 %v1324, %v1285
      %v1341 = vadd.f32 %v1325, %v1287
      %v1342 = vadd.f32 %v1326, %v1290
      %v1343 = vadd.f32 %v1327, %v1292
      %v1344 = vadd.f32 %v1328, %v1295
      %v1345 = vadd.f32 %v1329, %v1297
      %v1346 = vadd.f32 %v1330, %v1300
      %v1347 = vadd.f32 %v1331, %v1302
      %v1348 = vadd.f32 %v1332, %v1305
      %v1349 = vadd.f32 %v1333, %v1307
      %v1350 = vadd.f32 %v1334, %v1310
      %v1351 = vadd.f32 %v1335, %v1312
      %v1352 = vadd.f32 %v1336, %v1315
      %v1353 = vadd.f32 %v1337, %v1317
      %v1354 = vadd.f32 %v1338, %v1320
      %v1355 = vadd.f32 %v1339, %v1322
      %1356 = vst.msk [vmem:[#allocation2] sm:$0xff] %vm559, %v1340
      %1357 = vst.msk [vmem:[#allocation2 + $0x8] sm:$0xff] %vm559, %v1341
      %1358 = vst.msk [vmem:[#allocation2 + $0x10] sm:$0xff] %vm559, %v1342
      %1359 = vst.msk [vmem:[#allocation2 + $0x18] sm:$0xff] %vm559, %v1343
      %1360 = vst.msk [vmem:[#allocation2 + $0x20] sm:$0xff] %vm559, %v1344
      %1361 = vst.msk [vmem:[#allocation2 + $0x28] sm:$0xff] %vm559, %v1345
      %1362 = vst.msk [vmem:[#allocation2 + $0x30] sm:$0xff] %vm559, %v1346
      %1363 = vst.msk [vmem:[#allocation2 + $0x38] sm:$0xff] %vm559, %v1347
      %1364 = vst.msk [vmem:[#allocation2 + $0x40] sm:$0xff] %vm559, %v1348
      %1365 = vst.msk [vmem:[#allocation2 + $0x48] sm:$0xff] %vm559, %v1349
      %1366 = vst.msk [vmem:[#allocation2 + $0x50] sm:$0xff] %vm559, %v1350
      %1367 = vst.msk [vmem:[#allocation2 + $0x58] sm:$0xff] %vm559, %v1351
      %1368 = vst.msk [vmem:[#allocation2 + $0x60] sm:$0xff] %vm559, %v1352
      %1369 = vst.msk [vmem:[#allocation2 + $0x68] sm:$0xff] %vm559, %v1353
      %1370 = vst.msk [vmem:[#allocation2 + $0x70] sm:$0xff] %vm559, %v1354
      %1371 = vst.msk [vmem:[#allocation2 + $0x78] sm:$0xff] %vm559, %v1355
      %v1372 = vpack.c.bf16 %v1226, %v1236
      %s1373 = scalar_lea.vmem %s5, 20
      %v1374 = vld [vmem:[%s1373] sm:$0xf]
      %v1376 = vsel %vm481, %v1372, 0
      %v1379 = vsel %vm506, %v1374, 0
      %1381 = vmatpush.bf16.msra.mxu0 0
      %1382 = vmatpush.bf16.msra.mxu0 0
      %1383 = vmatpush.bf16.msra.mxu0 0
      %1384 = vmatpush.bf16.msra.mxu0 0
      %1385 = vmatpush.bf16.msra.mxu0 0
      %1386 = vmatpush.bf16.msra.mxu0 0
      %1387 = vmatpush.bf16.msra.mxu0 0
      %1388 = vmatpush.bf16.msra.mxu0 %v1379
      %1389 = vmatmul.bf16.gmra.mxu0 %v1252
      %v1390 = vpop.f32.mrf.mxu0
      %v1391 = vadd.f32 0.0, %v1390
      %v1392 = vpop.f32.mrf.mxu0
      %v1393 = vadd.f32 0.0, %v1392
      %1394 = vmatmul.bf16.gmra.mxu0 %v1255
      %v1395 = vpop.f32.mrf.mxu0
      %v1396 = vadd.f32 0.0, %v1395
      %v1397 = vpop.f32.mrf.mxu0
      %v1398 = vadd.f32 0.0, %v1397
      %1399 = vmatmul.bf16.gmra.mxu0 %v1258
      %v1400 = vpop.f32.mrf.mxu0
      %v1401 = vadd.f32 0.0, %v1400
      %v1402 = vpop.f32.mrf.mxu0
      %v1403 = vadd.f32 0.0, %v1402
      %1404 = vmatmul.bf16.gmra.mxu0 %v1261
      %v1405 = vpop.f32.mrf.mxu0
      %v1406 = vadd.f32 0.0, %v1405
      %v1407 = vpop.f32.mrf.mxu0
      %v1408 = vadd.f32 0.0, %v1407
      %1409 = vmatmul.bf16.gmra.mxu0 %v1264
      %v1410 = vpop.f32.mrf.mxu0
      %v1411 = vadd.f32 0.0, %v1410
      %v1412 = vpop.f32.mrf.mxu0
      %v1413 = vadd.f32 0.0, %v1412
      %1414 = vmatmul.bf16.gmra.mxu0 %v1267
      %v1415 = vpop.f32.mrf.mxu0
      %v1416 = vadd.f32 0.0, %v1415
      %v1417 = vpop.f32.mrf.mxu0
      %v1418 = vadd.f32 0.0, %v1417
      %1419 = vmatmul.bf16.gmra.mxu0 %v1270
      %v1420 = vpop.f32.mrf.mxu0
      %v1421 = vadd.f32 0.0, %v1420
      %v1422 = vpop.f32.mrf.mxu0
      %v1423 = vadd.f32 0.0, %v1422
      %1424 = vmatmul.bf16.gmra.mxu0 %v1376
      %v1425 = vpop.f32.mrf.mxu0
      %v1426 = vadd.f32 0.0, %v1425
      %v1427 = vpop.f32.mrf.mxu0
      %v1428 = vadd.f32 0.0, %v1427
      %1429 = vdwg.mxu0
      %v1430 = vld [vmem:[#allocation2] sm:$0xff]
      %v1431 = vld [vmem:[#allocation2 + $0x8] sm:$0xff]
      %v1432 = vld [vmem:[#allocation2 + $0x10] sm:$0xff]
      %v1433 = vld [vmem:[#allocation2 + $0x18] sm:$0xff]
      %v1434 = vld [vmem:[#allocation2 + $0x20] sm:$0xff]
      %v1435 = vld [vmem:[#allocation2 + $0x28] sm:$0xff]
      %v1436 = vld [vmem:[#allocation2 + $0x30] sm:$0xff]
      %v1437 = vld [vmem:[#allocation2 + $0x38] sm:$0xff]
      %v1438 = vld [vmem:[#allocation2 + $0x40] sm:$0xff]
      %v1439 = vld [vmem:[#allocation2 + $0x48] sm:$0xff]
      %v1440 = vld [vmem:[#allocation2 + $0x50] sm:$0xff]
      %v1441 = vld [vmem:[#allocation2 + $0x58] sm:$0xff]
      %v1442 = vld [vmem:[#allocation2 + $0x60] sm:$0xff]
      %v1443 = vld [vmem:[#allocation2 + $0x68] sm:$0xff]
      %v1444 = vld [vmem:[#allocation2 + $0x70] sm:$0xff]
      %v1445 = vld [vmem:[#allocation2 + $0x78] sm:$0xff]
      %v1446 = vadd.f32 %v1430, %v1391
      %v1447 = vadd.f32 %v1431, %v1393
      %v1448 = vadd.f32 %v1432, %v1396
      %v1449 = vadd.f32 %v1433, %v1398
      %v1450 = vadd.f32 %v1434, %v1401
      %v1451 = vadd.f32 %v1435, %v1403
      %v1452 = vadd.f32 %v1436, %v1406
      %v1453 = vadd.f32 %v1437, %v1408
      %v1454 = vadd.f32 %v1438, %v1411
      %v1455 = vadd.f32 %v1439, %v1413
      %v1456 = vadd.f32 %v1440, %v1416
      %v1457 = vadd.f32 %v1441, %v1418
      %v1458 = vadd.f32 %v1442, %v1421
      %v1459 = vadd.f32 %v1443, %v1423
      %v1460 = vadd.f32 %v1444, %v1426
      %v1461 = vadd.f32 %v1445, %v1428
      %1462 = vst.msk [vmem:[#allocation2] sm:$0xff] %vm559, %v1446
      %1463 = vst.msk [vmem:[#allocation2 + $0x8] sm:$0xff] %vm559, %v1447
      %1464 = vst.msk [vmem:[#allocation2 + $0x10] sm:$0xff] %vm559, %v1448
      %1465 = vst.msk [vmem:[#allocation2 + $0x18] sm:$0xff] %vm559, %v1449
      %1466 = vst.msk [vmem:[#allocation2 + $0x20] sm:$0xff] %vm559, %v1450
      %1467 = vst.msk [vmem:[#allocation2 + $0x28] sm:$0xff] %vm559, %v1451
      %1468 = vst.msk [vmem:[#allocation2 + $0x30] sm:$0xff] %vm559, %v1452
      %1469 = vst.msk [vmem:[#allocation2 + $0x38] sm:$0xff] %vm559, %v1453
      %1470 = vst.msk [vmem:[#allocation2 + $0x40] sm:$0xff] %vm559, %v1454
      %1471 = vst.msk [vmem:[#allocation2 + $0x48] sm:$0xff] %vm559, %v1455
      %1472 = vst.msk [vmem:[#allocation2 + $0x50] sm:$0xff] %vm559, %v1456
      %1473 = vst.msk [vmem:[#allocation2 + $0x58] sm:$0xff] %vm559, %v1457
      %1474 = vst.msk [vmem:[#allocation2 + $0x60] sm:$0xff] %vm559, %v1458
      %1475 = vst.msk [vmem:[#allocation2 + $0x68] sm:$0xff] %vm559, %v1459
      %1476 = vst.msk [vmem:[#allocation2 + $0x70] sm:$0xff] %vm559, %v1460
      %1477 = vst.msk [vmem:[#allocation2 + $0x78] sm:$0xff] %vm559, %v1461
      %v1478 = vpack.c.bf16 %v1227, %v1237
      %s1479 = scalar_lea.vmem %s5, 32
      %v1480 = vld [vmem:[%s1479] sm:$0xf]
      %v1482 = vsel %vm481, %v1478, 0
      %v1485 = vsel %vm506, %v1480, 0
      %1487 = vmatpush.bf16.msra.mxu0 0
      %1488 = vmatpush.bf16.msra.mxu0 0
      %1489 = vmatpush.bf16.msra.mxu0 0
      %1490 = vmatpush.bf16.msra.mxu0 0
      %1491 = vmatpush.bf16.msra.mxu0 0
      %1492 = vmatpush.bf16.msra.mxu0 0
      %1493 = vmatpush.bf16.msra.mxu0 0
      %1494 = vmatpush.bf16.msra.mxu0 %v1485
      %1495 = vmatmul.bf16.gmra.mxu0 %v1255
      %v1496 = vpop.f32.mrf.mxu0
      %v1497 = vadd.f32 0.0, %v1496
      %v1498 = vpop.f32.mrf.mxu0
      %v1499 = vadd.f32 0.0, %v1498
      %1500 = vmatmul.bf16.gmra.mxu0 %v1258
      %v1501 = vpop.f32.mrf.mxu0
      %v1502 = vadd.f32 0.0, %v1501
      %v1503 = vpop.f32.mrf.mxu0
      %v1504 = vadd.f32 0.0, %v1503
      %1505 = vmatmul.bf16.gmra.mxu0 %v1261
      %v1506 = vpop.f32.mrf.mxu0
      %v1507 = vadd.f32 0.0, %v1506
      %v1508 = vpop.f32.mrf.mxu0
      %v1509 = vadd.f32 0.0, %v1508
      %1510 = vmatmul.bf16.gmra.mxu0 %v1264
      %v1511 = vpop.f32.mrf.mxu0
      %v1512 = vadd.f32 0.0, %v1511
      %v1513 = vpop.f32.mrf.mxu0
      %v1514 = vadd.f32 0.0, %v1513
      %1515 = vmatmul.bf16.gmra.mxu0 %v1267
      %v1516 = vpop.f32.mrf.mxu0
      %v1517 = vadd.f32 0.0, %v1516
      %v1518 = vpop.f32.mrf.mxu0
      %v1519 = vadd.f32 0.0, %v1518
      %1520 = vmatmul.bf16.gmra.mxu0 %v1270
      %v1521 = vpop.f32.mrf.mxu0
      %v1522 = vadd.f32 0.0, %v1521
      %v1523 = vpop.f32.mrf.mxu0
      %v1524 = vadd.f32 0.0, %v1523
      %1525 = vmatmul.bf16.gmra.mxu0 %v1376
      %v1526 = vpop.f32.mrf.mxu0
      %v1527 = vadd.f32 0.0, %v1526
      %v1528 = vpop.f32.mrf.mxu0
      %v1529 = vadd.f32 0.0, %v1528
      %1530 = vmatmul.bf16.gmra.mxu0 %v1482
      %v1531 = vpop.f32.mrf.mxu0
      %v1532 = vadd.f32 0.0, %v1531
      %v1533 = vpop.f32.mrf.mxu0
      %v1534 = vadd.f32 0.0, %v1533
      %1535 = vdwg.mxu0
      %v1536 = vld [vmem:[#allocation2] sm:$0xff]
      %v1537 = vld [vmem:[#allocation2 + $0x8] sm:$0xff]
      %v1538 = vld [vmem:[#allocation2 + $0x10] sm:$0xff]
      %v1539 = vld [vmem:[#allocation2 + $0x18] sm:$0xff]
      %v1540 = vld [vmem:[#allocation2 + $0x20] sm:$0xff]
      %v1541 = vld [vmem:[#allocation2 + $0x28] sm:$0xff]
      %v1542 = vld [vmem:[#allocation2 + $0x30] sm:$0xff]
      %v1543 = vld [vmem:[#allocation2 + $0x38] sm:$0xff]
      %v1544 = vld [vmem:[#allocation2 + $0x40] sm:$0xff]
      %v1545 = vld [vmem:[#allocation2 + $0x48] sm:$0xff]
      %v1546 = vld [vmem:[#allocation2 + $0x50] sm:$0xff]
      %v1547 = vld [vmem:[#allocation2 + $0x58] sm:$0xff]
      %v1548 = vld [vmem:[#allocation2 + $0x60] sm:$0xff]
      %v1549 = vld [vmem:[#allocation2 + $0x68] sm:$0xff]
      %v1550 = vld [vmem:[#allocation2 + $0x70] sm:$0xff]
      %v1551 = vld [vmem:[#allocation2 + $0x78] sm:$0xff]
      %v1552 = vadd.f32 %v1536, %v1497
      %v1553 = vadd.f32 %v1537, %v1499
      %v1554 = vadd.f32 %v1538, %v1502
      %v1555 = vadd.f32 %v1539, %v1504
      %v1556 = vadd.f32 %v1540, %v1507
      %v1557 = vadd.f32 %v1541, %v1509
      %v1558 = vadd.f32 %v1542, %v1512
      %v1559 = vadd.f32 %v1543, %v1514
      %v1560 = vadd.f32 %v1544, %v1517
      %v1561 = vadd.f32 %v1545, %v1519
      %v1562 = vadd.f32 %v1546, %v1522
      %v1563 = vadd.f32 %v1547, %v1524
      %v1564 = vadd.f32 %v1548, %v1527
      %v1565 = vadd.f32 %v1549, %v1529
      %v1566 = vadd.f32 %v1550, %v1532
      %v1567 = vadd.f32 %v1551, %v1534
      %1568 = vst.msk [vmem:[#allocation2] sm:$0xff] %vm559, %v1552
      %1569 = vst.msk [vmem:[#allocation2 + $0x8] sm:$0xff] %vm559, %v1553
      %1570 = vst.msk [vmem:[#allocation2 + $0x10] sm:$0xff] %vm559, %v1554
      %1571 = vst.msk [vmem:[#allocation2 + $0x18] sm:$0xff] %vm559, %v1555
      %1572 = vst.msk [vmem:[#allocation2 + $0x20] sm:$0xff] %vm559, %v1556
      %1573 = vst.msk [vmem:[#allocation2 + $0x28] sm:$0xff] %vm559, %v1557
      %1574 = vst.msk [vmem:[#allocation2 + $0x30] sm:$0xff] %vm559, %v1558
      %1575 = vst.msk [vmem:[#allocation2 + $0x38] sm:$0xff] %vm559, %v1559
      %1576 = vst.msk [vmem:[#allocation2 + $0x40] sm:$0xff] %vm559, %v1560
      %1577 = vst.msk [vmem:[#allocation2 + $0x48] sm:$0xff] %vm559, %v1561
      %1578 = vst.msk [vmem:[#allocation2 + $0x50] sm:$0xff] %vm559, %v1562
      %1579 = vst.msk [vmem:[#allocation2 + $0x58] sm:$0xff] %vm559, %v1563
      %1580 = vst.msk [vmem:[#allocation2 + $0x60] sm:$0xff] %vm559, %v1564
      %1581 = vst.msk [vmem:[#allocation2 + $0x68] sm:$0xff] %vm559, %v1565
      %1582 = vst.msk [vmem:[#allocation2 + $0x70] sm:$0xff] %vm559, %v1566
      %1583 = vst.msk [vmem:[#allocation2 + $0x78] sm:$0xff] %vm559, %v1567
      %v1584 = vld [vmem:[#allocation2] sm:$0xff]
      %v1585 = vld [vmem:[#allocation2 + $0x8] sm:$0xff]
      %v1586 = vld [vmem:[#allocation2 + $0x10] sm:$0xff]
      %v1587 = vld [vmem:[#allocation2 + $0x18] sm:$0xff]
      %v1588 = vld [vmem:[#allocation2 + $0x20] sm:$0xff]
      %v1589 = vld [vmem:[#allocation2 + $0x28] sm:$0xff]
      %v1590 = vld [vmem:[#allocation2 + $0x30] sm:$0xff]
      %v1591 = vld [vmem:[#allocation2 + $0x38] sm:$0xff]
      %v1592 = vld [vmem:[#allocation2 + $0x40] sm:$0xff]
      %v1593 = vld [vmem:[#allocation2 + $0x48] sm:$0xff]
      %v1594 = vld [vmem:[#allocation2 + $0x50] sm:$0xff]
      %v1595 = vld [vmem:[#allocation2 + $0x58] sm:$0xff]
      %v1596 = vld [vmem:[#allocation2 + $0x60] sm:$0xff]
      %v1597 = vld [vmem:[#allocation2 + $0x68] sm:$0xff]
      %v1598 = vld [vmem:[#allocation2 + $0x70] sm:$0xff]
      %v1599 = vld [vmem:[#allocation2 + $0x78] sm:$0xff]
      %v1600 = vld [vmem:[%s6] sm:$0x1]
      %v1602 = vperm.slane %v1600, 0
      %v1604 = vadd.f32 %v1584, %v1602
      %v1605 = vadd.f32 %v1585, %v1602
      %v1606 = vadd.f32 %v1586, %v1602
      %v1607 = vadd.f32 %v1587, %v1602
      %v1608 = vadd.f32 %v1588, %v1602
      %v1609 = vadd.f32 %v1589, %v1602
      %v1610 = vadd.f32 %v1590, %v1602
      %v1611 = vadd.f32 %v1591, %v1602
      %v1612 = vadd.f32 %v1592, %v1602
      %v1613 = vadd.f32 %v1593, %v1602
      %v1614 = vadd.f32 %v1594, %v1602
      %v1615 = vadd.f32 %v1595, %v1602
      %v1616 = vadd.f32 %v1596, %v1602
      %v1617 = vadd.f32 %v1597, %v1602
      %v1618 = vadd.f32 %v1598, %v1602
      %v1619 = vadd.f32 %v1599, %v1602
      %v1620 = vadd.f32 %v1604, 1.0
      %v1621 = vadd.f32 %v1605, 1.0
      %v1622 = vadd.f32 %v1606, 1.0
      %v1623 = vadd.f32 %v1607, 1.0
      %v1624 = vadd.f32 %v1608, 1.0
      %v1625 = vadd.f32 %v1609, 1.0
      %v1626 = vadd.f32 %v1610, 1.0
      %v1627 = vadd.f32 %v1611, 1.0
      %v1628 = vadd.f32 %v1612, 1.0
      %v1629 = vadd.f32 %v1613, 1.0
      %v1630 = vadd.f32 %v1614, 1.0
      %v1631 = vadd.f32 %v1615, 1.0
      %v1632 = vadd.f32 %v1616, 1.0
      %v1633 = vadd.f32 %v1617, 1.0
      %v1634 = vadd.f32 %v1618, 1.0
      %v1635 = vadd.f32 %v1619, 1.0
      %v1636 = vxor.u32 %v1620, 2147483648
      %v1637 = vxor.u32 %v1621, 2147483648
      %v1638 = vxor.u32 %v1622, 2147483648
      %v1639 = vxor.u32 %v1623, 2147483648
      %v1640 = vxor.u32 %v1624, 2147483648
      %v1641 = vxor.u32 %v1625, 2147483648
      %v1642 = vxor.u32 %v1626, 2147483648
      %v1643 = vxor.u32 %v1627, 2147483648
      %v1644 = vxor.u32 %v1628, 2147483648
      %v1645 = vxor.u32 %v1629, 2147483648
      %v1646 = vxor.u32 %v1630, 2147483648
      %v1647 = vxor.u32 %v1631, 2147483648
      %v1648 = vxor.u32 %v1632, 2147483648
      %v1649 = vxor.u32 %v1633, 2147483648
      %v1650 = vxor.u32 %v1634, 2147483648
      %v1651 = vxor.u32 %v1635, 2147483648
      %v1652 = vmul.f32 %v1636, 1.442695
      %v1653 = vpow.pop %v1652
      %v1654 = vmul.f32 %v1637, 1.442695
      %v1655 = vpow.pop %v1654
      %v1656 = vmul.f32 %v1638, 1.442695
      %v1657 = vpow.pop %v1656
      %v1658 = vmul.f32 %v1639, 1.442695
      %v1659 = vpow.pop %v1658
      %v1660 = vmul.f32 %v1640, 1.442695
      %v1661 = vpow.pop %v1660
      %v1662 = vmul.f32 %v1641, 1.442695
      %v1663 = vpow.pop %v1662
      %v1664 = vmul.f32 %v1642, 1.442695
      %v1665 = vpow.pop %v1664
      %v1666 = vmul.f32 %v1643, 1.442695
      %v1667 = vpow.pop %v1666
      %v1668 = vmul.f32 %v1644, 1.442695
      %v1669 = vpow.pop %v1668
      %v1670 = vmul.f32 %v1645, 1.442695
      %v1671 = vpow.pop %v1670
      %v1672 = vmul.f32 %v1646, 1.442695
      %v1673 = vpow.pop %v1672
      %v1674 = vmul.f32 %v1647, 1.442695
      %v1675 = vpow.pop %v1674
      %v1676 = vmul.f32 %v1648, 1.442695
      %v1677 = vpow.pop %v1676
      %v1678 = vmul.f32 %v1649, 1.442695
      %v1679 = vpow.pop %v1678
      %v1680 = vmul.f32 %v1650, 1.442695
      %v1681 = vpow.pop %v1680
      %v1682 = vmul.f32 %v1651, 1.442695
      %v1683 = vpow.pop %v1682
      %v1684 = vadd.f32 %v1653, 1.0
      %v1685 = vadd.f32 %v1655, 1.0
      %v1686 = vadd.f32 %v1657, 1.0
      %v1687 = vadd.f32 %v1659, 1.0
      %v1688 = vadd.f32 %v1661, 1.0
      %v1689 = vadd.f32 %v1663, 1.0
      %v1690 = vadd.f32 %v1665, 1.0
      %v1691 = vadd.f32 %v1667, 1.0
      %v1692 = vadd.f32 %v1669, 1.0
      %v1693 = vadd.f32 %v1671, 1.0
      %v1694 = vadd.f32 %v1673, 1.0
      %v1695 = vadd.f32 %v1675, 1.0
      %v1696 = vadd.f32 %v1677, 1.0
      %v1697 = vadd.f32 %v1679, 1.0
      %v1698 = vadd.f32 %v1681, 1.0
      %v1699 = vadd.f32 %v1683, 1.0
      %v1700 = vrcp.pop %v1684
      %v1701 = vmul.f32 %v1684, %v1700
      %v1702 = vsub.f32 1.0, %v1701
      %v1703 = vmul.f32 %v1700, %v1702
      %v1704 = vadd.f32 %v1700, %v1703
      %vm1705 = vweird.f32 %v1684
      %vm1706 = vweird.f32 %v1700
      %vm1707 = vmor %vm1705, %vm1706
      %v1708 = vsel %vm1707, %v1700, %v1704
      %v1709 = vand.u32 2147483647, %v1684
      %vm1710 = vcmp.eq.f32.partialorder %v1709, 8.507059e+37
      %v1711 = vand.u32 %v1684, 2147483648
      %v1712 = vor.u32 1.1754944e-38, %v1711
      %v1713 = vsel %vm1710, %v1712, %v1708
      %v1714 = vmul.f32 1.0, %v1713
      %v1715 = vrcp.pop %v1685
      %v1716 = vmul.f32 %v1685, %v1715
      %v1717 = vsub.f32 1.0, %v1716
      %v1718 = vmul.f32 %v1715, %v1717
      %v1719 = vadd.f32 %v1715, %v1718
      %vm1720 = vweird.f32 %v1685
      %vm1721 = vweird.f32 %v1715
      %vm1722 = vmor %vm1720, %vm1721
      %v1723 = vsel %vm1722, %v1715, %v1719
      %v1724 = vand.u32 2147483647, %v1685
      %vm1725 = vcmp.eq.f32.partialorder %v1724, 8.507059e+37
      %v1726 = vand.u32 %v1685, 2147483648
      %v1727 = vor.u32 1.1754944e-38, %v1726
      %v1728 = vsel %vm1725, %v1727, %v1723
      %v1729 = vmul.f32 1.0, %v1728
      %v1730 = vrcp.pop %v1686
      %v1731 = vmul.f32 %v1686, %v1730
      %v1732 = vsub.f32 1.0, %v1731
      %v1733 = vmul.f32 %v1730, %v1732
      %v1734 = vadd.f32 %v1730, %v1733
      %vm1735 = vweird.f32 %v1686
      %vm1736 = vweird.f32 %v1730
      %vm1737 = vmor %vm1735, %vm1736
      %v1738 = vsel %vm1737, %v1730, %v1734
      %v1739 = vand.u32 2147483647, %v1686
      %vm1740 = vcmp.eq.f32.partialorder %v1739, 8.507059e+37
      %v1741 = vand.u32 %v1686, 2147483648
      %v1742 = vor.u32 1.1754944e-38, %v1741
      %v1743 = vsel %vm1740, %v1742, %v1738
      %v1744 = vmul.f32 1.0, %v1743
      %v1745 = vrcp.pop %v1687
      %v1746 = vmul.f32 %v1687, %v1745
      %v1747 = vsub.f32 1.0, %v1746
      %v1748 = vmul.f32 %v1745, %v1747
      %v1749 = vadd.f32 %v1745, %v1748
      %vm1750 = vweird.f32 %v1687
      %vm1751 = vweird.f32 %v1745
      %vm1752 = vmor %vm1750, %vm1751
      %v1753 = vsel %vm1752, %v1745, %v1749
      %v1754 = vand.u32 2147483647, %v1687
      %vm1755 = vcmp.eq.f32.partialorder %v1754, 8.507059e+37
      %v1756 = vand.u32 %v1687, 2147483648
      %v1757 = vor.u32 1.1754944e-38, %v1756
      %v1758 = vsel %vm1755, %v1757, %v1753
      %v1759 = vmul.f32 1.0, %v1758
      %v1760 = vrcp.pop %v1688
      %v1761 = vmul.f32 %v1688, %v1760
      %v1762 = vsub.f32 1.0, %v1761
      %v1763 = vmul.f32 %v1760, %v1762
      %v1764 = vadd.f32 %v1760, %v1763
      %vm1765 = vweird.f32 %v1688
      %vm1766 = vweird.f32 %v1760
      %vm1767 = vmor %vm1765, %vm1766
      %v1768 = vsel %vm1767, %v1760, %v1764
      %v1769 = vand.u32 2147483647, %v1688
      %vm1770 = vcmp.eq.f32.partialorder %v1769, 8.507059e+37
      %v1771 = vand.u32 %v1688, 2147483648
      %v1772 = vor.u32 1.1754944e-38, %v1771
      %v1773 = vsel %vm1770, %v1772, %v1768
      %v1774 = vmul.f32 1.0, %v1773
      %v1775 = vrcp.pop %v1689
      %v1776 = vmul.f32 %v1689, %v1775
      %v1777 = vsub.f32 1.0, %v1776
      %v1778 = vmul.f32 %v1775, %v1777
      %v1779 = vadd.f32 %v1775, %v1778
      %vm1780 = vweird.f32 %v1689
      %vm1781 = vweird.f32 %v1775
      %vm1782 = vmor %vm1780, %vm1781
      %v1783 = vsel %vm1782, %v1775, %v1779
      %v1784 = vand.u32 2147483647, %v1689
      %vm1785 = vcmp.eq.f32.partialorder %v1784, 8.507059e+37
      %v1786 = vand.u32 %v1689, 2147483648
      %v1787 = vor.u32 1.1754944e-38, %v1786
      %v1788 = vsel %vm1785, %v1787, %v1783
      %v1789 = vmul.f32 1.0, %v1788
      %v1790 = vrcp.pop %v1690
      %v1791 = vmul.f32 %v1690, %v1790
      %v1792 = vsub.f32 1.0, %v1791
      %v1793 = vmul.f32 %v1790, %v1792
      %v1794 = vadd.f32 %v1790, %v1793
      %vm1795 = vweird.f32 %v1690
      %vm1796 = vweird.f32 %v1790
      %vm1797 = vmor %vm1795, %vm1796
      %v1798 = vsel %vm1797, %v1790, %v1794
      %v1799 = vand.u32 2147483647, %v1690
      %vm1800 = vcmp.eq.f32.partialorder %v1799, 8.507059e+37
      %v1801 = vand.u32 %v1690, 2147483648
      %v1802 = vor.u32 1.1754944e-38, %v1801
      %v1803 = vsel %vm1800, %v1802, %v1798
      %v1804 = vmul.f32 1.0, %v1803
      %v1805 = vrcp.pop %v1691
      %v1806 = vmul.f32 %v1691, %v1805
      %v1807 = vsub.f32 1.0, %v1806
      %v1808 = vmul.f32 %v1805, %v1807
      %v1809 = vadd.f32 %v1805, %v1808
      %vm1810 = vweird.f32 %v1691
      %vm1811 = vweird.f32 %v1805
      %vm1812 = vmor %vm1810, %vm1811
      %v1813 = vsel %vm1812, %v1805, %v1809
      %v1814 = vand.u32 2147483647, %v1691
      %vm1815 = vcmp.eq.f32.partialorder %v1814, 8.507059e+37
      %v1816 = vand.u32 %v1691, 2147483648
      %v1817 = vor.u32 1.1754944e-38, %v1816
      %v1818 = vsel %vm1815, %v1817, %v1813
      %v1819 = vmul.f32 1.0, %v1818
      %v1820 = vrcp.pop %v1692
      %v1821 = vmul.f32 %v1692, %v1820
      %v1822 = vsub.f32 1.0, %v1821
      %v1823 = vmul.f32 %v1820, %v1822
      %v1824 = vadd.f32 %v1820, %v1823
      %vm1825 = vweird.f32 %v1692
      %vm1826 = vweird.f32 %v1820
      %vm1827 = vmor %vm1825, %vm1826
      %v1828 = vsel %vm1827, %v1820, %v1824
      %v1829 = vand.u32 2147483647, %v1692
      %vm1830 = vcmp.eq.f32.partialorder %v1829, 8.507059e+37
      %v1831 = vand.u32 %v1692, 2147483648
      %v1832 = vor.u32 1.1754944e-38, %v1831
      %v1833 = vsel %vm1830, %v1832, %v1828
      %v1834 = vmul.f32 1.0, %v1833
      %v1835 = vrcp.pop %v1693
      %v1836 = vmul.f32 %v1693, %v1835
      %v1837 = vsub.f32 1.0, %v1836
      %v1838 = vmul.f32 %v1835, %v1837
      %v1839 = vadd.f32 %v1835, %v1838
      %vm1840 = vweird.f32 %v1693
      %vm1841 = vweird.f32 %v1835
      %vm1842 = vmor %vm1840, %vm1841
      %v1843 = vsel %vm1842, %v1835, %v1839
      %v1844 = vand.u32 2147483647, %v1693
      %vm1845 = vcmp.eq.f32.partialorder %v1844, 8.507059e+37
      %v1846 = vand.u32 %v1693, 2147483648
      %v1847 = vor.u32 1.1754944e-38, %v1846
      %v1848 = vsel %vm1845, %v1847, %v1843
      %v1849 = vmul.f32 1.0, %v1848
      %v1850 = vrcp.pop %v1694
      %v1851 = vmul.f32 %v1694, %v1850
      %v1852 = vsub.f32 1.0, %v1851
      %v1853 = vmul.f32 %v1850, %v1852
      %v1854 = vadd.f32 %v1850, %v1853
      %vm1855 = vweird.f32 %v1694
      %vm1856 = vweird.f32 %v1850
      %vm1857 = vmor %vm1855, %vm1856
      %v1858 = vsel %vm1857, %v1850, %v1854
      %v1859 = vand.u32 2147483647, %v1694
      %vm1860 = vcmp.eq.f32.partialorder %v1859, 8.507059e+37
      %v1861 = vand.u32 %v1694, 2147483648
      %v1862 = vor.u32 1.1754944e-38, %v1861
      %v1863 = vsel %vm1860, %v1862, %v1858
      %v1864 = vmul.f32 1.0, %v1863
      %v1865 = vrcp.pop %v1695
      %v1866 = vmul.f32 %v1695, %v1865
      %v1867 = vsub.f32 1.0, %v1866
      %v1868 = vmul.f32 %v1865, %v1867
      %v1869 = vadd.f32 %v1865, %v1868
      %vm1870 = vweird.f32 %v1695
      %vm1871 = vweird.f32 %v1865
      %vm1872 = vmor %vm1870, %vm1871
      %v1873 = vsel %vm1872, %v1865, %v1869
      %v1874 = vand.u32 2147483647, %v1695
      %vm1875 = vcmp.eq.f32.partialorder %v1874, 8.507059e+37
      %v1876 = vand.u32 %v1695, 2147483648
      %v1877 = vor.u32 1.1754944e-38, %v1876
      %v1878 = vsel %vm1875, %v1877, %v1873
      %v1879 = vmul.f32 1.0, %v1878
      %v1880 = vrcp.pop %v1696
      %v1881 = vmul.f32 %v1696, %v1880
      %v1882 = vsub.f32 1.0, %v1881
      %v1883 = vmul.f32 %v1880, %v1882
      %v1884 = vadd.f32 %v1880, %v1883
      %vm1885 = vweird.f32 %v1696
      %vm1886 = vweird.f32 %v1880
      %vm1887 = vmor %vm1885, %vm1886
      %v1888 = vsel %vm1887, %v1880, %v1884
      %v1889 = vand.u32 2147483647, %v1696
      %vm1890 = vcmp.eq.f32.partialorder %v1889, 8.507059e+37
      %v1891 = vand.u32 %v1696, 2147483648
      %v1892 = vor.u32 1.1754944e-38, %v1891
      %v1893 = vsel %vm1890, %v1892, %v1888
      %v1894 = vmul.f32 1.0, %v1893
      %v1895 = vrcp.pop %v1697
      %v1896 = vmul.f32 %v1697, %v1895
      %v1897 = vsub.f32 1.0, %v1896
      %v1898 = vmul.f32 %v1895, %v1897
      %v1899 = vadd.f32 %v1895, %v1898
      %vm1900 = vweird.f32 %v1697
      %vm1901 = vweird.f32 %v1895
      %vm1902 = vmor %vm1900, %vm1901
      %v1903 = vsel %vm1902, %v1895, %v1899
      %v1904 = vand.u32 2147483647, %v1697
      %vm1905 = vcmp.eq.f32.partialorder %v1904, 8.507059e+37
      %v1906 = vand.u32 %v1697, 2147483648
      %v1907 = vor.u32 1.1754944e-38, %v1906
      %v1908 = vsel %vm1905, %v1907, %v1903
      %v1909 = vmul.f32 1.0, %v1908
      %v1910 = vrcp.pop %v1698
      %v1911 = vmul.f32 %v1698, %v1910
      %v1912 = vsub.f32 1.0, %v1911
      %v1913 = vmul.f32 %v1910, %v1912
      %v1914 = vadd.f32 %v1910, %v1913
      %vm1915 = vweird.f32 %v1698
      %vm1916 = vweird.f32 %v1910
      %vm1917 = vmor %vm1915, %vm1916
      %v1918 = vsel %vm1917, %v1910, %v1914
      %v1919 = vand.u32 2147483647, %v1698
      %vm1920 = vcmp.eq.f32.partialorder %v1919, 8.507059e+37
      %v1921 = vand.u32 %v1698, 2147483648
      %v1922 = vor.u32 1.1754944e-38, %v1921
      %v1923 = vsel %vm1920, %v1922, %v1918
      %v1924 = vmul.f32 1.0, %v1923
      %v1925 = vrcp.pop %v1699
      %v1926 = vmul.f32 %v1699, %v1925
      %v1927 = vsub.f32 1.0, %v1926
      %v1928 = vmul.f32 %v1925, %v1927
      %v1929 = vadd.f32 %v1925, %v1928
      %vm1930 = vweird.f32 %v1699
      %vm1931 = vweird.f32 %v1925
      %vm1932 = vmor %vm1930, %vm1931
      %v1933 = vsel %vm1932, %v1925, %v1929
      %v1934 = vand.u32 2147483647, %v1699
      %vm1935 = vcmp.eq.f32.partialorder %v1934, 8.507059e+37
      %v1936 = vand.u32 %v1699, 2147483648
      %v1937 = vor.u32 1.1754944e-38, %v1936
      %v1938 = vsel %vm1935, %v1937, %v1933
      %v1939 = vmul.f32 1.0, %v1938
      %v1940 = vld [vmem:[%s406] sm:$0xff]
      %v1941 = vld [vmem:[%s406 + $0x8] sm:$0xff]
      %v1942 = vld [vmem:[%s406 + $0x10] sm:$0xff]
      %v1943 = vld [vmem:[%s406 + $0x18] sm:$0xff]
      %v1944 = vld [vmem:[%s406 + $0x20] sm:$0xff]
      %v1945 = vld [vmem:[%s406 + $0x28] sm:$0xff]
      %v1946 = vld [vmem:[%s406 + $0x30] sm:$0xff]
      %v1947 = vld [vmem:[%s406 + $0x38] sm:$0xff]
      %v1948 = vld [vmem:[%s406 + $0x40] sm:$0xff]
      %v1949 = vld [vmem:[%s406 + $0x48] sm:$0xff]
      %v1950 = vld [vmem:[%s406 + $0x50] sm:$0xff]
      %v1951 = vld [vmem:[%s406 + $0x58] sm:$0xff]
      %v1952 = vld [vmem:[%s406 + $0x60] sm:$0xff]
      %v1953 = vld [vmem:[%s406 + $0x68] sm:$0xff]
      %v1954 = vld [vmem:[%s406 + $0x70] sm:$0xff]
      %v1955 = vld [vmem:[%s406 + $0x78] sm:$0xff]
      %v1956 = vld [vmem:[%s417] sm:$0xff]
      %v1957 = vld [vmem:[%s417 + $0x8] sm:$0xff]
      %v1958 = vld [vmem:[%s417 + $0x10] sm:$0xff]
      %v1959 = vld [vmem:[%s417 + $0x18] sm:$0xff]
      %v1960 = vld [vmem:[%s417 + $0x20] sm:$0xff]
      %v1961 = vld [vmem:[%s417 + $0x28] sm:$0xff]
      %v1962 = vld [vmem:[%s417 + $0x30] sm:$0xff]
      %v1963 = vld [vmem:[%s417 + $0x38] sm:$0xff]
      %v1964 = vld [vmem:[%s417 + $0x40] sm:$0xff]
      %v1965 = vld [vmem:[%s417 + $0x48] sm:$0xff]
      %v1966 = vld [vmem:[%s417 + $0x50] sm:$0xff]
      %v1967 = vld [vmem:[%s417 + $0x58] sm:$0xff]
      %v1968 = vld [vmem:[%s417 + $0x60] sm:$0xff]
      %v1969 = vld [vmem:[%s417 + $0x68] sm:$0xff]
      %v1970 = vld [vmem:[%s417 + $0x70] sm:$0xff]
      %v1971 = vld [vmem:[%s417 + $0x78] sm:$0xff]
      %v1972 = vld [vmem:[%s428] sm:$0xff]
      %v1973 = vld [vmem:[%s428 + $0x8] sm:$0xff]
      %v1974 = vld [vmem:[%s428 + $0x10] sm:$0xff]
      %v1975 = vld [vmem:[%s428 + $0x18] sm:$0xff]
      %v1976 = vld [vmem:[%s428 + $0x20] sm:$0xff]
      %v1977 = vld [vmem:[%s428 + $0x28] sm:$0xff]
      %v1978 = vld [vmem:[%s428 + $0x30] sm:$0xff]
      %v1979 = vld [vmem:[%s428 + $0x38] sm:$0xff]
      %v1980 = vld [vmem:[%s428 + $0x40] sm:$0xff]
      %v1981 = vld [vmem:[%s428 + $0x48] sm:$0xff]
      %v1982 = vld [vmem:[%s428 + $0x50] sm:$0xff]
      %v1983 = vld [vmem:[%s428 + $0x58] sm:$0xff]
      %v1984 = vld [vmem:[%s428 + $0x60] sm:$0xff]
      %v1985 = vld [vmem:[%s428 + $0x68] sm:$0xff]
      %v1986 = vld [vmem:[%s428 + $0x70] sm:$0xff]
      %v1987 = vld [vmem:[%s428 + $0x78] sm:$0xff]
      %s1988 = sld [smem:[#allocation3]]
      %v1989 = vstv %s1988
      %v1990 = vmul.f32 %v1989, %v1956
      %v1991 = vmul.f32 %v1989, %v1957
      %v1992 = vmul.f32 %v1989, %v1958
      %v1993 = vmul.f32 %v1989, %v1959
      %v1994 = vmul.f32 %v1989, %v1960
      %v1995 = vmul.f32 %v1989, %v1961
      %v1996 = vmul.f32 %v1989, %v1962
      %v1997 = vmul.f32 %v1989, %v1963
      %v1998 = vmul.f32 %v1989, %v1964
      %v1999 = vmul.f32 %v1989, %v1965
      %v2000 = vmul.f32 %v1989, %v1966
      %v2001 = vmul.f32 %v1989, %v1967
      %v2002 = vmul.f32 %v1989, %v1968
      %v2003 = vmul.f32 %v1989, %v1969
      %v2004 = vmul.f32 %v1989, %v1970
      %v2005 = vmul.f32 %v1989, %v1971
      %s2006 = ssub.f32 1.0, %s1988
      %v2007 = vstv %s2006
      %v2008 = vmul.f32 %v2007, %v1972
      %v2009 = vmul.f32 %v2007, %v1973
      %v2010 = vmul.f32 %v2007, %v1974
      %v2011 = vmul.f32 %v2007, %v1975
      %v2012 = vmul.f32 %v2007, %v1976
      %v2013 = vmul.f32 %v2007, %v1977
      %v2014 = vmul.f32 %v2007, %v1978
      %v2015 = vmul.f32 %v2007, %v1979
      %v2016 = vmul.f32 %v2007, %v1980
      %v2017 = vmul.f32 %v2007, %v1981
      %v2018 = vmul.f32 %v2007, %v1982
      %v2019 = vmul.f32 %v2007, %v1983
      %v2020 = vmul.f32 %v2007, %v1984
      %v2021 = vmul.f32 %v2007, %v1985
      %v2022 = vmul.f32 %v2007, %v1986
      %v2023 = vmul.f32 %v2007, %v1987
      %v2024 = vadd.f32 %v1990, %v2008
      %v2025 = vadd.f32 %v1991, %v2009
      %v2026 = vadd.f32 %v1992, %v2010
      %v2027 = vadd.f32 %v1993, %v2011
      %v2028 = vadd.f32 %v1994, %v2012
      %v2029 = vadd.f32 %v1995, %v2013
      %v2030 = vadd.f32 %v1996, %v2014
      %v2031 = vadd.f32 %v1997, %v2015
      %v2032 = vadd.f32 %v1998, %v2016
      %v2033 = vadd.f32 %v1999, %v2017
      %v2034 = vadd.f32 %v2000, %v2018
      %v2035 = vadd.f32 %v2001, %v2019
      %v2036 = vadd.f32 %v2002, %v2020
      %v2037 = vadd.f32 %v2003, %v2021
      %v2038 = vadd.f32 %v2004, %v2022
      %v2039 = vadd.f32 %v2005, %v2023
      %v2040 = vsub.f32 %v2024, %v1604
      %v2041 = vsub.f32 %v2025, %v1605
      %v2042 = vsub.f32 %v2026, %v1606
      %v2043 = vsub.f32 %v2027, %v1607
      %v2044 = vsub.f32 %v2028, %v1608
      %v2045 = vsub.f32 %v2029, %v1609
      %v2046 = vsub.f32 %v2030, %v1610
      %v2047 = vsub.f32 %v2031, %v1611
      %v2048 = vsub.f32 %v2032, %v1612
      %v2049 = vsub.f32 %v2033, %v1613
      %v2050 = vsub.f32 %v2034, %v1614
      %v2051 = vsub.f32 %v2035, %v1615
      %v2052 = vsub.f32 %v2036, %v1616
      %v2053 = vsub.f32 %v2037, %v1617
      %v2054 = vsub.f32 %v2038, %v1618
      %v2055 = vsub.f32 %v2039, %v1619
      %2072 = vrot.lane.b32.xlu0 %v2040, 8
      %v2073 = vpop.permute.xlu0 %2072
      %2074 = vrot.lane.b32.xlu0 %v2041, 8
      %v2075 = vpop.permute.xlu0 %2074
      %2076 = vrot.lane.b32.xlu0 %v2042, 8
      %v2077 = vpop.permute.xlu0 %2076
      %2078 = vrot.lane.b32.xlu0 %v2043, 8
      %v2079 = vpop.permute.xlu0 %2078
      %2080 = vrot.lane.b32.xlu0 %v2044, 8
      %v2081 = vpop.permute.xlu0 %2080
      %2082 = vrot.lane.b32.xlu0 %v2045, 8
      %v2083 = vpop.permute.xlu0 %2082
      %2084 = vrot.lane.b32.xlu0 %v2046, 8
      %v2085 = vpop.permute.xlu0 %2084
      %2086 = vrot.lane.b32.xlu0 %v2047, 8
      %v2087 = vpop.permute.xlu0 %2086
      %2088 = vrot.lane.b32.xlu0 %v2048, 8
      %v2089 = vpop.permute.xlu0 %2088
      %2090 = vrot.lane.b32.xlu0 %v2049, 8
      %v2091 = vpop.permute.xlu0 %2090
      %2092 = vrot.lane.b32.xlu0 %v2050, 8
      %v2093 = vpop.permute.xlu0 %2092
      %2094 = vrot.lane.b32.xlu0 %v2051, 8
      %v2095 = vpop.permute.xlu0 %2094
      %2096 = vrot.lane.b32.xlu0 %v2052, 8
      %v2097 = vpop.permute.xlu0 %2096
      %2098 = vrot.lane.b32.xlu0 %v2053, 8
      %v2099 = vpop.permute.xlu0 %2098
      %2100 = vrot.lane.b32.xlu0 %v2054, 8
      %v2101 = vpop.permute.xlu0 %2100
      %2102 = vrot.lane.b32.xlu0 %v2055, 8
      %v2103 = vpop.permute.xlu0 %2102
      %v2120 = vmul.f32 %v1714, %v2073
      %v2121 = vmul.f32 %v1729, %v2075
      %v2122 = vmul.f32 %v1744, %v2077
      %v2123 = vmul.f32 %v1759, %v2079
      %v2124 = vmul.f32 %v1774, %v2081
      %v2125 = vmul.f32 %v1789, %v2083
      %v2126 = vmul.f32 %v1804, %v2085
      %v2127 = vmul.f32 %v1819, %v2087
      %v2128 = vmul.f32 %v1834, %v2089
      %v2129 = vmul.f32 %v1849, %v2091
      %v2130 = vmul.f32 %v1864, %v2093
      %v2131 = vmul.f32 %v1879, %v2095
      %v2132 = vmul.f32 %v1894, %v2097
      %v2133 = vmul.f32 %v1909, %v2099
      %v2134 = vmul.f32 %v1924, %v2101
      %v2135 = vmul.f32 %v1939, %v2103
      %2152 = vrot.lane.b32.xlu0 %v1604, 8
      %v2153 = vpop.permute.xlu0 %2152
      %2154 = vrot.lane.b32.xlu0 %v1605, 8
      %v2155 = vpop.permute.xlu0 %2154
      %2156 = vrot.lane.b32.xlu0 %v1606, 8
      %v2157 = vpop.permute.xlu0 %2156
      %2158 = vrot.lane.b32.xlu0 %v1607, 8
      %v2159 = vpop.permute.xlu0 %2158
      %2160 = vrot.lane.b32.xlu0 %v1608, 8
      %v2161 = vpop.permute.xlu0 %2160
      %2162 = vrot.lane.b32.xlu0 %v1609, 8
      %v2163 = vpop.permute.xlu0 %2162
      %2164 = vrot.lane.b32.xlu0 %v1610, 8
      %v2165 = vpop.permute.xlu0 %2164
      %2166 = vrot.lane.b32.xlu0 %v1611, 8
      %v2167 = vpop.permute.xlu0 %2166
      %2168 = vrot.lane.b32.xlu0 %v1612, 8
      %v2169 = vpop.permute.xlu0 %2168
      %2170 = vrot.lane.b32.xlu0 %v1613, 8
      %v2171 = vpop.permute.xlu0 %2170
      %2172 = vrot.lane.b32.xlu0 %v1614, 8
      %v2173 = vpop.permute.xlu0 %2172
      %2174 = vrot.lane.b32.xlu0 %v1615, 8
      %v2175 = vpop.permute.xlu0 %2174
      %2176 = vrot.lane.b32.xlu0 %v1616, 8
      %v2177 = vpop.permute.xlu0 %2176
      %2178 = vrot.lane.b32.xlu0 %v1617, 8
      %v2179 = vpop.permute.xlu0 %2178
      %2180 = vrot.lane.b32.xlu0 %v1618, 8
      %v2181 = vpop.permute.xlu0 %2180
      %2182 = vrot.lane.b32.xlu0 %v1619, 8
      %v2183 = vpop.permute.xlu0 %2182
      %v2200 = vadd.f32 %v2120, %v2153
      %v2201 = vadd.f32 %v2121, %v2155
      %v2202 = vadd.f32 %v2122, %v2157
      %v2203 = vadd.f32 %v2123, %v2159
      %v2204 = vadd.f32 %v2124, %v2161
      %v2205 = vadd.f32 %v2125, %v2163
      %v2206 = vadd.f32 %v2126, %v2165
      %v2207 = vadd.f32 %v2127, %v2167
      %v2208 = vadd.f32 %v2128, %v2169
      %v2209 = vadd.f32 %v2129, %v2171
      %v2210 = vadd.f32 %v2130, %v2173
      %v2211 = vadd.f32 %v2131, %v2175
      %v2212 = vadd.f32 %v2132, %v2177
      %v2213 = vadd.f32 %v2133, %v2179
      %v2214 = vadd.f32 %v2134, %v2181
      %v2215 = vadd.f32 %v2135, %v2183
      %v2216 = vtanh.pop %v2200
      %v2217 = vtanh.pop %v2201
      %v2218 = vtanh.pop %v2202
      %v2219 = vtanh.pop %v2203
      %v2220 = vtanh.pop %v2204
      %v2221 = vtanh.pop %v2205
      %v2222 = vtanh.pop %v2206
      %v2223 = vtanh.pop %v2207
      %v2224 = vtanh.pop %v2208
      %v2225 = vtanh.pop %v2209
      %v2226 = vtanh.pop %v2210
      %v2227 = vtanh.pop %v2211
      %v2228 = vtanh.pop %v2212
      %v2229 = vtanh.pop %v2213
      %v2230 = vtanh.pop %v2214
      %v2231 = vtanh.pop %v2215
      %2248 = vrot.lane.b32.xlu0 %v1940, 8
      %v2249 = vpop.permute.xlu0 %2248
      %2250 = vrot.lane.b32.xlu0 %v1941, 8
      %v2251 = vpop.permute.xlu0 %2250
      %2252 = vrot.lane.b32.xlu0 %v1942, 8
      %v2253 = vpop.permute.xlu0 %2252
      %2254 = vrot.lane.b32.xlu0 %v1943, 8
      %v2255 = vpop.permute.xlu0 %2254
      %2256 = vrot.lane.b32.xlu0 %v1944, 8
      %v2257 = vpop.permute.xlu0 %2256
      %2258 = vrot.lane.b32.xlu0 %v1945, 8
      %v2259 = vpop.permute.xlu0 %2258
      %2260 = vrot.lane.b32.xlu0 %v1946, 8
      %v2261 = vpop.permute.xlu0 %2260
      %2262 = vrot.lane.b32.xlu0 %v1947, 8
      %v2263 = vpop.permute.xlu0 %2262
      %2264 = vrot.lane.b32.xlu0 %v1948, 8
      %v2265 = vpop.permute.xlu0 %2264
      %2266 = vrot.lane.b32.xlu0 %v1949, 8
      %v2267 = vpop.permute.xlu0 %2266
      %2268 = vrot.lane.b32.xlu0 %v1950, 8
      %v2269 = vpop.permute.xlu0 %2268
      %2270 = vrot.lane.b32.xlu0 %v1951, 8
      %v2271 = vpop.permute.xlu0 %2270
      %2272 = vrot.lane.b32.xlu0 %v1952, 8
      %v2273 = vpop.permute.xlu0 %2272
      %2274 = vrot.lane.b32.xlu0 %v1953, 8
      %v2275 = vpop.permute.xlu0 %2274
      %2276 = vrot.lane.b32.xlu0 %v1954, 8
      %v2277 = vpop.permute.xlu0 %2276
      %2278 = vrot.lane.b32.xlu0 %v1955, 8
      %v2279 = vpop.permute.xlu0 %2278
      %v2296 = vsub.f32 %v2216, %v2249
      %v2297 = vsub.f32 %v2217, %v2251
      %v2298 = vsub.f32 %v2218, %v2253
      %v2299 = vsub.f32 %v2219, %v2255
      %v2300 = vsub.f32 %v2220, %v2257
      %v2301 = vsub.f32 %v2221, %v2259
      %v2302 = vsub.f32 %v2222, %v2261
      %v2303 = vsub.f32 %v2223, %v2263
      %v2304 = vsub.f32 %v2224, %v2265
      %v2305 = vsub.f32 %v2225, %v2267
      %v2306 = vsub.f32 %v2226, %v2269
      %v2307 = vsub.f32 %v2227, %v2271
      %v2308 = vsub.f32 %v2228, %v2273
      %v2309 = vsub.f32 %v2229, %v2275
      %v2310 = vsub.f32 %v2230, %v2277
      %v2311 = vsub.f32 %v2231, %v2279
      %2328 = vrot.lane.b32.xlu0 %v2296, 8
      %v2329 = vpop.permute.xlu0 %2328
      %2330 = vrot.lane.b32.xlu0 %v2297, 8
      %v2331 = vpop.permute.xlu0 %2330
      %2332 = vrot.lane.b32.xlu0 %v2298, 8
      %v2333 = vpop.permute.xlu0 %2332
      %2334 = vrot.lane.b32.xlu0 %v2299, 8
      %v2335 = vpop.permute.xlu0 %2334
      %2336 = vrot.lane.b32.xlu0 %v2300, 8
      %v2337 = vpop.permute.xlu0 %2336
      %2338 = vrot.lane.b32.xlu0 %v2301, 8
      %v2339 = vpop.permute.xlu0 %2338
      %2340 = vrot.lane.b32.xlu0 %v2302, 8
      %v2341 = vpop.permute.xlu0 %2340
      %2342 = vrot.lane.b32.xlu0 %v2303, 8
      %v2343 = vpop.permute.xlu0 %2342
      %2344 = vrot.lane.b32.xlu0 %v2304, 8
      %v2345 = vpop.permute.xlu0 %2344
      %2346 = vrot.lane.b32.xlu0 %v2305, 8
      %v2347 = vpop.permute.xlu0 %2346
      %2348 = vrot.lane.b32.xlu0 %v2306, 8
      %v2349 = vpop.permute.xlu0 %2348
      %2350 = vrot.lane.b32.xlu0 %v2307, 8
      %v2351 = vpop.permute.xlu0 %2350
      %2352 = vrot.lane.b32.xlu0 %v2308, 8
      %v2353 = vpop.permute.xlu0 %2352
      %2354 = vrot.lane.b32.xlu0 %v2309, 8
      %v2355 = vpop.permute.xlu0 %2354
      %2356 = vrot.lane.b32.xlu0 %v2310, 8
      %v2357 = vpop.permute.xlu0 %2356
      %2358 = vrot.lane.b32.xlu0 %v2311, 8
      %v2359 = vpop.permute.xlu0 %2358
      %v2376 = vmul.f32 %v1714, %v2329
      %v2377 = vmul.f32 %v1729, %v2331
      %v2378 = vmul.f32 %v1744, %v2333
      %v2379 = vmul.f32 %v1759, %v2335
      %v2380 = vmul.f32 %v1774, %v2337
      %v2381 = vmul.f32 %v1789, %v2339
      %v2382 = vmul.f32 %v1804, %v2341
      %v2383 = vmul.f32 %v1819, %v2343
      %v2384 = vmul.f32 %v1834, %v2345
      %v2385 = vmul.f32 %v1849, %v2347
      %v2386 = vmul.f32 %v1864, %v2349
      %v2387 = vmul.f32 %v1879, %v2351
      %v2388 = vmul.f32 %v1894, %v2353
      %v2389 = vmul.f32 %v1909, %v2355
      %v2390 = vmul.f32 %v1924, %v2357
      %v2391 = vmul.f32 %v1939, %v2359
      %2392 = vrot.lane.b32.xlu0 %v1940, 16
      %v2393 = vpop.permute.xlu0 %2392
      %2394 = vrot.lane.b32.xlu0 %v1941, 16
      %v2395 = vpop.permute.xlu0 %2394
      %2396 = vrot.lane.b32.xlu0 %v1942, 16
      %v2397 = vpop.permute.xlu0 %2396
      %2398 = vrot.lane.b32.xlu0 %v1943, 16
      %v2399 = vpop.permute.xlu0 %2398
      %2400 = vrot.lane.b32.xlu0 %v1944, 16
      %v2401 = vpop.permute.xlu0 %2400
      %2402 = vrot.lane.b32.xlu0 %v1945, 16
      %v2403 = vpop.permute.xlu0 %2402
      %2404 = vrot.lane.b32.xlu0 %v1946, 16
      %v2405 = vpop.permute.xlu0 %2404
      %2406 = vrot.lane.b32.xlu0 %v1947, 16
      %v2407 = vpop.permute.xlu0 %2406
      %2408 = vrot.lane.b32.xlu0 %v1948, 16
      %v2409 = vpop.permute.xlu0 %2408
      %2410 = vrot.lane.b32.xlu0 %v1949, 16
      %v2411 = vpop.permute.xlu0 %2410
      %2412 = vrot.lane.b32.xlu0 %v1950, 16
      %v2413 = vpop.permute.xlu0 %2412
      %2414 = vrot.lane.b32.xlu0 %v1951, 16
      %v2415 = vpop.permute.xlu0 %2414
      %2416 = vrot.lane.b32.xlu0 %v1952, 16
      %v2417 = vpop.permute.xlu0 %2416
      %2418 = vrot.lane.b32.xlu0 %v1953, 16
      %v2419 = vpop.permute.xlu0 %2418
      %2420 = vrot.lane.b32.xlu0 %v1954, 16
      %v2421 = vpop.permute.xlu0 %2420
      %2422 = vrot.lane.b32.xlu0 %v1955, 16
      %v2423 = vpop.permute.xlu0 %2422
      %v2440 = vadd.f32 %v2376, %v2393
      %v2441 = vadd.f32 %v2377, %v2395
      %v2442 = vadd.f32 %v2378, %v2397
      %v2443 = vadd.f32 %v2379, %v2399
      %v2444 = vadd.f32 %v2380, %v2401
      %v2445 = vadd.f32 %v2381, %v2403
      %v2446 = vadd.f32 %v2382, %v2405
      %v2447 = vadd.f32 %v2383, %v2407
      %v2448 = vadd.f32 %v2384, %v2409
      %v2449 = vadd.f32 %v2385, %v2411
      %v2450 = vadd.f32 %v2386, %v2413
      %v2451 = vadd.f32 %v2387, %v2415
      %v2452 = vadd.f32 %v2388, %v2417
      %v2453 = vadd.f32 %v2389, %v2419
      %v2454 = vadd.f32 %v2390, %v2421
      %v2455 = vadd.f32 %v2391, %v2423
      %2472 = vrot.lane.b32.xlu0 %v2440, 112
      %v2473 = vpop.permute.xlu0 %2472
      %2474 = vrot.lane.b32.xlu0 %v2441, 112
      %v2475 = vpop.permute.xlu0 %2474
      %2476 = vrot.lane.b32.xlu0 %v2442, 112
      %v2477 = vpop.permute.xlu0 %2476
      %2478 = vrot.lane.b32.xlu0 %v2443, 112
      %v2479 = vpop.permute.xlu0 %2478
      %2480 = vrot.lane.b32.xlu0 %v2444, 112
      %v2481 = vpop.permute.xlu0 %2480
      %2482 = vrot.lane.b32.xlu0 %v2445, 112
      %v2483 = vpop.permute.xlu0 %2482
      %2484 = vrot.lane.b32.xlu0 %v2446, 112
      %v2485 = vpop.permute.xlu0 %2484
      %2486 = vrot.lane.b32.xlu0 %v2447, 112
      %v2487 = vpop.permute.xlu0 %2486
      %2488 = vrot.lane.b32.xlu0 %v2448, 112
      %v2489 = vpop.permute.xlu0 %2488
      %2490 = vrot.lane.b32.xlu0 %v2449, 112
      %v2491 = vpop.permute.xlu0 %2490
      %2492 = vrot.lane.b32.xlu0 %v2450, 112
      %v2493 = vpop.permute.xlu0 %2492
      %2494 = vrot.lane.b32.xlu0 %v2451, 112
      %v2495 = vpop.permute.xlu0 %2494
      %2496 = vrot.lane.b32.xlu0 %v2452, 112
      %v2497 = vpop.permute.xlu0 %2496
      %2498 = vrot.lane.b32.xlu0 %v2453, 112
      %v2499 = vpop.permute.xlu0 %2498
      %2500 = vrot.lane.b32.xlu0 %v2454, 112
      %v2501 = vpop.permute.xlu0 %2500
      %2502 = vrot.lane.b32.xlu0 %v2455, 112
      %v2503 = vpop.permute.xlu0 %2502
      %2520 = vst.msk [vmem:[%s439] sm:$0xff] %vm481, %v2473
      %2521 = vst.msk [vmem:[%s439 + $0x8] sm:$0xff] %vm481, %v2475
      %2522 = vst.msk [vmem:[%s439 + $0x10] sm:$0xff] %vm481, %v2477
      %2523 = vst.msk [vmem:[%s439 + $0x18] sm:$0xff] %vm481, %v2479
      %2524 = vst.msk [vmem:[%s439 + $0x20] sm:$0xff] %vm481, %v2481
      %2525 = vst.msk [vmem:[%s439 + $0x28] sm:$0xff] %vm481, %v2483
      %2526 = vst.msk [vmem:[%s439 + $0x30] sm:$0xff] %vm481, %v2485
      %2527 = vst.msk [vmem:[%s439 + $0x38] sm:$0xff] %vm481, %v2487
      %2528 = vst.msk [vmem:[%s439 + $0x40] sm:$0xff] %vm481, %v2489
      %2529 = vst.msk [vmem:[%s439 + $0x48] sm:$0xff] %vm481, %v2491
      %2530 = vst.msk [vmem:[%s439 + $0x50] sm:$0xff] %vm481, %v2493
      %2531 = vst.msk [vmem:[%s439 + $0x58] sm:$0xff] %vm481, %v2495
      %2532 = vst.msk [vmem:[%s439 + $0x60] sm:$0xff] %vm481, %v2497
      %2533 = vst.msk [vmem:[%s439 + $0x68] sm:$0xff] %vm481, %v2499
      %2534 = vst.msk [vmem:[%s439 + $0x70] sm:$0xff] %vm481, %v2501
      %2535 = vst.msk [vmem:[%s439 + $0x78] sm:$0xff] %vm481, %v2503
      %s2536 = smul.u32 8, %s24
      %p2537 = scmp.lt.s32.totalorder %s23, 1
      %s2538 = scalar_select %p2537, %s23, 1
      %p2539 = scmp.lt.s32.totalorder %s2536, 15
      %s2540 = scalar_select %p2539, %s2536, 15
      %s2541 = smul.addr %s2540, 2
      %s2542 = smul.addr %s2538, 32
      %s2543 = sadd.s32 %s2541, %s2542
      %s2544 = smul.addr %s2543, 8
      %s2545 = scalar_lea.vmem %s7, %s2544
      // Predicated region
      $region49: #{tpu_custom_call.1} parent=47 // pred_check
        %p2546 = pneg %p226
      $region50: #{tpu_custom_call.1} parent=47 // pred_check_branch
        %2548 = sbr.rel (%p2546) target = $region52
      $region51: #{tpu_custom_call.1} parent=47 // pred_region
        %s2549 = smul.u32 8, %s24
      $region52: #{tpu_custom_call.1} parent=47 // pred_fallthru
        _
    $region48: #{tpu_custom_call.1} parent=5 // pred_fallthru
      _
    %p2550 = scmp.le.s32.totalorder 2, %s14
    // Predicated region
    $region53: #{tpu_custom_call.1} parent=5 // pred_check
      %p2551 = pneg %p2550
    $region54: #{tpu_custom_call.1} parent=5 // pred_check_branch
      %2553 = sbr.rel (%p2551) target = $region56
    $region55: #{tpu_custom_call.1} parent=5 // pred_region
      %s2554 = ssub.s32 %s14, 2
      // Predicated region
      $region57: #{tpu_custom_call.1} parent=55 // pred_check
        %p2555 = pneg %p232
      $region58: #{tpu_custom_call.1} parent=55 // pred_check_branch
        %2557 = sbr.rel (%p2555) target = $region60
      $region59: #{tpu_custom_call.1} parent=55 // pred_region
        %s2558 = smul.u32 8, %s26
        %p2559 = scmp.lt.s32.totalorder %s25, 1
        %s2560 = scalar_select %p2559, %s25, 1
        %p2561 = scmp.lt.s32.totalorder %s2558, 15
        %s2562 = scalar_select %p2561, %s2558, 15
        %s2563 = smul.addr %s2562, 2
        %s2564 = smul.addr %s2560, 32
        %s2565 = sadd.s32 %s2563, %s2564
        %s2566 = smul.addr %s2565, 8
        %s2567 = scalar_lea.vmem %s7, %s2566
      $region60: #{tpu_custom_call.1} parent=55 // pred_fallthru
        _
    $region56: #{tpu_custom_call.1} parent=5 // pred_fallthru
      _
  $region6: #{tpu_custom_call.1} parent=0 // loop_footer
    %s18 = sadd.s32 1, %s14
  $region7: #{tpu_custom_call.1} parent=0 // loop_footer_branch
    %13 = sbr.rel target = $region3
  $region8: #{tpu_custom_call.1} parent=0 // loop_exit
    _

</llo_original>
